<compile_context>
chip_gen: v7x
topology: tpu7x:2x2x1
jax: 0.10.0
libtpu: 0.0.40
codegen_flags: <defaults>
</compile_context>

<pallas_src>
import jax
import jax.numpy as jnp
import numpy as np
from jax.experimental import pallas as pl
from jax.experimental.pallas import tpu as pltpu

Z_DIM = 20
HIDDEN_DIM = 500
OUTPUT_DIM = 784


def _decoder_kernel(z_ref, w_h_ref, b_h_ref, w_o_ref, b_o_ref, out_ref):
    # z_ref: [TB, Z] f32; w_h/w_o: bf16; biases: f32; out: [TB, 784] f32.
    z = z_ref[...].astype(jnp.bfloat16)
    h = jnp.tanh(
        jnp.dot(z, w_h_ref[...], preferred_element_type=jnp.float32)
        + b_h_ref[...])                                              # [TB, H] f32
    logits = (jnp.dot(h.astype(jnp.bfloat16), w_o_ref[...],
                      preferred_element_type=jnp.float32)
              + b_o_ref[...])                                        # [TB, 784] f32
    out_ref[...] = jax.nn.sigmoid(logits)


def decoder_forward(z, params, *, block_b=128):
    """z: [B, Z_DIM] f32 -> Bernoulli means [B, 784] f32."""
    B, zd = z.shape
    H = params["w_h"].shape[1]
    O = params["w_o"].shape[1]
    if B % block_b != 0:
        block_b = B                       # small batches: single full block
    grid = (B // block_b,)

    in_specs = [
        pl.BlockSpec((block_b, zd), lambda i: (i, 0)),   # z: tiled over batch
        pl.BlockSpec((zd, H), lambda i: (0, 0)),         # w_h: VMEM-resident
        pl.BlockSpec((1, H), lambda i: (0, 0)),          # b_h: VMEM-resident
        pl.BlockSpec((H, O), lambda i: (0, 0)),          # w_o: VMEM-resident
        pl.BlockSpec((1, O), lambda i: (0, 0)),          # b_o: VMEM-resident
    ]
    out_specs = pl.BlockSpec((block_b, O), lambda i: (i, 0))

    return pl.pallas_call(
        _decoder_kernel,
        out_shape=jax.ShapeDtypeStruct((B, O), jnp.float32),
        grid=grid,
        in_specs=in_specs,
        out_specs=out_specs,
        compiler_params=pltpu.CompilerParams(
            dimension_semantics=("parallel",)),
    )(z, params["w_h"], params["b_h"], params["w_o"], params["b_o"])


def init_params(key, z_dim=Z_DIM, hidden_dim=HIDDEN_DIM, output_dim=OUTPUT_DIM):
    """Matches nn.Linear's uniform(-1/sqrt(fan_in), +1/sqrt(fan_in)) init (f32)."""
    ks = jax.random.split(key, 4)

    def linear(kw, kb, fan_in, fan_out):
        bound = 1.0 / np.sqrt(fan_in)
        w = jax.random.uniform(kw, (fan_in, fan_out), jnp.float32, -bound, bound)
        b = jax.random.uniform(kb, (1, fan_out), jnp.float32, -bound, bound)
        return w, b

    w_h, b_h = linear(ks[0], ks[1], z_dim, hidden_dim)
    w_o, b_o = linear(ks[2], ks[3], hidden_dim, output_dim)
    return dict(w_h=w_h, b_h=b_h, w_o=w_o, b_o=b_o)


def to_kernel_params(p):
    """bf16 weights (half the HBM weight traffic); biases stay f32."""
    return dict(w_h=p["w_h"].astype(jnp.bfloat16), b_h=p["b_h"],
                w_o=p["w_o"].astype(jnp.bfloat16), b_o=p["b_o"])


def decoder_forward_ref(z, p):
    """Pure-JAX f32 reference mirroring the PyTorch Decoder."""
    h = jnp.tanh(z @ p["w_h"] + p["b_h"])
    return jax.nn.sigmoid(h @ p["w_o"] + p["b_o"])


if __name__ == "__main__":
    key = jax.random.PRNGKey(0)
    k_params, k_z = jax.random.split(key)

    B = 256   # two batch tiles of 128 -> exercises the parallel grid axis
    # The decoder input is the latent code z (what torch.randn would feed it).
    z = jax.random.normal(k_z, (B, Z_DIM), jnp.float32)

    params = init_params(k_params)
    kernel_params = to_kernel_params(params)

    out = jax.block_until_ready(decoder_forward(z, kernel_params))
    out_ref = jax.block_until_ready(decoder_forward_ref(z, params))

    out_np = np.asarray(out)
    assert out_np.shape == (B, OUTPUT_DIM)
    assert np.all(np.isfinite(out_np))
    # bf16 weights vs f32 reference: sigmoid outputs agree to ~1e-3; use 1e-2 bound.
    np.testing.assert_allclose(out_np, np.asarray(out_ref), rtol=1e-2, atol=1e-2)
    print("KERNEL_OK")
</pallas_src>

<mosaic_0001>
module attributes {stable_mosaic.version = 11 : i64} {
  func.func @_decoder_kernel(%arg0: i32, %arg1: memref<128x20xf32, #tpu.memory_space<vmem>>, %arg2: memref<20x500xbf16, #tpu.memory_space<vmem>>, %arg3: memref<1x500xf32, #tpu.memory_space<vmem>>, %arg4: memref<500x784xbf16, #tpu.memory_space<vmem>>, %arg5: memref<1x784xf32, #tpu.memory_space<vmem>>, %arg6: memref<128x784xf32, #tpu.memory_space<vmem>>) attributes {dimension_semantics = [#tpu.dimension_semantics<parallel>], iteration_bounds = array<i64: 2>, scalar_prefetch = 0 : i64, scratch_operands = 0 : i64, tpu.core_type = #tpu.core_type<tc>, window_params = [{transform_indices = @transform_0, window_bounds = array<i64: 128, 20>}, {pipeline_mode = #tpu.pipeline_mode<synchronous>, transform_indices = @transform_1, window_bounds = array<i64: 20, 500>}, {pipeline_mode = #tpu.pipeline_mode<synchronous>, transform_indices = @transform_2, window_bounds = array<i64: 1, 500>}, {pipeline_mode = #tpu.pipeline_mode<synchronous>, transform_indices = @transform_3, window_bounds = array<i64: 500, 784>}, {pipeline_mode = #tpu.pipeline_mode<synchronous>, transform_indices = @transform_4, window_bounds = array<i64: 1, 784>}, {transform_indices = @transform_5, window_bounds = array<i64: 128, 784>}]} {
    %c0 = arith.constant 0 : index
    %c0_0 = arith.constant 0 : index
    %0 = vector.load %arg1[%c0, %c0_0] : memref<128x20xf32, #tpu.memory_space<vmem>>, vector<128x20xf32>
    %1 = arith.truncf %0 : vector<128x20xf32> to vector<128x20xbf16>
    %c0_1 = arith.constant 0 : index
    %c0_2 = arith.constant 0 : index
    %2 = vector.load %arg2[%c0_1, %c0_2] : memref<20x500xbf16, #tpu.memory_space<vmem>>, vector<20x500xbf16>
    %cst = arith.constant dense<0.000000e+00> : vector<128x500xf32>
    %3 = tpu.matmul %1, %2, %cst {dimension_numbers = #tpu.dot_dimension_numbers<[1], [0], [0], [1], [0, 0, 1, 1], [], []>} : vector<128x20xbf16>, vector<20x500xbf16>, vector<128x500xf32> -> vector<128x500xf32>
    %c0_3 = arith.constant 0 : index
    %c0_4 = arith.constant 0 : index
    %4 = vector.load %arg3[%c0_3, %c0_4] : memref<1x500xf32, #tpu.memory_space<vmem>>, vector<1x500xf32>
    %5 = vector.broadcast %4 : vector<1x500xf32> to vector<128x500xf32>
    %6 = arith.addf %3, %5 : vector<128x500xf32>
    %7 = math.tanh %6 : vector<128x500xf32>
    %8 = arith.truncf %7 : vector<128x500xf32> to vector<128x500xbf16>
    %c0_5 = arith.constant 0 : index
    %c0_6 = arith.constant 0 : index
    %9 = vector.load %arg4[%c0_5, %c0_6] : memref<500x784xbf16, #tpu.memory_space<vmem>>, vector<500x784xbf16>
    %cst_7 = arith.constant dense<0.000000e+00> : vector<128x784xf32>
    %10 = tpu.matmul %8, %9, %cst_7 {dimension_numbers = #tpu.dot_dimension_numbers<[1], [0], [0], [1], [0, 0, 1, 1], [], []>} : vector<128x500xbf16>, vector<500x784xbf16>, vector<128x784xf32> -> vector<128x784xf32>
    %c0_8 = arith.constant 0 : index
    %c0_9 = arith.constant 0 : index
    %11 = vector.load %arg5[%c0_8, %c0_9] : memref<1x784xf32, #tpu.memory_space<vmem>>, vector<1x784xf32>
    %12 = vector.broadcast %11 : vector<1x784xf32> to vector<128x784xf32>
    %13 = arith.addf %10, %12 : vector<128x784xf32>
    %14 = arith.negf %13 : vector<128x784xf32>
    %15 = math.exp %14 : vector<128x784xf32>
    %cst_10 = arith.constant 1.000000e+00 : f32
    %16 = vector.broadcast %cst_10 : f32 to vector<128x784xf32>
    %17 = arith.addf %16, %15 : vector<128x784xf32>
    %18 = arith.divf %16, %17 : vector<128x784xf32>
    %c0_11 = arith.constant 0 : index
    %c0_12 = arith.constant 0 : index
    %19 = vector.load %arg6[%c0_11, %c0_12] : memref<128x784xf32, #tpu.memory_space<vmem>>, vector<128x784xf32>
    tpu.vector_store %arg6[%c0_11, %c0_12], %18 {strides = array<i32>} : memref<128x784xf32, #tpu.memory_space<vmem>>, vector<128x784xf32>,
    return
  }
  func.func @transform_0(%arg0: i32) -> (i32, i32) {
    %c0_i32 = arith.constant 0 : i32
    %c0_i32_0 = arith.constant 0 : i32
    return %arg0, %c0_i32 : i32, i32
  }
  func.func @transform_1(%arg0: i32) -> (i32, i32) {
    %c0_i32 = arith.constant 0 : i32
    %c0_i32_0 = arith.constant 0 : i32
    %c0_i32_1 = arith.constant 0 : i32
    return %c0_i32, %c0_i32_0 : i32, i32
  }
  func.func @transform_2(%arg0: i32) -> (i32, i32) {
    %c0_i32 = arith.constant 0 : i32
    %c0_i32_0 = arith.constant 0 : i32
    %c0_i32_1 = arith.constant 0 : i32
    return %c0_i32, %c0_i32_0 : i32, i32
  }
  func.func @transform_3(%arg0: i32) -> (i32, i32) {
    %c0_i32 = arith.constant 0 : i32
    %c0_i32_0 = arith.constant 0 : i32
    %c0_i32_1 = arith.constant 0 : i32
    return %c0_i32, %c0_i32_0 : i32, i32
  }
  func.func @transform_4(%arg0: i32) -> (i32, i32) {
    %c0_i32 = arith.constant 0 : i32
    %c0_i32_0 = arith.constant 0 : i32
    %c0_i32_1 = arith.constant 0 : i32
    return %c0_i32, %c0_i32_0 : i32, i32
  }
  func.func @transform_5(%arg0: i32) -> (i32, i32) {
    %c0_i32 = arith.constant 0 : i32
    %c0_i32_0 = arith.constant 0 : i32
    return %arg0, %c0_i32 : i32, i32
  }
}

</mosaic_0001>

<llo_original>
// kernel: tpu_custom_call.1
$region0: #{tpu_custom_call.1}
  #allocation0 [shape = 'u32[]', space=smem, size = 0x4, offset = 0x4, fixed_abs, tag = 'smem constant byte address 0x4 - core index']
  #allocation1 [shape = 'u32[144,128]{1,0:T(1,128)}', space=vmem, size = 0x12000, scoped, tag = 'internal scratch']
  %s0 = inlined_call_operand.vmem [shape: f32[256,20], index: 0, kind: input, shape index: {}]
  %s1 = inlined_call_operand.vmem [shape: bf16[20,500], index: 1, kind: input, shape index: {}]
  %s2 = inlined_call_operand.vmem [shape: f32[1,500], index: 2, kind: input, shape index: {}]
  %s3 = inlined_call_operand.vmem [shape: bf16[500,784], index: 3, kind: input, shape index: {}]
  %s4 = inlined_call_operand.vmem [shape: f32[1,784], index: 4, kind: input, shape index: {}]
  %s5 = inlined_call_operand.vmem [shape: f32[256,784], index: 5, kind: output, shape index: {}]
  %s6 = sld [smem:[#allocation0]]
  $region53: #{tpu_custom_call.1} parent=0
    _
  %s8 = ssub.s32 1, %s6
  %s9 = scalar_select 0, %s8, %s6
  loop: start=0, step=1, limit=4
  $region2: #{tpu_custom_call.1} parent=0 // loop_pre_header
    _
  $region3: #{tpu_custom_call.1} parent=0 // loop_header
    %s11 = sphi 0, %s15
    %p12 = scmp.ge.s32.totalorder %s11, 4
    %s21 = sphi 0, %s23
    %s24 = sphi 0, %s21
    %s25 = sphi 0, %s24
    %s41 = sphi 0, %s25
    %s45 = sphi 0, %s45
    %s47 = sphi 0, %s45
    %s48 = sphi 0, %s47
    %s62 = sphi 0, %s48
    %s66 = sphi 0, %s66
    %s68 = sphi 0, %s66
    %s69 = sphi 0, %s68
    %s83 = sphi 0, %s69
    %s87 = sphi 0, %s87
    %s89 = sphi 0, %s87
    %s90 = sphi 0, %s89
    %s104 = sphi 0, %s90
    %s108 = sphi 0, %s108
    %s110 = sphi 0, %s108
    %s111 = sphi 0, %s110
    %s125 = sphi 0, %s111
    %s131 = sphi 0, %s133
    %s134 = sphi 0, %s131
    %s135 = sphi 0, %s134
    %s151 = sphi 0, %s135
  $region4: #{tpu_custom_call.1} parent=0 // loop_header_branch
    %14 = sbr.rel (%p12) target = $region8
  $region5: #{tpu_custom_call.1} parent=0 // loop_body
    %s16 = ssub.s32 %s11, 1
    %s17 = ssub.s32 %s11, 2
    %s18 = sadd.s32 %s11, 1
    %s19 = ssub.s32 %s11, %s18
    %p20 = scmp.eq.s32.totalorder %s19, 0
    %s22 = sadd.s32 %s21, 1
    %s23 = scalar_select %p20, %s21, %s22
    %p26 = pneg %p20
    %p27 = scmp.eq.s32.totalorder %s11, 1
    %p28 = por %p26, %p27
    %p29 = scmp.ne.s32.totalorder %s21, %s24
    %p30 = scmp.eq.s32.totalorder %s11, 0
    %p31 = por %p29, %p30
    %p32 = scmp.ne.s32.totalorder %s21, %s24
    %p33 = scmp.eq.s32.totalorder %s16, 1
    %p34 = por %p32, %p33
    %p35 = scmp.ne.s32.totalorder %s24, %s25
    %p36 = scmp.eq.s32.totalorder %s16, 0
    %p37 = por %p35, %p36
    %p38 = scmp.ne.s32.totalorder %s24, %s25
    %p39 = scmp.eq.s32.totalorder %s17, 1
    %p40 = por %p38, %p39
    %p42 = scmp.ne.s32.totalorder %s25, %s41
    %p43 = scmp.eq.s32.totalorder %s17, 0
    %p44 = por %p42, %p43
    %s46 = sadd.s32 %s45, 1
    %p49 = scmp.eq.s32.totalorder %s11, 1
    %p50 = scmp.ne.s32.totalorder %s45, %s47
    %p51 = scmp.eq.s32.totalorder %s11, 0
    %p52 = por %p50, %p51
    %p53 = scmp.ne.s32.totalorder %s45, %s47
    %p54 = scmp.eq.s32.totalorder %s16, 1
    %p55 = por %p53, %p54
    %p56 = scmp.ne.s32.totalorder %s47, %s48
    %p57 = scmp.eq.s32.totalorder %s16, 0
    %p58 = por %p56, %p57
    %p59 = scmp.ne.s32.totalorder %s47, %s48
    %p60 = scmp.eq.s32.totalorder %s17, 1
    %p61 = por %p59, %p60
    %p63 = scmp.ne.s32.totalorder %s48, %s62
    %p64 = scmp.eq.s32.totalorder %s17, 0
    %p65 = por %p63, %p64
    %s67 = sadd.s32 %s66, 1
    %p70 = scmp.eq.s32.totalorder %s11, 1
    %p71 = scmp.ne.s32.totalorder %s66, %s68
    %p72 = scmp.eq.s32.totalorder %s11, 0
    %p73 = por %p71, %p72
    %p74 = scmp.ne.s32.totalorder %s66, %s68
    %p75 = scmp.eq.s32.totalorder %s16, 1
    %p76 = por %p74, %p75
    %p77 = scmp.ne.s32.totalorder %s68, %s69
    %p78 = scmp.eq.s32.totalorder %s16, 0
    %p79 = por %p77, %p78
    %p80 = scmp.ne.s32.totalorder %s68, %s69
    %p81 = scmp.eq.s32.totalorder %s17, 1
    %p82 = por %p80, %p81
    %p84 = scmp.ne.s32.totalorder %s69, %s83
    %p85 = scmp.eq.s32.totalorder %s17, 0
    %p86 = por %p84, %p85
    %s88 = sadd.s32 %s87, 1
    %p91 = scmp.eq.s32.totalorder %s11, 1
    %p92 = scmp.ne.s32.totalorder %s87, %s89
    %p93 = scmp.eq.s32.totalorder %s11, 0
    %p94 = por %p92, %p93
    %p95 = scmp.ne.s32.totalorder %s87, %s89
    %p96 = scmp.eq.s32.totalorder %s16, 1
    %p97 = por %p95, %p96
    %p98 = scmp.ne.s32.totalorder %s89, %s90
    %p99 = scmp.eq.s32.totalorder %s16, 0
    %p100 = por %p98, %p99
    %p101 = scmp.ne.s32.totalorder %s89, %s90
    %p102 = scmp.eq.s32.totalorder %s17, 1
    %p103 = por %p101, %p102
    %p105 = scmp.ne.s32.totalorder %s90, %s104
    %p106 = scmp.eq.s32.totalorder %s17, 0
    %p107 = por %p105, %p106
    %s109 = sadd.s32 %s108, 1
    %p112 = scmp.eq.s32.totalorder %s11, 1
    %p113 = scmp.ne.s32.totalorder %s108, %s110
    %p114 = scmp.eq.s32.totalorder %s11, 0
    %p115 = por %p113, %p114
    %p116 = scmp.ne.s32.totalorder %s108, %s110
    %p117 = scmp.eq.s32.totalorder %s16, 1
    %p118 = por %p116, %p117
    %p119 = scmp.ne.s32.totalorder %s110, %s111
    %p120 = scmp.eq.s32.totalorder %s16, 0
    %p121 = por %p119, %p120
    %p122 = scmp.ne.s32.totalorder %s110, %s111
    %p123 = scmp.eq.s32.totalorder %s17, 1
    %p124 = por %p122, %p123
    %p126 = scmp.ne.s32.totalorder %s111, %s125
    %p127 = scmp.eq.s32.totalorder %s17, 0
    %p128 = por %p126, %p127
    %s129 = ssub.s32 %s11, %s18
    %p130 = scmp.eq.s32.totalorder %s129, 0
    %s132 = sadd.s32 %s131, 1
    %s133 = scalar_select %p130, %s131, %s132
    %p136 = pneg %p130
    %p137 = scmp.eq.s32.totalorder %s11, 1
    %p138 = por %p136, %p137
    %p139 = scmp.ne.s32.totalorder %s131, %s134
    %p140 = scmp.eq.s32.totalorder %s11, 0
    %p141 = por %p139, %p140
    %p142 = scmp.ne.s32.totalorder %s131, %s134
    %p143 = scmp.eq.s32.totalorder %s16, 1
    %p144 = por %p142, %p143
    %p145 = scmp.ne.s32.totalorder %s134, %s135
    %p146 = scmp.eq.s32.totalorder %s16, 0
    %p147 = por %p145, %p146
    %p148 = scmp.ne.s32.totalorder %s134, %s135
    %p149 = scmp.eq.s32.totalorder %s17, 1
    %p150 = por %p148, %p149
    %p152 = scmp.ne.s32.totalorder %s135, %s151
    %p153 = scmp.eq.s32.totalorder %s17, 0
    %p154 = por %p152, %p153
    %p155 = scmp.le.s32.totalorder 1, %s11
    %p156 = scmp.lt.s32.totalorder %s11, 3
    %p157 = pnand %p155, %p156
    %p158 = pneg %p157
    // Predicated region
    $region9: #{tpu_custom_call.1} parent=5 // pred_check
      _
    $region10: #{tpu_custom_call.1} parent=5 // pred_check_branch
      %160 = sbr.rel (%p157) target = $region12
    $region11: #{tpu_custom_call.1} parent=5 // pred_region
      %s161 = ssub.s32 %s11, 1
      // Predicated region
      $region13: #{tpu_custom_call.1} parent=11 // pred_check
        %p162 = pneg %p58
      $region14: #{tpu_custom_call.1} parent=11 // pred_check_branch
        %164 = sbr.rel (%p162) target = $region16
      $region15: #{tpu_custom_call.1} parent=11 // pred_region
        _
      $region16: #{tpu_custom_call.1} parent=11 // pred_fallthru
        _
      // Predicated region
      $region17: #{tpu_custom_call.1} parent=11 // pred_check
        %p165 = pneg %p79
      $region18: #{tpu_custom_call.1} parent=11 // pred_check_branch
        %167 = sbr.rel (%p165) target = $region20
      $region19: #{tpu_custom_call.1} parent=11 // pred_region
        _
      $region20: #{tpu_custom_call.1} parent=11 // pred_fallthru
        _
      // Predicated region
      $region21: #{tpu_custom_call.1} parent=11 // pred_check
        %p168 = pneg %p100
      $region22: #{tpu_custom_call.1} parent=11 // pred_check_branch
        %170 = sbr.rel (%p168) target = $region24
      $region23: #{tpu_custom_call.1} parent=11 // pred_region
        _
      $region24: #{tpu_custom_call.1} parent=11 // pred_fallthru
        _
      // Predicated region
      $region25: #{tpu_custom_call.1} parent=11 // pred_check
        %p171 = pneg %p121
      $region26: #{tpu_custom_call.1} parent=11 // pred_check_branch
        %173 = sbr.rel (%p171) target = $region28
      $region27: #{tpu_custom_call.1} parent=11 // pred_region
        _
      $region28: #{tpu_custom_call.1} parent=11 // pred_fallthru
        _
    $region12: #{tpu_custom_call.1} parent=5 // pred_fallthru
      _
    %p174 = scmp.lt.s32.totalorder %s11, 2
    // Predicated region
    $region29: #{tpu_custom_call.1} parent=5 // pred_check
      %p175 = pneg %p174
    $region30: #{tpu_custom_call.1} parent=5 // pred_check_branch
      %177 = sbr.rel (%p175) target = $region32
    $region31: #{tpu_custom_call.1} parent=5 // pred_region
      // Predicated region
      $region33: #{tpu_custom_call.1} parent=31 // pred_check
        %p178 = pneg %p31
      $region34: #{tpu_custom_call.1} parent=31 // pred_check_branch
        %180 = sbr.rel (%p178) target = $region36
      $region35: #{tpu_custom_call.1} parent=31 // pred_region
        %s181 = smul.u32 16, %s11
        %p182 = scmp.lt.s32.totalorder %s181, 31
        %s183 = scalar_select %p182, %s181, 31
        %s184 = smul.addr %s183, 8
        %s185 = scalar_lea.vmem %s0, %s184
        %s186 = smul.u32 16, %s11
      $region36: #{tpu_custom_call.1} parent=31 // pred_fallthru
        _
    $region32: #{tpu_custom_call.1} parent=5 // pred_fallthru
      _
    %p187 = scmp.le.s32.totalorder 1, %s11
    %p188 = scmp.lt.s32.totalorder %s11, 3
    %p189 = pnand %p187, %p188
    %p190 = pneg %p189
    // Predicated region
    $region37: #{tpu_custom_call.1} parent=5 // pred_check
      _
    $region38: #{tpu_custom_call.1} parent=5 // pred_check_branch
      %192 = sbr.rel (%p189) target = $region40
    $region39: #{tpu_custom_call.1} parent=5 // pred_region
      %s193 = ssub.s32 %s11, 1
      %s194 = smul.u32 16, %s16
      %p195 = scmp.lt.s32.totalorder %s194, 31
      %s196 = scalar_select %p195, %s194, 31
      %s197 = smul.addr %s196, 8
      %s198 = scalar_lea.vmem %s0, %s197
      %p199 = pneg %p37
      %p200 = pneg %p34
      %p201 = pneg %p58
      %p202 = pneg %p55
      %p203 = pneg %p79
      %p204 = pneg %p76
      %p205 = pneg %p100
      %p206 = pneg %p97
      %p207 = pneg %p121
      %p208 = pneg %p118
      %p209 = pneg %p147
      %p210 = pneg %p144
      %s211 = smul.u32 16, %s16
      %p212 = scmp.lt.s32.totalorder %s211, 31
      %s213 = scalar_select %p212, %s211, 31
      %s214 = smul.addr %s213, 7
      %s215 = smul.addr %s214, 8
      %s216 = scalar_lea.vmem %s5, %s215
      %s217 = smul.u32 16, %s16
      %p218 = scmp.lt.s32.totalorder %s217, 31
      %s219 = scalar_select %p218, %s217, 31
      %s220 = smul.addr %s219, 8
      %s221 = scalar_lea.vmem %s0, %s220
      %s222 = smul.u32 16, %s16
      %s223 = smul.u32 16, %s16
      %p224 = scmp.lt.s32.totalorder %s223, 31
      %s225 = scalar_select %p224, %s223, 31
      %s226 = smul.addr %s225, 7
      %s227 = smul.addr %s226, 8
      %s228 = scalar_lea.vmem %s5, %s227
      %s229 = smul.u32 16, %s16
      %v231 = vld [vmem:[%s221] sm:$0xff]
      %v232 = vld [vmem:[%s221 + $0x8] sm:$0xff]
      %v233 = vld [vmem:[%s221 + $0x10] sm:$0xff]
      %v234 = vld [vmem:[%s221 + $0x18] sm:$0xff]
      %v235 = vld [vmem:[%s221 + $0x20] sm:$0xff]
      %v236 = vld [vmem:[%s221 + $0x28] sm:$0xff]
      %v237 = vld [vmem:[%s221 + $0x30] sm:$0xff]
      %v238 = vld [vmem:[%s221 + $0x38] sm:$0xff]
      %v239 = vld [vmem:[%s221 + $0x40] sm:$0xff]
      %v240 = vld [vmem:[%s221 + $0x48] sm:$0xff]
      %v241 = vld [vmem:[%s221 + $0x50] sm:$0xff]
      %v242 = vld [vmem:[%s221 + $0x58] sm:$0xff]
      %v243 = vld [vmem:[%s221 + $0x60] sm:$0xff]
      %v244 = vld [vmem:[%s221 + $0x68] sm:$0xff]
      %v245 = vld [vmem:[%s221 + $0x70] sm:$0xff]
      %v246 = vld [vmem:[%s221 + $0x78] sm:$0xff]
      %v247 = vpack.c.bf16 %v232, %v231
      %v248 = vpack.c.bf16 %v234, %v233
      %v249 = vpack.c.bf16 %v236, %v235
      %v250 = vpack.c.bf16 %v238, %v237
      %v251 = vpack.c.bf16 %v240, %v239
      %v252 = vpack.c.bf16 %v242, %v241
      %v253 = vpack.c.bf16 %v244, %v243
      %v254 = vpack.c.bf16 %v246, %v245
      %v255 = vld [vmem:[%s1] sm:$0xff]
      %v256 = vld [vmem:[%s1 + $0x8] sm:$0xff]
      %v257 = vld [vmem:[%s1 + $0x10] sm:$0xff]
      %v258 = vld [vmem:[%s1 + $0x18] sm:$0xff]
      %v259 = vld [vmem:[%s1 + $0x20] sm:$0x33]
      %v260 = vld [vmem:[%s1 + $0x28] sm:$0x33]
      %v261 = vld [vmem:[%s2] sm:$0xf]
      %v263 = vlaneseq
      %v264 = vshrl.u32 %v263, 7
      %v265 = vsub.s32 0, %v264
      %v266 = vrot.slane %v261, %v265
      %v267 = vlaneseq
      %v268 = vshrl.u32 %v267, 7
      %v269 = vsub.s32 1, %v268
      %v270 = vrot.slane %v261, %v269
      %v271 = vlaneseq
      %v272 = vshrl.u32 %v271, 7
      %v273 = vsub.s32 2, %v272
      %v274 = vrot.slane %v261, %v273
      %v275 = vlaneseq
      %v276 = vshrl.u32 %v275, 7
      %v277 = vsub.s32 3, %v276
      %v278 = vrot.slane %v261, %v277
      %v289 = vunpack.c.l.b16 %v255
      %v290 = vunpack.c.h.b16 %v255
      %v291 = vunpack.c.l.b16 %v256
      %v292 = vunpack.c.h.b16 %v256
      %v293 = vunpack.c.l.b16 %v257
      %v294 = vunpack.c.h.b16 %v257
      %v295 = vunpack.c.l.b16 %v258
      %v296 = vunpack.c.h.b16 %v258
      %v297 = vunpack.c.l.b16 %v259
      %v298 = vunpack.c.h.b16 %v259
      %v299 = vunpack.c.l.b16 %v260
      %v300 = vunpack.c.h.b16 %v260
      %v301 = vpack.c.b16 %v293, %v289
      %v302 = vpack.c.b16 %v294, %v290
      %v303 = vpack.c.b16 %v295, %v291
      %v304 = vpack.c.b16 %v296, %v292
      %v305 = vpack.c.b16 %v297, %v297
      %v306 = vpack.c.b16 %v298, %v298
      %v307 = vpack.c.b16 %v299, %v299
      %v308 = vpack.c.b16 %v300, %v300
      %vm313 = vcmask 162816
      %v315 = vsel %vm313, %v247, 0
      %v318 = vsel %vm313, %v248, 0
      %v321 = vsel %vm313, %v249, 0
      %v324 = vsel %vm313, %v250, 0
      %v327 = vsel %vm313, %v251, 0
      %v330 = vsel %vm313, %v252, 0
      %v333 = vsel %vm313, %v253, 0
      %v336 = vsel %vm313, %v254, 0
      %vm338 = vcmask 1041408
      %v340 = vsel %vm338, %v305, 0
      %v343 = vsel %vm338, %v306, 0
      %v346 = vsel %vm338, %v307, 0
      %v349 = vsel %vm338, %v308, 0
      %351 = vmatprep.subr.bf16.mxu0 %v302
      %352 = vmatpush1.bf16.msra.mxu0 %v301
      %353 = vmatprep.subr.bf16.mxu0 %v343
      %354 = vmatpush1.bf16.msra.mxu0 %v340
      %355 = vmatprep.subr.bf16.mxu0 0
      %356 = vmatpush1.bf16.msra.mxu0 0
      %357 = vmatprep.subr.bf16.mxu0 0
      %358 = vmatpush1.bf16.msra.mxu0 0
      %359 = vmatprep.subr.bf16.mxu0 0
      %360 = vmatpush1.bf16.msra.mxu0 0
      %361 = vmatprep.subr.bf16.mxu0 0
      %362 = vmatpush1.bf16.msra.mxu0 0
      %363 = vmatprep.subr.bf16.mxu0 0
      %364 = vmatpush1.bf16.msra.mxu0 0
      %365 = vmatprep.subr.bf16.mxu0 0
      %366 = vmatpush1.bf16.msra.mxu0 0
      %367 = vmatprep.subr.bf16.mxu0 0
      %368 = vmatpush1.bf16.msra.mxu0 0
      %369 = vmatprep.subr.bf16.mxu0 0
      %370 = vmatpush1.bf16.msra.mxu0 0
      %371 = vmatprep.subr.bf16.mxu0 0
      %372 = vmatpush1.bf16.msra.mxu0 0
      %373 = vmatprep.subr.bf16.mxu0 0
      %374 = vmatpush1.bf16.msra.mxu0 0
      %375 = vmatprep.subr.bf16.mxu0 0
      %376 = vmatpush1.bf16.msra.mxu0 0
      %377 = vmatprep.subr.bf16.mxu0 0
      %378 = vmatpush1.bf16.msra.mxu0 0
      %379 = vmatprep.subr.bf16.mxu0 0
      %380 = vmatpush1.bf16.msra.mxu0 0
      %381 = vmatprep.subr.bf16.mxu0 0
      %382 = vmatpush1.bf16.msra.mxu0 0
      %383 = vmatprep.mubr.bf16.mxu0 0
      %384 = vmatmul.mubr.bf16.gmra.mrb[0].mxu0 %v315
      %v385 = vpop.f32.mrb[0].mxu0
      %v386 = vadd.f32 %v266, %v385
      %v387 = vpop.f32.mrb[0].mxu0
      %v388 = vadd.f32 %v270, %v387
      %v389 = vpop.f32.mrb[0].mxu0
      %v390 = vadd.f32 %v266, %v389
      %v391 = vpop.f32.mrb[0].mxu0
      %v392 = vadd.f32 %v270, %v391
      %393 = vmatprep.mubr.bf16.mxu0 0
      %394 = vmatmul.mubr.bf16.gmra.mrb[0].mxu0 %v318
      %v395 = vpop.f32.mrb[0].mxu0
      %v396 = vadd.f32 %v266, %v395
      %v397 = vpop.f32.mrb[0].mxu0
      %v398 = vadd.f32 %v270, %v397
      %v399 = vpop.f32.mrb[0].mxu0
      %v400 = vadd.f32 %v266, %v399
      %v401 = vpop.f32.mrb[0].mxu0
      %v402 = vadd.f32 %v270, %v401
      %403 = vmatprep.mubr.bf16.mxu0 0
      %404 = vmatmul.mubr.bf16.gmra.mrb[0].mxu0 %v321
      %v405 = vpop.f32.mrb[0].mxu0
      %v406 = vadd.f32 %v266, %v405
      %v407 = vpop.f32.mrb[0].mxu0
      %v408 = vadd.f32 %v270, %v407
      %v409 = vpop.f32.mrb[0].mxu0
      %v410 = vadd.f32 %v266, %v409
      %v411 = vpop.f32.mrb[0].mxu0
      %v412 = vadd.f32 %v270, %v411
      %413 = vmatprep.mubr.bf16.mxu0 0
      %414 = vmatmul.mubr.bf16.gmra.mrb[0].mxu0 %v324
      %v415 = vpop.f32.mrb[0].mxu0
      %v416 = vadd.f32 %v266, %v415
      %v417 = vpop.f32.mrb[0].mxu0
      %v418 = vadd.f32 %v270, %v417
      %v419 = vpop.f32.mrb[0].mxu0
      %v420 = vadd.f32 %v266, %v419
      %v421 = vpop.f32.mrb[0].mxu0
      %v422 = vadd.f32 %v270, %v421
      %423 = vmatprep.mubr.bf16.mxu0 0
      %424 = vmatmul.mubr.bf16.gmra.mrb[0].mxu0 %v327
      %v425 = vpop.f32.mrb[0].mxu0
      %v426 = vadd.f32 %v266, %v425
      %v427 = vpop.f32.mrb[0].mxu0
      %v428 = vadd.f32 %v270, %v427
      %v429 = vpop.f32.mrb[0].mxu0
      %v430 = vadd.f32 %v266, %v429
      %v431 = vpop.f32.mrb[0].mxu0
      %v432 = vadd.f32 %v270, %v431
      %433 = vmatprep.mubr.bf16.mxu0 0
      %434 = vmatmul.mubr.bf16.gmra.mrb[0].mxu0 %v330
      %v435 = vpop.f32.mrb[0].mxu0
      %v436 = vadd.f32 %v266, %v435
      %v437 = vpop.f32.mrb[0].mxu0
      %v438 = vadd.f32 %v270, %v437
      %v439 = vpop.f32.mrb[0].mxu0
      %v440 = vadd.f32 %v266, %v439
      %v441 = vpop.f32.mrb[0].mxu0
      %v442 = vadd.f32 %v270, %v441
      %443 = vmatprep.mubr.bf16.mxu0 0
      %444 = vmatmul.mubr.bf16.gmra.mrb[0].mxu0 %v333
      %v445 = vpop.f32.mrb[0].mxu0
      %v446 = vadd.f32 %v266, %v445
      %v447 = vpop.f32.mrb[0].mxu0
      %v448 = vadd.f32 %v270, %v447
      %v449 = vpop.f32.mrb[0].mxu0
      %v450 = vadd.f32 %v266, %v449
      %v451 = vpop.f32.mrb[0].mxu0
      %v452 = vadd.f32 %v270, %v451
      %453 = vmatprep.mubr.bf16.mxu0 0
      %454 = vmatmul.mubr.bf16.gmra.mrb[0].mxu0 %v336
      %v455 = vpop.f32.mrb[0].mxu0
      %v456 = vadd.f32 %v266, %v455
      %v457 = vpop.f32.mrb[0].mxu0
      %v458 = vadd.f32 %v270, %v457
      %v459 = vpop.f32.mrb[0].mxu0
      %v460 = vadd.f32 %v266, %v459
      %v461 = vpop.f32.mrb[0].mxu0
      %v462 = vadd.f32 %v270, %v461
      %463 = vdwg.mxu0
      %464 = vmatprep.subr.bf16.mxu0 %v304
      %465 = vmatpush1.bf16.msra.mxu0 %v303
      %466 = vmatprep.subr.bf16.mxu0 %v349
      %467 = vmatpush1.bf16.msra.mxu0 %v346
      %468 = vmatprep.subr.bf16.mxu0 0
      %469 = vmatpush1.bf16.msra.mxu0 0
      %470 = vmatprep.subr.bf16.mxu0 0
      %471 = vmatpush1.bf16.msra.mxu0 0
      %472 = vmatprep.subr.bf16.mxu0 0
      %473 = vmatpush1.bf16.msra.mxu0 0
      %474 = vmatprep.subr.bf16.mxu0 0
      %475 = vmatpush1.bf16.msra.mxu0 0
      %476 = vmatprep.subr.bf16.mxu0 0
      %477 = vmatpush1.bf16.msra.mxu0 0
      %478 = vmatprep.subr.bf16.mxu0 0
      %479 = vmatpush1.bf16.msra.mxu0 0
      %480 = vmatprep.subr.bf16.mxu0 0
      %481 = vmatpush1.bf16.msra.mxu0 0
      %482 = vmatprep.subr.bf16.mxu0 0
      %483 = vmatpush1.bf16.msra.mxu0 0
      %484 = vmatprep.subr.bf16.mxu0 0
      %485 = vmatpush1.bf16.msra.mxu0 0
      %486 = vmatprep.subr.bf16.mxu0 0
      %487 = vmatpush1.bf16.msra.mxu0 0
      %488 = vmatprep.subr.bf16.mxu0 0
      %489 = vmatpush1.bf16.msra.mxu0 0
      %490 = vmatprep.subr.bf16.mxu0 0
      %491 = vmatpush1.bf16.msra.mxu0 0
      %492 = vmatprep.subr.bf16.mxu0 0
      %493 = vmatpush1.bf16.msra.mxu0 0
      %494 = vmatprep.subr.bf16.mxu0 0
      %495 = vmatpush1.bf16.msra.mxu0 0
      %496 = vmatprep.mubr.bf16.mxu0 0
      %497 = vmatmul.mubr.bf16.gmra.mrb[0].mxu0 %v315
      %v498 = vpop.f32.mrb[0].mxu0
      %v499 = vadd.f32 %v274, %v498
      %v500 = vpop.f32.mrb[0].mxu0
      %v501 = vadd.f32 %v278, %v500
      %v502 = vpop.f32.mrb[0].mxu0
      %v503 = vadd.f32 %v274, %v502
      %v504 = vpop.f32.mrb[0].mxu0
      %v505 = vadd.f32 %v278, %v504
      %506 = vmatprep.mubr.bf16.mxu0 0
      %507 = vmatmul.mubr.bf16.gmra.mrb[0].mxu0 %v318
      %v508 = vpop.f32.mrb[0].mxu0
      %v509 = vadd.f32 %v274, %v508
      %v510 = vpop.f32.mrb[0].mxu0
      %v511 = vadd.f32 %v278, %v510
      %v512 = vpop.f32.mrb[0].mxu0
      %v513 = vadd.f32 %v274, %v512
      %v514 = vpop.f32.mrb[0].mxu0
      %v515 = vadd.f32 %v278, %v514
      %516 = vmatprep.mubr.bf16.mxu0 0
      %517 = vmatmul.mubr.bf16.gmra.mrb[0].mxu0 %v321
      %v518 = vpop.f32.mrb[0].mxu0
      %v519 = vadd.f32 %v274, %v518
      %v520 = vpop.f32.mrb[0].mxu0
      %v521 = vadd.f32 %v278, %v520
      %v522 = vpop.f32.mrb[0].mxu0
      %v523 = vadd.f32 %v274, %v522
      %v524 = vpop.f32.mrb[0].mxu0
      %v525 = vadd.f32 %v278, %v524
      %526 = vmatprep.mubr.bf16.mxu0 0
      %527 = vmatmul.mubr.bf16.gmra.mrb[0].mxu0 %v324
      %v528 = vpop.f32.mrb[0].mxu0
      %v529 = vadd.f32 %v274, %v528
      %v530 = vpop.f32.mrb[0].mxu0
      %v531 = vadd.f32 %v278, %v530
      %v532 = vpop.f32.mrb[0].mxu0
      %v533 = vadd.f32 %v274, %v532
      %v534 = vpop.f32.mrb[0].mxu0
      %v535 = vadd.f32 %v278, %v534
      %536 = vmatprep.mubr.bf16.mxu0 0
      %537 = vmatmul.mubr.bf16.gmra.mrb[0].mxu0 %v327
      %v538 = vpop.f32.mrb[0].mxu0
      %v539 = vadd.f32 %v274, %v538
      %v540 = vpop.f32.mrb[0].mxu0
      %v541 = vadd.f32 %v278, %v540
      %v542 = vpop.f32.mrb[0].mxu0
      %v543 = vadd.f32 %v274, %v542
      %v544 = vpop.f32.mrb[0].mxu0
      %v545 = vadd.f32 %v278, %v544
      %546 = vmatprep.mubr.bf16.mxu0 0
      %547 = vmatmul.mubr.bf16.gmra.mrb[0].mxu0 %v330
      %v548 = vpop.f32.mrb[0].mxu0
      %v549 = vadd.f32 %v274, %v548
      %v550 = vpop.f32.mrb[0].mxu0
      %v551 = vadd.f32 %v278, %v550
      %v552 = vpop.f32.mrb[0].mxu0
      %v553 = vadd.f32 %v274, %v552
      %v554 = vpop.f32.mrb[0].mxu0
      %v555 = vadd.f32 %v278, %v554
      %556 = vmatprep.mubr.bf16.mxu0 0
      %557 = vmatmul.mubr.bf16.gmra.mrb[0].mxu0 %v333
      %v558 = vpop.f32.mrb[0].mxu0
      %v559 = vadd.f32 %v274, %v558
      %v560 = vpop.f32.mrb[0].mxu0
      %v561 = vadd.f32 %v278, %v560
      %v562 = vpop.f32.mrb[0].mxu0
      %v563 = vadd.f32 %v274, %v562
      %v564 = vpop.f32.mrb[0].mxu0
      %v565 = vadd.f32 %v278, %v564
      %566 = vmatprep.mubr.bf16.mxu0 0
      %567 = vmatmul.mubr.bf16.gmra.mrb[0].mxu0 %v336
      %v568 = vpop.f32.mrb[0].mxu0
      %v569 = vadd.f32 %v274, %v568
      %v570 = vpop.f32.mrb[0].mxu0
      %v571 = vadd.f32 %v278, %v570
      %v572 = vpop.f32.mrb[0].mxu0
      %v573 = vadd.f32 %v274, %v572
      %v574 = vpop.f32.mrb[0].mxu0
      %v575 = vadd.f32 %v278, %v574
      %576 = vdwg.mxu0
      %v577 = vtanh.pop %v386
      %v578 = vtanh.pop %v388
      %v579 = vtanh.pop %v499
      %v580 = vtanh.pop %v501
      %v581 = vtanh.pop %v390
      %v582 = vtanh.pop %v392
      %v583 = vtanh.pop %v503
      %v584 = vtanh.pop %v505
      %v585 = vtanh.pop %v396
      %v586 = vtanh.pop %v398
      %v587 = vtanh.pop %v509
      %v588 = vtanh.pop %v511
      %v589 = vtanh.pop %v400
      %v590 = vtanh.pop %v402
      %v591 = vtanh.pop %v513
      %v592 = vtanh.pop %v515
      %v593 = vtanh.pop %v406
      %v594 = vtanh.pop %v408
      %v595 = vtanh.pop %v519
      %v596 = vtanh.pop %v521
      %v597 = vtanh.pop %v410
      %v598 = vtanh.pop %v412
      %v599 = vtanh.pop %v523
      %v600 = vtanh.pop %v525
      %v601 = vtanh.pop %v416
      %v602 = vtanh.pop %v418
      %v603 = vtanh.pop %v529
      %v604 = vtanh.pop %v531
      %v605 = vtanh.pop %v420
      %v606 = vtanh.pop %v422
      %v607 = vtanh.pop %v533
      %v608 = vtanh.pop %v535
      %v609 = vtanh.pop %v426
      %v610 = vtanh.pop %v428
      %v611 = vtanh.pop %v539
      %v612 = vtanh.pop %v541
      %v613 = vtanh.pop %v430
      %v614 = vtanh.pop %v432
      %v615 = vtanh.pop %v543
      %v616 = vtanh.pop %v545
      %v617 = vtanh.pop %v436
      %v618 = vtanh.pop %v438
      %v619 = vtanh.pop %v549
      %v620 = vtanh.pop %v551
      %v621 = vtanh.pop %v440
      %v622 = vtanh.pop %v442
      %v623 = vtanh.pop %v553
      %v624 = vtanh.pop %v555
      %v625 = vtanh.pop %v446
      %v626 = vtanh.pop %v448
      %v627 = vtanh.pop %v559
      %v628 = vtanh.pop %v561
      %v629 = vtanh.pop %v450
      %v630 = vtanh.pop %v452
      %v631 = vtanh.pop %v563
      %v632 = vtanh.pop %v565
      %v633 = vtanh.pop %v456
      %v634 = vtanh.pop %v458
      %v635 = vtanh.pop %v569
      %v636 = vtanh.pop %v571
      %v637 = vtanh.pop %v460
      %v638 = vtanh.pop %v462
      %v639 = vtanh.pop %v573
      %v640 = vtanh.pop %v575
      %v641 = vpack.c.bf16 %v581, %v577
      %v642 = vpack.c.bf16 %v582, %v578
      %v643 = vpack.c.bf16 %v583, %v579
      %v644 = vpack.c.bf16 %v584, %v580
      %v645 = vpack.c.bf16 %v589, %v585
      %v646 = vpack.c.bf16 %v590, %v586
      %v647 = vpack.c.bf16 %v591, %v587
      %v648 = vpack.c.bf16 %v592, %v588
      %v649 = vpack.c.bf16 %v597, %v593
      %v650 = vpack.c.bf16 %v598, %v594
      %v651 = vpack.c.bf16 %v599, %v595
      %v652 = vpack.c.bf16 %v600, %v596
      %v653 = vpack.c.bf16 %v605, %v601
      %v654 = vpack.c.bf16 %v606, %v602
      %v655 = vpack.c.bf16 %v607, %v603
      %v656 = vpack.c.bf16 %v608, %v604
      %v657 = vpack.c.bf16 %v613, %v609
      %v658 = vpack.c.bf16 %v614, %v610
      %v659 = vpack.c.bf16 %v615, %v611
      %v660 = vpack.c.bf16 %v616, %v612
      %v661 = vpack.c.bf16 %v621, %v617
      %v662 = vpack.c.bf16 %v622, %v618
      %v663 = vpack.c.bf16 %v623, %v619
      %v664 = vpack.c.bf16 %v624, %v620
      %v665 = vpack.c.bf16 %v629, %v625
      %v666 = vpack.c.bf16 %v630, %v626
      %v667 = vpack.c.bf16 %v631, %v627
      %v668 = vpack.c.bf16 %v632, %v628
      %v669 = vpack.c.bf16 %v637, %v633
      %v670 = vpack.c.bf16 %v638, %v634
      %v671 = vpack.c.bf16 %v639, %v635
      %v672 = vpack.c.bf16 %v640, %v636
      %v673 = vld [vmem:[%s3] sm:$0xff]
      %v674 = vld [vmem:[%s3 + $0x8] sm:$0xff]
      %v675 = vld [vmem:[%s3 + $0x10] sm:$0xff]
      %v676 = vld [vmem:[%s3 + $0x18] sm:$0xf]
      %v677 = vld [vmem:[%s3 + $0x1c] sm:$0xff]
      %v678 = vld [vmem:[%s3 + $0x24] sm:$0xff]
      %v679 = vld [vmem:[%s3 + $0x2c] sm:$0xff]
      %v680 = vld [vmem:[%s3 + $0x34] sm:$0xf]
      %v681 = vld [vmem:[%s3 + $0x38] sm:$0xff]
      %v682 = vld [vmem:[%s3 + $0x40] sm:$0xff]
      %v683 = vld [vmem:[%s3 + $0x48] sm:$0xff]
      %v684 = vld [vmem:[%s3 + $0x50] sm:$0xf]
      %v685 = vld [vmem:[%s3 + $0x54] sm:$0xff]
      %v686 = vld [vmem:[%s3 + $0x5c] sm:$0xff]
      %v687 = vld [vmem:[%s3 + $0x64] sm:$0xff]
      %v688 = vld [vmem:[%s3 + $0x6c] sm:$0xf]
      %v689 = vld [vmem:[%s3 + $0x70] sm:$0xff]
      %v690 = vld [vmem:[%s3 + $0x78] sm:$0xff]
      %v691 = vld [vmem:[%s3 + $0x80] sm:$0xff]
      %v692 = vld [vmem:[%s3 + $0x88] sm:$0xf]
      %v693 = vld [vmem:[%s3 + $0x8c] sm:$0xff]
      %v694 = vld [vmem:[%s3 + $0x94] sm:$0xff]
      %v695 = vld [vmem:[%s3 + $0x9c] sm:$0xff]
      %v696 = vld [vmem:[%s3 + $0xa4] sm:$0xf]
      %v697 = vld [vmem:[%s3 + $0xa8] sm:$0xff]
      %v698 = vld [vmem:[%s3 + $0xb0] sm:$0xff]
      %v699 = vld [vmem:[%s3 + $0xb8] sm:$0xff]
      %v700 = vld [vmem:[%s3 + $0xc0] sm:$0xf]
      %v701 = vld [vmem:[%s3 + $0xc4] sm:$0xff]
      %v702 = vld [vmem:[%s3 + $0xcc] sm:$0xff]
      %v703 = vld [vmem:[%s3 + $0xd4] sm:$0xff]
      %v704 = vld [vmem:[%s3 + $0xdc] sm:$0xf]
      %v705 = vld [vmem:[%s3 + $0xe0] sm:$0xff]
      %v706 = vld [vmem:[%s3 + $0xe8] sm:$0xff]
      %v707 = vld [vmem:[%s3 + $0xf0] sm:$0xff]
      %v708 = vld [vmem:[%s3 + $0xf8] sm:$0xf]
      %v709 = vld [vmem:[%s3 + $0xfc] sm:$0xff]
      %v710 = vld [vmem:[%s3 + $0x104] sm:$0xff]
      %v711 = vld [vmem:[%s3 + $0x10c] sm:$0xff]
      %v712 = vld [vmem:[%s3 + $0x114] sm:$0xf]
      %v713 = vld [vmem:[%s3 + $0x118] sm:$0xff]
      %v714 = vld [vmem:[%s3 + $0x120] sm:$0xff]
      %v715 = vld [vmem:[%s3 + $0x128] sm:$0xff]
      %v716 = vld [vmem:[%s3 + $0x130] sm:$0xf]
      %v717 = vld [vmem:[%s3 + $0x134] sm:$0xff]
      %v718 = vld [vmem:[%s3 + $0x13c] sm:$0xff]
      %v719 = vld [vmem:[%s3 + $0x144] sm:$0xff]
      %v720 = vld [vmem:[%s3 + $0x14c] sm:$0xf]
      %v721 = vld [vmem:[%s3 + $0x150] sm:$0xff]
      %v722 = vld [vmem:[%s3 + $0x158] sm:$0xff]
      %v723 = vld [vmem:[%s3 + $0x160] sm:$0xff]
      %v724 = vld [vmem:[%s3 + $0x168] sm:$0xf]
      %v725 = vld [vmem:[%s3 + $0x16c] sm:$0xff]
      %v726 = vld [vmem:[%s3 + $0x174] sm:$0xff]
      %v727 = vld [vmem:[%s3 + $0x17c] sm:$0xff]
      %v728 = vld [vmem:[%s3 + $0x184] sm:$0xf]
      %v729 = vld [vmem:[%s3 + $0x188] sm:$0xff]
      %v730 = vld [vmem:[%s3 + $0x190] sm:$0xff]
      %v731 = vld [vmem:[%s3 + $0x198] sm:$0xff]
      %v732 = vld [vmem:[%s3 + $0x1a0] sm:$0xf]
      %v733 = vld [vmem:[%s3 + $0x1a4] sm:$0xff]
      %v734 = vld [vmem:[%s3 + $0x1ac] sm:$0xff]
      %v735 = vld [vmem:[%s3 + $0x1b4] sm:$0xff]
      %v736 = vld [vmem:[%s3 + $0x1bc] sm:$0xf]
      %v737 = vld [vmem:[%s3 + $0x1c0] sm:$0xff]
      %v738 = vld [vmem:[%s3 + $0x1c8] sm:$0xff]
      %v739 = vld [vmem:[%s3 + $0x1d0] sm:$0xff]
      %v740 = vld [vmem:[%s3 + $0x1d8] sm:$0xf]
      %v741 = vld [vmem:[%s3 + $0x1dc] sm:$0xff]
      %v742 = vld [vmem:[%s3 + $0x1e4] sm:$0xff]
      %v743 = vld [vmem:[%s3 + $0x1ec] sm:$0xff]
      %v744 = vld [vmem:[%s3 + $0x1f4] sm:$0xf]
      %v745 = vld [vmem:[%s3 + $0x1f8] sm:$0xff]
      %v746 = vld [vmem:[%s3 + $0x200] sm:$0xff]
      %v747 = vld [vmem:[%s3 + $0x208] sm:$0xff]
      %v748 = vld [vmem:[%s3 + $0x210] sm:$0xf]
      %v749 = vld [vmem:[%s3 + $0x214] sm:$0xff]
      %v750 = vld [vmem:[%s3 + $0x21c] sm:$0xff]
      %v751 = vld [vmem:[%s3 + $0x224] sm:$0xff]
      %v752 = vld [vmem:[%s3 + $0x22c] sm:$0xf]
      %v753 = vld [vmem:[%s3 + $0x230] sm:$0xff]
      %v754 = vld [vmem:[%s3 + $0x238] sm:$0xff]
      %v755 = vld [vmem:[%s3 + $0x240] sm:$0xff]
      %v756 = vld [vmem:[%s3 + $0x248] sm:$0xf]
      %v757 = vld [vmem:[%s3 + $0x24c] sm:$0xff]
      %v758 = vld [vmem:[%s3 + $0x254] sm:$0xff]
      %v759 = vld [vmem:[%s3 + $0x25c] sm:$0xff]
      %v760 = vld [vmem:[%s3 + $0x264] sm:$0xf]
      %v761 = vld [vmem:[%s3 + $0x268] sm:$0xff]
      %v762 = vld [vmem:[%s3 + $0x270] sm:$0xff]
      %v763 = vld [vmem:[%s3 + $0x278] sm:$0xff]
      %v764 = vld [vmem:[%s3 + $0x280] sm:$0xf]
      %v765 = vld [vmem:[%s3 + $0x284] sm:$0xff]
      %v766 = vld [vmem:[%s3 + $0x28c] sm:$0xff]
      %v767 = vld [vmem:[%s3 + $0x294] sm:$0xff]
      %v768 = vld [vmem:[%s3 + $0x29c] sm:$0xf]
      %v769 = vld [vmem:[%s3 + $0x2a0] sm:$0xff]
      %v770 = vld [vmem:[%s3 + $0x2a8] sm:$0xff]
      %v771 = vld [vmem:[%s3 + $0x2b0] sm:$0xff]
      %v772 = vld [vmem:[%s3 + $0x2b8] sm:$0xf]
      %v773 = vld [vmem:[%s3 + $0x2bc] sm:$0xff]
      %v774 = vld [vmem:[%s3 + $0x2c4] sm:$0xff]
      %v775 = vld [vmem:[%s3 + $0x2cc] sm:$0xff]
      %v776 = vld [vmem:[%s3 + $0x2d4] sm:$0xf]
      %v777 = vld [vmem:[%s3 + $0x2d8] sm:$0xff]
      %v778 = vld [vmem:[%s3 + $0x2e0] sm:$0xff]
      %v779 = vld [vmem:[%s3 + $0x2e8] sm:$0xff]
      %v780 = vld [vmem:[%s3 + $0x2f0] sm:$0xf]
      %v781 = vld [vmem:[%s3 + $0x2f4] sm:$0xff]
      %v782 = vld [vmem:[%s3 + $0x2fc] sm:$0xff]
      %v783 = vld [vmem:[%s3 + $0x304] sm:$0xff]
      %v784 = vld [vmem:[%s3 + $0x30c] sm:$0xf]
      %v785 = vld [vmem:[%s3 + $0x310] sm:$0xff]
      %v786 = vld [vmem:[%s3 + $0x318] sm:$0xff]
      %v787 = vld [vmem:[%s3 + $0x320] sm:$0xff]
      %v788 = vld [vmem:[%s3 + $0x328] sm:$0xf]
      %v789 = vld [vmem:[%s3 + $0x32c] sm:$0xff]
      %v790 = vld [vmem:[%s3 + $0x334] sm:$0xff]
      %v791 = vld [vmem:[%s3 + $0x33c] sm:$0xff]
      %v792 = vld [vmem:[%s3 + $0x344] sm:$0xf]
      %v793 = vld [vmem:[%s3 + $0x348] sm:$0xff]
      %v794 = vld [vmem:[%s3 + $0x350] sm:$0xff]
      %v795 = vld [vmem:[%s3 + $0x358] sm:$0xff]
      %v796 = vld [vmem:[%s3 + $0x360] sm:$0xf]
      %v797 = vld [vmem:[%s3 + $0x364] sm:$0xff]
      %v798 = vld [vmem:[%s3 + $0x36c] sm:$0xff]
      %v799 = vld [vmem:[%s3 + $0x374] sm:$0xff]
      %v800 = vld [vmem:[%s3 + $0x37c] sm:$0xf]
      %v801 = vld [vmem:[%s3 + $0x380] sm:$0xff]
      %v802 = vld [vmem:[%s3 + $0x388] sm:$0xff]
      %v803 = vld [vmem:[%s3 + $0x390] sm:$0xff]
      %v804 = vld [vmem:[%s3 + $0x398] sm:$0xf]
      %v805 = vld [vmem:[%s3 + $0x39c] sm:$0xff]
      %v806 = vld [vmem:[%s3 + $0x3a4] sm:$0xff]
      %v807 = vld [vmem:[%s3 + $0x3ac] sm:$0xff]
      %v808 = vld [vmem:[%s3 + $0x3b4] sm:$0xf]
      %v809 = vld [vmem:[%s3 + $0x3b8] sm:$0xff]
      %v810 = vld [vmem:[%s3 + $0x3c0] sm:$0xff]
      %v811 = vld [vmem:[%s3 + $0x3c8] sm:$0xff]
      %v812 = vld [vmem:[%s3 + $0x3d0] sm:$0xf]
      %v813 = vld [vmem:[%s3 + $0x3d4] sm:$0xff]
      %v814 = vld [vmem:[%s3 + $0x3dc] sm:$0xff]
      %v815 = vld [vmem:[%s3 + $0x3e4] sm:$0xff]
      %v816 = vld [vmem:[%s3 + $0x3ec] sm:$0xf]
      %v817 = vld [vmem:[%s3 + $0x3f0] sm:$0xff]
      %v818 = vld [vmem:[%s3 + $0x3f8] sm:$0xff]
      %v819 = vld [vmem:[%s3 + $0x400] sm:$0xff]
      %v820 = vld [vmem:[%s3 + $0x408] sm:$0xf]
      %v821 = vld [vmem:[%s3 + $0x40c] sm:$0xff]
      %v822 = vld [vmem:[%s3 + $0x414] sm:$0xff]
      %v823 = vld [vmem:[%s3 + $0x41c] sm:$0xff]
      %v824 = vld [vmem:[%s3 + $0x424] sm:$0xf]
      %v825 = vld [vmem:[%s3 + $0x428] sm:$0xff]
      %v826 = vld [vmem:[%s3 + $0x430] sm:$0xff]
      %v827 = vld [vmem:[%s3 + $0x438] sm:$0xff]
      %v828 = vld [vmem:[%s3 + $0x440] sm:$0xf]
      %v829 = vld [vmem:[%s3 + $0x444] sm:$0xff]
      %v830 = vld [vmem:[%s3 + $0x44c] sm:$0xff]
      %v831 = vld [vmem:[%s3 + $0x454] sm:$0xff]
      %v832 = vld [vmem:[%s3 + $0x45c] sm:$0xf]
      %v833 = vld [vmem:[%s3 + $0x460] sm:$0xff]
      %v834 = vld [vmem:[%s3 + $0x468] sm:$0xff]
      %v835 = vld [vmem:[%s3 + $0x470] sm:$0xff]
      %v836 = vld [vmem:[%s3 + $0x478] sm:$0xf]
      %v837 = vld [vmem:[%s3 + $0x47c] sm:$0xff]
      %v838 = vld [vmem:[%s3 + $0x484] sm:$0xff]
      %v839 = vld [vmem:[%s3 + $0x48c] sm:$0xff]
      %v840 = vld [vmem:[%s3 + $0x494] sm:$0xf]
      %v841 = vld [vmem:[%s3 + $0x498] sm:$0xff]
      %v842 = vld [vmem:[%s3 + $0x4a0] sm:$0xff]
      %v843 = vld [vmem:[%s3 + $0x4a8] sm:$0xff]
      %v844 = vld [vmem:[%s3 + $0x4b0] sm:$0xf]
      %v845 = vld [vmem:[%s3 + $0x4b4] sm:$0xff]
      %v846 = vld [vmem:[%s3 + $0x4bc] sm:$0xff]
      %v847 = vld [vmem:[%s3 + $0x4c4] sm:$0xff]
      %v848 = vld [vmem:[%s3 + $0x4cc] sm:$0xf]
      %v849 = vld [vmem:[%s3 + $0x4d0] sm:$0xff]
      %v850 = vld [vmem:[%s3 + $0x4d8] sm:$0xff]
      %v851 = vld [vmem:[%s3 + $0x4e0] sm:$0xff]
      %v852 = vld [vmem:[%s3 + $0x4e8] sm:$0xf]
      %v853 = vld [vmem:[%s3 + $0x4ec] sm:$0xff]
      %v854 = vld [vmem:[%s3 + $0x4f4] sm:$0xff]
      %v855 = vld [vmem:[%s3 + $0x4fc] sm:$0xff]
      %v856 = vld [vmem:[%s3 + $0x504] sm:$0xf]
      %v857 = vld [vmem:[%s3 + $0x508] sm:$0xff]
      %v858 = vld [vmem:[%s3 + $0x510] sm:$0xff]
      %v859 = vld [vmem:[%s3 + $0x518] sm:$0xff]
      %v860 = vld [vmem:[%s3 + $0x520] sm:$0xf]
      %v861 = vld [vmem:[%s3 + $0x524] sm:$0xff]
      %v862 = vld [vmem:[%s3 + $0x52c] sm:$0xff]
      %v863 = vld [vmem:[%s3 + $0x534] sm:$0xff]
      %v864 = vld [vmem:[%s3 + $0x53c] sm:$0xf]
      %v865 = vld [vmem:[%s3 + $0x540] sm:$0xff]
      %v866 = vld [vmem:[%s3 + $0x548] sm:$0xff]
      %v867 = vld [vmem:[%s3 + $0x550] sm:$0xff]
      %v868 = vld [vmem:[%s3 + $0x558] sm:$0xf]
      %v869 = vld [vmem:[%s3 + $0x55c] sm:$0xff]
      %v870 = vld [vmem:[%s3 + $0x564] sm:$0xff]
      %v871 = vld [vmem:[%s3 + $0x56c] sm:$0xff]
      %v872 = vld [vmem:[%s3 + $0x574] sm:$0xf]
      %v873 = vld [vmem:[%s3 + $0x578] sm:$0xff]
      %v874 = vld [vmem:[%s3 + $0x580] sm:$0xff]
      %v875 = vld [vmem:[%s3 + $0x588] sm:$0xff]
      %v876 = vld [vmem:[%s3 + $0x590] sm:$0xf]
      %v877 = vld [vmem:[%s3 + $0x594] sm:$0xff]
      %v878 = vld [vmem:[%s3 + $0x59c] sm:$0xff]
      %v879 = vld [vmem:[%s3 + $0x5a4] sm:$0xff]
      %v880 = vld [vmem:[%s3 + $0x5ac] sm:$0xf]
      %v881 = vld [vmem:[%s3 + $0x5b0] sm:$0xff]
      %v882 = vld [vmem:[%s3 + $0x5b8] sm:$0xff]
      %v883 = vld [vmem:[%s3 + $0x5c0] sm:$0xff]
      %v884 = vld [vmem:[%s3 + $0x5c8] sm:$0xf]
      %v885 = vld [vmem:[%s3 + $0x5cc] sm:$0xff]
      %v886 = vld [vmem:[%s3 + $0x5d4] sm:$0xff]
      %v887 = vld [vmem:[%s3 + $0x5dc] sm:$0xff]
      %v888 = vld [vmem:[%s3 + $0x5e4] sm:$0xf]
      %v889 = vld [vmem:[%s3 + $0x5e8] sm:$0xff]
      %v890 = vld [vmem:[%s3 + $0x5f0] sm:$0xff]
      %v891 = vld [vmem:[%s3 + $0x5f8] sm:$0xff]
      %v892 = vld [vmem:[%s3 + $0x600] sm:$0xf]
      %v893 = vld [vmem:[%s3 + $0x604] sm:$0xff]
      %v894 = vld [vmem:[%s3 + $0x60c] sm:$0xff]
      %v895 = vld [vmem:[%s3 + $0x614] sm:$0xff]
      %v896 = vld [vmem:[%s3 + $0x61c] sm:$0xf]
      %v897 = vld [vmem:[%s3 + $0x620] sm:$0xff]
      %v898 = vld [vmem:[%s3 + $0x628] sm:$0xff]
      %v899 = vld [vmem:[%s3 + $0x630] sm:$0xff]
      %v900 = vld [vmem:[%s3 + $0x638] sm:$0xf]
      %v901 = vld [vmem:[%s3 + $0x63c] sm:$0xff]
      %v902 = vld [vmem:[%s3 + $0x644] sm:$0xff]
      %v903 = vld [vmem:[%s3 + $0x64c] sm:$0xff]
      %v904 = vld [vmem:[%s3 + $0x654] sm:$0xf]
      %v905 = vld [vmem:[%s3 + $0x658] sm:$0xff]
      %v906 = vld [vmem:[%s3 + $0x660] sm:$0xff]
      %v907 = vld [vmem:[%s3 + $0x668] sm:$0xff]
      %v908 = vld [vmem:[%s3 + $0x670] sm:$0xf]
      %v909 = vld [vmem:[%s3 + $0x674] sm:$0xff]
      %v910 = vld [vmem:[%s3 + $0x67c] sm:$0xff]
      %v911 = vld [vmem:[%s3 + $0x684] sm:$0xff]
      %v912 = vld [vmem:[%s3 + $0x68c] sm:$0xf]
      %v913 = vld [vmem:[%s3 + $0x690] sm:$0xff]
      %v914 = vld [vmem:[%s3 + $0x698] sm:$0xff]
      %v915 = vld [vmem:[%s3 + $0x6a0] sm:$0xff]
      %v916 = vld [vmem:[%s3 + $0x6a8] sm:$0xf]
      %v917 = vld [vmem:[%s3 + $0x6ac] sm:$0xff]
      %v918 = vld [vmem:[%s3 + $0x6b4] sm:$0xff]
      %v919 = vld [vmem:[%s3 + $0x6bc] sm:$0xff]
      %v920 = vld [vmem:[%s3 + $0x6c4] sm:$0xf]
      %v921 = vld [vmem:[%s3 + $0x6c8] sm:$0x33]
      %v922 = vld [vmem:[%s3 + $0x6d0] sm:$0x33]
      %v923 = vld [vmem:[%s3 + $0x6d8] sm:$0x33]
      %v924 = vld [vmem:[%s3 + $0x6e0] sm:$0x3]
      %v925 = vld [vmem:[%s4] sm:$0x7f]
      %v927 = vlaneseq
      %v928 = vshrl.u32 %v927, 7
      %v929 = vsub.s32 0, %v928
      %v930 = vrot.slane %v925, %v929
      %v931 = vlaneseq
      %v932 = vshrl.u32 %v931, 7
      %v933 = vsub.s32 1, %v932
      %v934 = vrot.slane %v925, %v933
      %v935 = vlaneseq
      %v936 = vshrl.u32 %v935, 7
      %v937 = vsub.s32 2, %v936
      %v938 = vrot.slane %v925, %v937
      %v939 = vlaneseq
      %v940 = vshrl.u32 %v939, 7
      %v941 = vsub.s32 3, %v940
      %v942 = vrot.slane %v925, %v941
      %v943 = vlaneseq
      %v944 = vshrl.u32 %v943, 7
      %v945 = vsub.s32 4, %v944
      %v946 = vrot.slane %v925, %v945
      %v947 = vlaneseq
      %v948 = vshrl.u32 %v947, 7
      %v949 = vsub.s32 5, %v948
      %v950 = vrot.slane %v925, %v949
      %v951 = vlaneseq
      %v952 = vshrl.u32 %v951, 7
      %v953 = vsub.s32 6, %v952
      %v954 = vrot.slane %v925, %v953
      %v1214 = vunpack.c.l.b16 %v673
      %v1215 = vunpack.c.h.b16 %v673
      %v1216 = vunpack.c.l.b16 %v674
      %v1217 = vunpack.c.h.b16 %v674
      %v1218 = vunpack.c.l.b16 %v675
      %v1219 = vunpack.c.h.b16 %v675
      %v1220 = vunpack.c.l.b16 %v676
      %v1221 = vunpack.c.l.b16 %v677
      %v1222 = vunpack.c.h.b16 %v677
      %v1223 = vunpack.c.l.b16 %v678
      %v1224 = vunpack.c.h.b16 %v678
      %v1225 = vunpack.c.l.b16 %v679
      %v1226 = vunpack.c.h.b16 %v679
      %v1227 = vunpack.c.l.b16 %v680
      %v1228 = vunpack.c.l.b16 %v681
      %v1229 = vunpack.c.h.b16 %v681
      %v1230 = vunpack.c.l.b16 %v682
      %v1231 = vunpack.c.h.b16 %v682
      %v1232 = vunpack.c.l.b16 %v683
      %v1233 = vunpack.c.h.b16 %v683
      %v1234 = vunpack.c.l.b16 %v684
      %v1235 = vunpack.c.l.b16 %v685
      %v1236 = vunpack.c.h.b16 %v685
      %v1237 = vunpack.c.l.b16 %v686
      %v1238 = vunpack.c.h.b16 %v686
      %v1239 = vunpack.c.l.b16 %v687
      %v1240 = vunpack.c.h.b16 %v687
      %v1241 = vunpack.c.l.b16 %v688
      %v1242 = vunpack.c.l.b16 %v689
      %v1243 = vunpack.c.h.b16 %v689
      %v1244 = vunpack.c.l.b16 %v690
      %v1245 = vunpack.c.h.b16 %v690
      %v1246 = vunpack.c.l.b16 %v691
      %v1247 = vunpack.c.h.b16 %v691
      %v1248 = vunpack.c.l.b16 %v692
      %v1249 = vunpack.c.l.b16 %v693
      %v1250 = vunpack.c.h.b16 %v693
      %v1251 = vunpack.c.l.b16 %v694
      %v1252 = vunpack.c.h.b16 %v694
      %v1253 = vunpack.c.l.b16 %v695
      %v1254 = vunpack.c.h.b16 %v695
      %v1255 = vunpack.c.l.b16 %v696
      %v1256 = vunpack.c.l.b16 %v697
      %v1257 = vunpack.c.h.b16 %v697
      %v1258 = vunpack.c.l.b16 %v698
      %v1259 = vunpack.c.h.b16 %v698
      %v1260 = vunpack.c.l.b16 %v699
      %v1261 = vunpack.c.h.b16 %v699
      %v1262 = vunpack.c.l.b16 %v700
      %v1263 = vunpack.c.l.b16 %v701
      %v1264 = vunpack.c.h.b16 %v701
      %v1265 = vunpack.c.l.b16 %v702
      %v1266 = vunpack.c.h.b16 %v702
      %v1267 = vunpack.c.l.b16 %v703
      %v1268 = vunpack.c.h.b16 %v703
      %v1269 = vunpack.c.l.b16 %v704
      %v1270 = vunpack.c.l.b16 %v705
      %v1271 = vunpack.c.h.b16 %v705
      %v1272 = vunpack.c.l.b16 %v706
      %v1273 = vunpack.c.h.b16 %v706
      %v1274 = vunpack.c.l.b16 %v707
      %v1275 = vunpack.c.h.b16 %v707
      %v1276 = vunpack.c.l.b16 %v708
      %v1277 = vunpack.c.l.b16 %v709
      %v1278 = vunpack.c.h.b16 %v709
      %v1279 = vunpack.c.l.b16 %v710
      %v1280 = vunpack.c.h.b16 %v710
      %v1281 = vunpack.c.l.b16 %v711
      %v1282 = vunpack.c.h.b16 %v711
      %v1283 = vunpack.c.l.b16 %v712
      %v1284 = vunpack.c.l.b16 %v713
      %v1285 = vunpack.c.h.b16 %v713
      %v1286 = vunpack.c.l.b16 %v714
      %v1287 = vunpack.c.h.b16 %v714
      %v1288 = vunpack.c.l.b16 %v715
      %v1289 = vunpack.c.h.b16 %v715
      %v1290 = vunpack.c.l.b16 %v716
      %v1291 = vunpack.c.l.b16 %v717
      %v1292 = vunpack.c.h.b16 %v717
      %v1293 = vunpack.c.l.b16 %v718
      %v1294 = vunpack.c.h.b16 %v718
      %v1295 = vunpack.c.l.b16 %v719
      %v1296 = vunpack.c.h.b16 %v719
      %v1297 = vunpack.c.l.b16 %v720
      %v1298 = vunpack.c.l.b16 %v721
      %v1299 = vunpack.c.h.b16 %v721
      %v1300 = vunpack.c.l.b16 %v722
      %v1301 = vunpack.c.h.b16 %v722
      %v1302 = vunpack.c.l.b16 %v723
      %v1303 = vunpack.c.h.b16 %v723
      %v1304 = vunpack.c.l.b16 %v724
      %v1305 = vunpack.c.l.b16 %v725
      %v1306 = vunpack.c.h.b16 %v725
      %v1307 = vunpack.c.l.b16 %v726
      %v1308 = vunpack.c.h.b16 %v726
      %v1309 = vunpack.c.l.b16 %v727
      %v1310 = vunpack.c.h.b16 %v727
      %v1311 = vunpack.c.l.b16 %v728
      %v1312 = vunpack.c.l.b16 %v729
      %v1313 = vunpack.c.h.b16 %v729
      %v1314 = vunpack.c.l.b16 %v730
      %v1315 = vunpack.c.h.b16 %v730
      %v1316 = vunpack.c.l.b16 %v731
      %v1317 = vunpack.c.h.b16 %v731
      %v1318 = vunpack.c.l.b16 %v732
      %v1319 = vunpack.c.l.b16 %v733
      %v1320 = vunpack.c.h.b16 %v733
      %v1321 = vunpack.c.l.b16 %v734
      %v1322 = vunpack.c.h.b16 %v734
      %v1323 = vunpack.c.l.b16 %v735
      %v1324 = vunpack.c.h.b16 %v735
      %v1325 = vunpack.c.l.b16 %v736
      %v1326 = vunpack.c.l.b16 %v737
      %v1327 = vunpack.c.h.b16 %v737
      %v1328 = vunpack.c.l.b16 %v738
      %v1329 = vunpack.c.h.b16 %v738
      %v1330 = vunpack.c.l.b16 %v739
      %v1331 = vunpack.c.h.b16 %v739
      %v1332 = vunpack.c.l.b16 %v740
      %v1333 = vunpack.c.l.b16 %v741
      %v1334 = vunpack.c.h.b16 %v741
      %v1335 = vunpack.c.l.b16 %v742
      %v1336 = vunpack.c.h.b16 %v742
      %v1337 = vunpack.c.l.b16 %v743
      %v1338 = vunpack.c.h.b16 %v743
      %v1339 = vunpack.c.l.b16 %v744
      %v1340 = vunpack.c.l.b16 %v745
      %v1341 = vunpack.c.h.b16 %v745
      %v1342 = vunpack.c.l.b16 %v746
      %v1343 = vunpack.c.h.b16 %v746
      %v1344 = vunpack.c.l.b16 %v747
      %v1345 = vunpack.c.h.b16 %v747
      %v1346 = vunpack.c.l.b16 %v748
      %v1347 = vunpack.c.l.b16 %v749
      %v1348 = vunpack.c.h.b16 %v749
      %v1349 = vunpack.c.l.b16 %v750
      %v1350 = vunpack.c.h.b16 %v750
      %v1351 = vunpack.c.l.b16 %v751
      %v1352 = vunpack.c.h.b16 %v751
      %v1353 = vunpack.c.l.b16 %v752
      %v1354 = vunpack.c.l.b16 %v753
      %v1355 = vunpack.c.h.b16 %v753
      %v1356 = vunpack.c.l.b16 %v754
      %v1357 = vunpack.c.h.b16 %v754
      %v1358 = vunpack.c.l.b16 %v755
      %v1359 = vunpack.c.h.b16 %v755
      %v1360 = vunpack.c.l.b16 %v756
      %v1361 = vunpack.c.l.b16 %v757
      %v1362 = vunpack.c.h.b16 %v757
      %v1363 = vunpack.c.l.b16 %v758
      %v1364 = vunpack.c.h.b16 %v758
      %v1365 = vunpack.c.l.b16 %v759
      %v1366 = vunpack.c.h.b16 %v759
      %v1367 = vunpack.c.l.b16 %v760
      %v1368 = vunpack.c.l.b16 %v761
      %v1369 = vunpack.c.h.b16 %v761
      %v1370 = vunpack.c.l.b16 %v762
      %v1371 = vunpack.c.h.b16 %v762
      %v1372 = vunpack.c.l.b16 %v763
      %v1373 = vunpack.c.h.b16 %v763
      %v1374 = vunpack.c.l.b16 %v764
      %v1375 = vunpack.c.l.b16 %v765
      %v1376 = vunpack.c.h.b16 %v765
      %v1377 = vunpack.c.l.b16 %v766
      %v1378 = vunpack.c.h.b16 %v766
      %v1379 = vunpack.c.l.b16 %v767
      %v1380 = vunpack.c.h.b16 %v767
      %v1381 = vunpack.c.l.b16 %v768
      %v1382 = vunpack.c.l.b16 %v769
      %v1383 = vunpack.c.h.b16 %v769
      %v1384 = vunpack.c.l.b16 %v770
      %v1385 = vunpack.c.h.b16 %v770
      %v1386 = vunpack.c.l.b16 %v771
      %v1387 = vunpack.c.h.b16 %v771
      %v1388 = vunpack.c.l.b16 %v772
      %v1389 = vunpack.c.l.b16 %v773
      %v1390 = vunpack.c.h.b16 %v773
      %v1391 = vunpack.c.l.b16 %v774
      %v1392 = vunpack.c.h.b16 %v774
      %v1393 = vunpack.c.l.b16 %v775
      %v1394 = vunpack.c.h.b16 %v775
      %v1395 = vunpack.c.l.b16 %v776
      %v1396 = vunpack.c.l.b16 %v777
      %v1397 = vunpack.c.h.b16 %v777
      %v1398 = vunpack.c.l.b16 %v778
      %v1399 = vunpack.c.h.b16 %v778
      %v1400 = vunpack.c.l.b16 %v779
      %v1401 = vunpack.c.h.b16 %v779
      %v1402 = vunpack.c.l.b16 %v780
      %v1403 = vunpack.c.l.b16 %v781
      %v1404 = vunpack.c.h.b16 %v781
      %v1405 = vunpack.c.l.b16 %v782
      %v1406 = vunpack.c.h.b16 %v782
      %v1407 = vunpack.c.l.b16 %v783
      %v1408 = vunpack.c.h.b16 %v783
      %v1409 = vunpack.c.l.b16 %v784
      %v1410 = vunpack.c.l.b16 %v785
      %v1411 = vunpack.c.h.b16 %v785
      %v1412 = vunpack.c.l.b16 %v786
      %v1413 = vunpack.c.h.b16 %v786
      %v1414 = vunpack.c.l.b16 %v787
      %v1415 = vunpack.c.h.b16 %v787
      %v1416 = vunpack.c.l.b16 %v788
      %v1417 = vunpack.c.l.b16 %v789
      %v1418 = vunpack.c.h.b16 %v789
      %v1419 = vunpack.c.l.b16 %v790
      %v1420 = vunpack.c.h.b16 %v790
      %v1421 = vunpack.c.l.b16 %v791
      %v1422 = vunpack.c.h.b16 %v791
      %v1423 = vunpack.c.l.b16 %v792
      %v1424 = vunpack.c.l.b16 %v793
      %v1425 = vunpack.c.h.b16 %v793
      %v1426 = vunpack.c.l.b16 %v794
      %v1427 = vunpack.c.h.b16 %v794
      %v1428 = vunpack.c.l.b16 %v795
      %v1429 = vunpack.c.h.b16 %v795
      %v1430 = vunpack.c.l.b16 %v796
      %v1431 = vunpack.c.l.b16 %v797
      %v1432 = vunpack.c.h.b16 %v797
      %v1433 = vunpack.c.l.b16 %v798
      %v1434 = vunpack.c.h.b16 %v798
      %v1435 = vunpack.c.l.b16 %v799
      %v1436 = vunpack.c.h.b16 %v799
      %v1437 = vunpack.c.l.b16 %v800
      %v1438 = vunpack.c.l.b16 %v801
      %v1439 = vunpack.c.h.b16 %v801
      %v1440 = vunpack.c.l.b16 %v802
      %v1441 = vunpack.c.h.b16 %v802
      %v1442 = vunpack.c.l.b16 %v803
      %v1443 = vunpack.c.h.b16 %v803
      %v1444 = vunpack.c.l.b16 %v804
      %v1445 = vunpack.c.l.b16 %v805
      %v1446 = vunpack.c.h.b16 %v805
      %v1447 = vunpack.c.l.b16 %v806
      %v1448 = vunpack.c.h.b16 %v806
      %v1449 = vunpack.c.l.b16 %v807
      %v1450 = vunpack.c.h.b16 %v807
      %v1451 = vunpack.c.l.b16 %v808
      %v1452 = vunpack.c.l.b16 %v809
      %v1453 = vunpack.c.h.b16 %v809
      %v1454 = vunpack.c.l.b16 %v810
      %v1455 = vunpack.c.h.b16 %v810
      %v1456 = vunpack.c.l.b16 %v811
      %v1457 = vunpack.c.h.b16 %v811
      %v1458 = vunpack.c.l.b16 %v812
      %v1459 = vunpack.c.l.b16 %v813
      %v1460 = vunpack.c.h.b16 %v813
      %v1461 = vunpack.c.l.b16 %v814
      %v1462 = vunpack.c.h.b16 %v814
      %v1463 = vunpack.c.l.b16 %v815
      %v1464 = vunpack.c.h.b16 %v815
      %v1465 = vunpack.c.l.b16 %v816
      %v1466 = vunpack.c.l.b16 %v817
      %v1467 = vunpack.c.h.b16 %v817
      %v1468 = vunpack.c.l.b16 %v818
      %v1469 = vunpack.c.h.b16 %v818
      %v1470 = vunpack.c.l.b16 %v819
      %v1471 = vunpack.c.h.b16 %v819
      %v1472 = vunpack.c.l.b16 %v820
      %v1473 = vunpack.c.l.b16 %v821
      %v1474 = vunpack.c.h.b16 %v821
      %v1475 = vunpack.c.l.b16 %v822
      %v1476 = vunpack.c.h.b16 %v822
      %v1477 = vunpack.c.l.b16 %v823
      %v1478 = vunpack.c.h.b16 %v823
      %v1479 = vunpack.c.l.b16 %v824
      %v1480 = vunpack.c.l.b16 %v825
      %v1481 = vunpack.c.h.b16 %v825
      %v1482 = vunpack.c.l.b16 %v826
      %v1483 = vunpack.c.h.b16 %v826
      %v1484 = vunpack.c.l.b16 %v827
      %v1485 = vunpack.c.h.b16 %v827
      %v1486 = vunpack.c.l.b16 %v828
      %v1487 = vunpack.c.l.b16 %v829
      %v1488 = vunpack.c.h.b16 %v829
      %v1489 = vunpack.c.l.b16 %v830
      %v1490 = vunpack.c.h.b16 %v830
      %v1491 = vunpack.c.l.b16 %v831
      %v1492 = vunpack.c.h.b16 %v831
      %v1493 = vunpack.c.l.b16 %v832
      %v1494 = vunpack.c.l.b16 %v833
      %v1495 = vunpack.c.h.b16 %v833
      %v1496 = vunpack.c.l.b16 %v834
      %v1497 = vunpack.c.h.b16 %v834
      %v1498 = vunpack.c.l.b16 %v835
      %v1499 = vunpack.c.h.b16 %v835
      %v1500 = vunpack.c.l.b16 %v836
      %v1501 = vunpack.c.l.b16 %v837
      %v1502 = vunpack.c.h.b16 %v837
      %v1503 = vunpack.c.l.b16 %v838
      %v1504 = vunpack.c.h.b16 %v838
      %v1505 = vunpack.c.l.b16 %v839
      %v1506 = vunpack.c.h.b16 %v839
      %v1507 = vunpack.c.l.b16 %v840
      %v1508 = vunpack.c.l.b16 %v841
      %v1509 = vunpack.c.h.b16 %v841
      %v1510 = vunpack.c.l.b16 %v842
      %v1511 = vunpack.c.h.b16 %v842
      %v1512 = vunpack.c.l.b16 %v843
      %v1513 = vunpack.c.h.b16 %v843
      %v1514 = vunpack.c.l.b16 %v844
      %v1515 = vunpack.c.l.b16 %v845
      %v1516 = vunpack.c.h.b16 %v845
      %v1517 = vunpack.c.l.b16 %v846
      %v1518 = vunpack.c.h.b16 %v846
      %v1519 = vunpack.c.l.b16 %v847
      %v1520 = vunpack.c.h.b16 %v847
      %v1521 = vunpack.c.l.b16 %v848
      %v1522 = vunpack.c.l.b16 %v849
      %v1523 = vunpack.c.h.b16 %v849
      %v1524 = vunpack.c.l.b16 %v850
      %v1525 = vunpack.c.h.b16 %v850
      %v1526 = vunpack.c.l.b16 %v851
      %v1527 = vunpack.c.h.b16 %v851
      %v1528 = vunpack.c.l.b16 %v852
      %v1529 = vunpack.c.l.b16 %v853
      %v1530 = vunpack.c.h.b16 %v853
      %v1531 = vunpack.c.l.b16 %v854
      %v1532 = vunpack.c.h.b16 %v854
      %v1533 = vunpack.c.l.b16 %v855
      %v1534 = vunpack.c.h.b16 %v855
      %v1535 = vunpack.c.l.b16 %v856
      %v1536 = vunpack.c.l.b16 %v857
      %v1537 = vunpack.c.h.b16 %v857
      %v1538 = vunpack.c.l.b16 %v858
      %v1539 = vunpack.c.h.b16 %v858
      %v1540 = vunpack.c.l.b16 %v859
      %v1541 = vunpack.c.h.b16 %v859
      %v1542 = vunpack.c.l.b16 %v860
      %v1543 = vunpack.c.l.b16 %v861
      %v1544 = vunpack.c.h.b16 %v861
      %v1545 = vunpack.c.l.b16 %v862
      %v1546 = vunpack.c.h.b16 %v862
      %v1547 = vunpack.c.l.b16 %v863
      %v1548 = vunpack.c.h.b16 %v863
      %v1549 = vunpack.c.l.b16 %v864
      %v1550 = vunpack.c.l.b16 %v865
      %v1551 = vunpack.c.h.b16 %v865
      %v1552 = vunpack.c.l.b16 %v866
      %v1553 = vunpack.c.h.b16 %v866
      %v1554 = vunpack.c.l.b16 %v867
      %v1555 = vunpack.c.h.b16 %v867
      %v1556 = vunpack.c.l.b16 %v868
      %v1557 = vunpack.c.l.b16 %v869
      %v1558 = vunpack.c.h.b16 %v869
      %v1559 = vunpack.c.l.b16 %v870
      %v1560 = vunpack.c.h.b16 %v870
      %v1561 = vunpack.c.l.b16 %v871
      %v1562 = vunpack.c.h.b16 %v871
      %v1563 = vunpack.c.l.b16 %v872
      %v1564 = vunpack.c.l.b16 %v873
      %v1565 = vunpack.c.h.b16 %v873
      %v1566 = vunpack.c.l.b16 %v874
      %v1567 = vunpack.c.h.b16 %v874
      %v1568 = vunpack.c.l.b16 %v875
      %v1569 = vunpack.c.h.b16 %v875
      %v1570 = vunpack.c.l.b16 %v876
      %v1571 = vunpack.c.l.b16 %v877
      %v1572 = vunpack.c.h.b16 %v877
      %v1573 = vunpack.c.l.b16 %v878
      %v1574 = vunpack.c.h.b16 %v878
      %v1575 = vunpack.c.l.b16 %v879
      %v1576 = vunpack.c.h.b16 %v879
      %v1577 = vunpack.c.l.b16 %v880
      %v1578 = vunpack.c.l.b16 %v881
      %v1579 = vunpack.c.h.b16 %v881
      %v1580 = vunpack.c.l.b16 %v882
      %v1581 = vunpack.c.h.b16 %v882
      %v1582 = vunpack.c.l.b16 %v883
      %v1583 = vunpack.c.h.b16 %v883
      %v1584 = vunpack.c.l.b16 %v884
      %v1585 = vunpack.c.l.b16 %v885
      %v1586 = vunpack.c.h.b16 %v885
      %v1587 = vunpack.c.l.b16 %v886
      %v1588 = vunpack.c.h.b16 %v886
      %v1589 = vunpack.c.l.b16 %v887
      %v1590 = vunpack.c.h.b16 %v887
      %v1591 = vunpack.c.l.b16 %v888
      %v1592 = vunpack.c.l.b16 %v889
      %v1593 = vunpack.c.h.b16 %v889
      %v1594 = vunpack.c.l.b16 %v890
      %v1595 = vunpack.c.h.b16 %v890
      %v1596 = vunpack.c.l.b16 %v891
      %v1597 = vunpack.c.h.b16 %v891
      %v1598 = vunpack.c.l.b16 %v892
      %v1599 = vunpack.c.l.b16 %v893
      %v1600 = vunpack.c.h.b16 %v893
      %v1601 = vunpack.c.l.b16 %v894
      %v1602 = vunpack.c.h.b16 %v894
      %v1603 = vunpack.c.l.b16 %v895
      %v1604 = vunpack.c.h.b16 %v895
      %v1605 = vunpack.c.l.b16 %v896
      %v1606 = vunpack.c.l.b16 %v897
      %v1607 = vunpack.c.h.b16 %v897
      %v1608 = vunpack.c.l.b16 %v898
      %v1609 = vunpack.c.h.b16 %v898
      %v1610 = vunpack.c.l.b16 %v899
      %v1611 = vunpack.c.h.b16 %v899
      %v1612 = vunpack.c.l.b16 %v900
      %v1613 = vunpack.c.l.b16 %v901
      %v1614 = vunpack.c.h.b16 %v901
      %v1615 = vunpack.c.l.b16 %v902
      %v1616 = vunpack.c.h.b16 %v902
      %v1617 = vunpack.c.l.b16 %v903
      %v1618 = vunpack.c.h.b16 %v903
      %v1619 = vunpack.c.l.b16 %v904
      %v1620 = vunpack.c.l.b16 %v905
      %v1621 = vunpack.c.h.b16 %v905
      %v1622 = vunpack.c.l.b16 %v906
      %v1623 = vunpack.c.h.b16 %v906
      %v1624 = vunpack.c.l.b16 %v907
      %v1625 = vunpack.c.h.b16 %v907
      %v1626 = vunpack.c.l.b16 %v908
      %v1627 = vunpack.c.l.b16 %v909
      %v1628 = vunpack.c.h.b16 %v909
      %v1629 = vunpack.c.l.b16 %v910
      %v1630 = vunpack.c.h.b16 %v910
      %v1631 = vunpack.c.l.b16 %v911
      %v1632 = vunpack.c.h.b16 %v911
      %v1633 = vunpack.c.l.b16 %v912
      %v1634 = vunpack.c.l.b16 %v913
      %v1635 = vunpack.c.h.b16 %v913
      %v1636 = vunpack.c.l.b16 %v914
      %v1637 = vunpack.c.h.b16 %v914
      %v1638 = vunpack.c.l.b16 %v915
      %v1639 = vunpack.c.h.b16 %v915
      %v1640 = vunpack.c.l.b16 %v916
      %v1641 = vunpack.c.l.b16 %v917
      %v1642 = vunpack.c.h.b16 %v917
      %v1643 = vunpack.c.l.b16 %v918
      %v1644 = vunpack.c.h.b16 %v918
      %v1645 = vunpack.c.l.b16 %v919
      %v1646 = vunpack.c.h.b16 %v919
      %v1647 = vunpack.c.l.b16 %v920
      %v1648 = vunpack.c.l.b16 %v921
      %v1649 = vunpack.c.h.b16 %v921
      %v1650 = vunpack.c.l.b16 %v922
      %v1651 = vunpack.c.h.b16 %v922
      %v1652 = vunpack.c.l.b16 %v923
      %v1653 = vunpack.c.h.b16 %v923
      %v1654 = vunpack.c.l.b16 %v924
      %v1655 = vpack.c.b16 %v1221, %v1214
      %v1656 = vpack.c.b16 %v1222, %v1215
      %v1657 = vpack.c.b16 %v1223, %v1216
      %v1658 = vpack.c.b16 %v1224, %v1217
      %v1659 = vpack.c.b16 %v1225, %v1218
      %v1660 = vpack.c.b16 %v1226, %v1219
      %v1661 = vpack.c.b16 %v1227, %v1220
      %v1662 = vpack.c.b16 %v1235, %v1228
      %v1663 = vpack.c.b16 %v1236, %v1229
      %v1664 = vpack.c.b16 %v1237, %v1230
      %v1665 = vpack.c.b16 %v1238, %v1231
      %v1666 = vpack.c.b16 %v1239, %v1232
      %v1667 = vpack.c.b16 %v1240, %v1233
      %v1668 = vpack.c.b16 %v1241, %v1234
      %v1669 = vpack.c.b16 %v1249, %v1242
      %v1670 = vpack.c.b16 %v1250, %v1243
      %v1671 = vpack.c.b16 %v1251, %v1244
      %v1672 = vpack.c.b16 %v1252, %v1245
      %v1673 = vpack.c.b16 %v1253, %v1246
      %v1674 = vpack.c.b16 %v1254, %v1247
      %v1675 = vpack.c.b16 %v1255, %v1248
      %v1676 = vpack.c.b16 %v1263, %v1256
      %v1677 = vpack.c.b16 %v1264, %v1257
      %v1678 = vpack.c.b16 %v1265, %v1258
      %v1679 = vpack.c.b16 %v1266, %v1259
      %v1680 = vpack.c.b16 %v1267, %v1260
      %v1681 = vpack.c.b16 %v1268, %v1261
      %v1682 = vpack.c.b16 %v1269, %v1262
      %v1683 = vpack.c.b16 %v1277, %v1270
      %v1684 = vpack.c.b16 %v1278, %v1271
      %v1685 = vpack.c.b16 %v1279, %v1272
      %v1686 = vpack.c.b16 %v1280, %v1273
      %v1687 = vpack.c.b16 %v1281, %v1274
      %v1688 = vpack.c.b16 %v1282, %v1275
      %v1689 = vpack.c.b16 %v1283, %v1276
      %v1690 = vpack.c.b16 %v1291, %v1284
      %v1691 = vpack.c.b16 %v1292, %v1285
      %v1692 = vpack.c.b16 %v1293, %v1286
      %v1693 = vpack.c.b16 %v1294, %v1287
      %v1694 = vpack.c.b16 %v1295, %v1288
      %v1695 = vpack.c.b16 %v1296, %v1289
      %v1696 = vpack.c.b16 %v1297, %v1290
      %v1697 = vpack.c.b16 %v1305, %v1298
      %v1698 = vpack.c.b16 %v1306, %v1299
      %v1699 = vpack.c.b16 %v1307, %v1300
      %v1700 = vpack.c.b16 %v1308, %v1301
      %v1701 = vpack.c.b16 %v1309, %v1302
      %v1702 = vpack.c.b16 %v1310, %v1303
      %v1703 = vpack.c.b16 %v1311, %v1304
      %v1704 = vpack.c.b16 %v1319, %v1312
      %v1705 = vpack.c.b16 %v1320, %v1313
      %v1706 = vpack.c.b16 %v1321, %v1314
      %v1707 = vpack.c.b16 %v1322, %v1315
      %v1708 = vpack.c.b16 %v1323, %v1316
      %v1709 = vpack.c.b16 %v1324, %v1317
      %v1710 = vpack.c.b16 %v1325, %v1318
      %v1711 = vpack.c.b16 %v1333, %v1326
      %v1712 = vpack.c.b16 %v1334, %v1327
      %v1713 = vpack.c.b16 %v1335, %v1328
      %v1714 = vpack.c.b16 %v1336, %v1329
      %v1715 = vpack.c.b16 %v1337, %v1330
      %v1716 = vpack.c.b16 %v1338, %v1331
      %v1717 = vpack.c.b16 %v1339, %v1332
      %v1718 = vpack.c.b16 %v1347, %v1340
      %v1719 = vpack.c.b16 %v1348, %v1341
      %v1720 = vpack.c.b16 %v1349, %v1342
      %v1721 = vpack.c.b16 %v1350, %v1343
      %v1722 = vpack.c.b16 %v1351, %v1344
      %v1723 = vpack.c.b16 %v1352, %v1345
      %v1724 = vpack.c.b16 %v1353, %v1346
      %v1725 = vpack.c.b16 %v1361, %v1354
      %v1726 = vpack.c.b16 %v1362, %v1355
      %v1727 = vpack.c.b16 %v1363, %v1356
      %v1728 = vpack.c.b16 %v1364, %v1357
      %v1729 = vpack.c.b16 %v1365, %v1358
      %v1730 = vpack.c.b16 %v1366, %v1359
      %v1731 = vpack.c.b16 %v1367, %v1360
      %v1732 = vpack.c.b16 %v1375, %v1368
      %v1733 = vpack.c.b16 %v1376, %v1369
      %v1734 = vpack.c.b16 %v1377, %v1370
      %v1735 = vpack.c.b16 %v1378, %v1371
      %v1736 = vpack.c.b16 %v1379, %v1372
      %v1737 = vpack.c.b16 %v1380, %v1373
      %v1738 = vpack.c.b16 %v1381, %v1374
      %v1739 = vpack.c.b16 %v1389, %v1382
      %v1740 = vpack.c.b16 %v1390, %v1383
      %v1741 = vpack.c.b16 %v1391, %v1384
      %v1742 = vpack.c.b16 %v1392, %v1385
      %v1743 = vpack.c.b16 %v1393, %v1386
      %v1744 = vpack.c.b16 %v1394, %v1387
      %v1745 = vpack.c.b16 %v1395, %v1388
      %v1746 = vpack.c.b16 %v1403, %v1396
      %v1747 = vpack.c.b16 %v1404, %v1397
      %v1748 = vpack.c.b16 %v1405, %v1398
      %v1749 = vpack.c.b16 %v1406, %v1399
      %v1750 = vpack.c.b16 %v1407, %v1400
      %v1751 = vpack.c.b16 %v1408, %v1401
      %v1752 = vpack.c.b16 %v1409, %v1402
      %v1753 = vpack.c.b16 %v1417, %v1410
      %v1754 = vpack.c.b16 %v1418, %v1411
      %v1755 = vpack.c.b16 %v1419, %v1412
      %v1756 = vpack.c.b16 %v1420, %v1413
      %v1757 = vpack.c.b16 %v1421, %v1414
      %v1758 = vpack.c.b16 %v1422, %v1415
      %v1759 = vpack.c.b16 %v1423, %v1416
      %v1760 = vpack.c.b16 %v1431, %v1424
      %v1761 = vpack.c.b16 %v1432, %v1425
      %v1762 = vpack.c.b16 %v1433, %v1426
      %v1763 = vpack.c.b16 %v1434, %v1427
      %v1764 = vpack.c.b16 %v1435, %v1428
      %v1765 = vpack.c.b16 %v1436, %v1429
      %v1766 = vpack.c.b16 %v1437, %v1430
      %v1767 = vpack.c.b16 %v1445, %v1438
      %v1768 = vpack.c.b16 %v1446, %v1439
      %v1769 = vpack.c.b16 %v1447, %v1440
      %v1770 = vpack.c.b16 %v1448, %v1441
      %v1771 = vpack.c.b16 %v1449, %v1442
      %v1772 = vpack.c.b16 %v1450, %v1443
      %v1773 = vpack.c.b16 %v1451, %v1444
      %v1774 = vpack.c.b16 %v1459, %v1452
      %v1775 = vpack.c.b16 %v1460, %v1453
      %v1776 = vpack.c.b16 %v1461, %v1454
      %v1777 = vpack.c.b16 %v1462, %v1455
      %v1778 = vpack.c.b16 %v1463, %v1456
      %v1779 = vpack.c.b16 %v1464, %v1457
      %v1780 = vpack.c.b16 %v1465, %v1458
      %v1781 = vpack.c.b16 %v1473, %v1466
      %v1782 = vpack.c.b16 %v1474, %v1467
      %v1783 = vpack.c.b16 %v1475, %v1468
      %v1784 = vpack.c.b16 %v1476, %v1469
      %v1785 = vpack.c.b16 %v1477, %v1470
      %v1786 = vpack.c.b16 %v1478, %v1471
      %v1787 = vpack.c.b16 %v1479, %v1472
      %v1788 = vpack.c.b16 %v1487, %v1480
      %v1789 = vpack.c.b16 %v1488, %v1481
      %v1790 = vpack.c.b16 %v1489, %v1482
      %v1791 = vpack.c.b16 %v1490, %v1483
      %v1792 = vpack.c.b16 %v1491, %v1484
      %v1793 = vpack.c.b16 %v1492, %v1485
      %v1794 = vpack.c.b16 %v1493, %v1486
      %v1795 = vpack.c.b16 %v1501, %v1494
      %v1796 = vpack.c.b16 %v1502, %v1495
      %v1797 = vpack.c.b16 %v1503, %v1496
      %v1798 = vpack.c.b16 %v1504, %v1497
      %v1799 = vpack.c.b16 %v1505, %v1498
      %v1800 = vpack.c.b16 %v1506, %v1499
      %v1801 = vpack.c.b16 %v1507, %v1500
      %v1802 = vpack.c.b16 %v1515, %v1508
      %v1803 = vpack.c.b16 %v1516, %v1509
      %v1804 = vpack.c.b16 %v1517, %v1510
      %v1805 = vpack.c.b16 %v1518, %v1511
      %v1806 = vpack.c.b16 %v1519, %v1512
      %v1807 = vpack.c.b16 %v1520, %v1513
      %v1808 = vpack.c.b16 %v1521, %v1514
      %v1809 = vpack.c.b16 %v1529, %v1522
      %v1810 = vpack.c.b16 %v1530, %v1523
      %v1811 = vpack.c.b16 %v1531, %v1524
      %v1812 = vpack.c.b16 %v1532, %v1525
      %v1813 = vpack.c.b16 %v1533, %v1526
      %v1814 = vpack.c.b16 %v1534, %v1527
      %v1815 = vpack.c.b16 %v1535, %v1528
      %v1816 = vpack.c.b16 %v1543, %v1536
      %v1817 = vpack.c.b16 %v1544, %v1537
      %v1818 = vpack.c.b16 %v1545, %v1538
      %v1819 = vpack.c.b16 %v1546, %v1539
      %v1820 = vpack.c.b16 %v1547, %v1540
      %v1821 = vpack.c.b16 %v1548, %v1541
      %v1822 = vpack.c.b16 %v1549, %v1542
      %v1823 = vpack.c.b16 %v1557, %v1550
      %v1824 = vpack.c.b16 %v1558, %v1551
      %v1825 = vpack.c.b16 %v1559, %v1552
      %v1826 = vpack.c.b16 %v1560, %v1553
      %v1827 = vpack.c.b16 %v1561, %v1554
      %v1828 = vpack.c.b16 %v1562, %v1555
      %v1829 = vpack.c.b16 %v1563, %v1556
      %v1830 = vpack.c.b16 %v1571, %v1564
      %v1831 = vpack.c.b16 %v1572, %v1565
      %v1832 = vpack.c.b16 %v1573, %v1566
      %v1833 = vpack.c.b16 %v1574, %v1567
      %v1834 = vpack.c.b16 %v1575, %v1568
      %v1835 = vpack.c.b16 %v1576, %v1569
      %v1836 = vpack.c.b16 %v1577, %v1570
      %v1837 = vpack.c.b16 %v1585, %v1578
      %v1838 = vpack.c.b16 %v1586, %v1579
      %v1839 = vpack.c.b16 %v1587, %v1580
      %v1840 = vpack.c.b16 %v1588, %v1581
      %v1841 = vpack.c.b16 %v1589, %v1582
      %v1842 = vpack.c.b16 %v1590, %v1583
      %v1843 = vpack.c.b16 %v1591, %v1584
      %v1844 = vpack.c.b16 %v1599, %v1592
      %v1845 = vpack.c.b16 %v1600, %v1593
      %v1846 = vpack.c.b16 %v1601, %v1594
      %v1847 = vpack.c.b16 %v1602, %v1595
      %v1848 = vpack.c.b16 %v1603, %v1596
      %v1849 = vpack.c.b16 %v1604, %v1597
      %v1850 = vpack.c.b16 %v1605, %v1598
      %v1851 = vpack.c.b16 %v1613, %v1606
      %v1852 = vpack.c.b16 %v1614, %v1607
      %v1853 = vpack.c.b16 %v1615, %v1608
      %v1854 = vpack.c.b16 %v1616, %v1609
      %v1855 = vpack.c.b16 %v1617, %v1610
      %v1856 = vpack.c.b16 %v1618, %v1611
      %v1857 = vpack.c.b16 %v1619, %v1612
      %v1858 = vpack.c.b16 %v1627, %v1620
      %v1859 = vpack.c.b16 %v1628, %v1621
      %v1860 = vpack.c.b16 %v1629, %v1622
      %v1861 = vpack.c.b16 %v1630, %v1623
      %v1862 = vpack.c.b16 %v1631, %v1624
      %v1863 = vpack.c.b16 %v1632, %v1625
      %v1864 = vpack.c.b16 %v1633, %v1626
      %v1865 = vpack.c.b16 %v1641, %v1634
      %v1866 = vpack.c.b16 %v1642, %v1635
      %v1867 = vpack.c.b16 %v1643, %v1636
      %v1868 = vpack.c.b16 %v1644, %v1637
      %v1869 = vpack.c.b16 %v1645, %v1638
      %v1870 = vpack.c.b16 %v1646, %v1639
      %v1871 = vpack.c.b16 %v1647, %v1640
      %v1872 = vpack.c.b16 %v1648, %v1648
      %v1873 = vpack.c.b16 %v1649, %v1649
      %v1874 = vpack.c.b16 %v1650, %v1650
      %v1875 = vpack.c.b16 %v1651, %v1651
      %v1876 = vpack.c.b16 %v1652, %v1652
      %v1877 = vpack.c.b16 %v1653, %v1653
      %v1878 = vpack.c.b16 %v1654, %v1654
      %vm2096 = vcmask 949248
      %v2098 = vsel %vm2096, %v644, 0
      %v2101 = vsel %vm2096, %v648, 0
      %v2104 = vsel %vm2096, %v652, 0
      %v2107 = vsel %vm2096, %v656, 0
      %v2110 = vsel %vm2096, %v660, 0
      %v2113 = vsel %vm2096, %v664, 0
      %v2116 = vsel %vm2096, %v668, 0
      %v2119 = vsel %vm2096, %v672, 0
      %v2122 = vsel %vm338, %v1872, 0
      %v2125 = vsel %vm338, %v1873, 0
      %v2128 = vsel %vm338, %v1874, 0
      %v2131 = vsel %vm338, %v1875, 0
      %v2134 = vsel %vm338, %v1876, 0
      %v2137 = vsel %vm338, %v1877, 0
      %v2140 = vsel %vm338, %v1878, 0
      %2142 = vmatprep.subr.bf16.mxu0 %v1656
      %2143 = vmatpush1.bf16.msra.mxu0 %v1655
      %2144 = vmatprep.subr.bf16.mxu0 %v1663
      %2145 = vmatpush1.bf16.msra.mxu0 %v1662
      %2146 = vmatprep.subr.bf16.mxu0 %v1670
      %2147 = vmatpush1.bf16.msra.mxu0 %v1669
      %2148 = vmatprep.subr.bf16.mxu0 %v1677
      %2149 = vmatpush1.bf16.msra.mxu0 %v1676
      %2150 = vmatprep.subr.bf16.mxu0 %v1684
      %2151 = vmatpush1.bf16.msra.mxu0 %v1683
      %2152 = vmatprep.subr.bf16.mxu0 %v1691
      %2153 = vmatpush1.bf16.msra.mxu0 %v1690
      %2154 = vmatprep.subr.bf16.mxu0 %v1698
      %2155 = vmatpush1.bf16.msra.mxu0 %v1697
      %2156 = vmatprep.subr.bf16.mxu0 %v1705
      %2157 = vmatpush1.bf16.msra.mxu0 %v1704
      %2158 = vmatprep.subr.bf16.mxu0 %v1712
      %2159 = vmatpush1.bf16.msra.mxu0 %v1711
      %2160 = vmatprep.subr.bf16.mxu0 %v1719
      %2161 = vmatpush1.bf16.msra.mxu0 %v1718
      %2162 = vmatprep.subr.bf16.mxu0 %v1726
      %2163 = vmatpush1.bf16.msra.mxu0 %v1725
      %2164 = vmatprep.subr.bf16.mxu0 %v1733
      %2165 = vmatpush1.bf16.msra.mxu0 %v1732
      %2166 = vmatprep.subr.bf16.mxu0 %v1740
      %2167 = vmatpush1.bf16.msra.mxu0 %v1739
      %2168 = vmatprep.subr.bf16.mxu0 %v1747
      %2169 = vmatpush1.bf16.msra.mxu0 %v1746
      %2170 = vmatprep.subr.bf16.mxu0 %v1754
      %2171 = vmatpush1.bf16.msra.mxu0 %v1753
      %2172 = vmatprep.subr.bf16.mxu0 %v1761
      %2173 = vmatpush1.bf16.msra.mxu0 %v1760
      %2174 = vmatprep.mubr.bf16.mxu0 %v642
      %2175 = vmatmul.mubr.bf16.gmra.mrb[0].mxu0 %v641
      %v2176 = vpop.f32.mrb[0].mxu0
      %v2177 = vadd.f32 %v930, %v2176
      %v2178 = vpop.f32.mrb[0].mxu0
      %v2179 = vadd.f32 %v934, %v2178
      %v2180 = vpop.f32.mrb[0].mxu0
      %v2181 = vadd.f32 %v930, %v2180
      %v2182 = vpop.f32.mrb[0].mxu0
      %v2183 = vadd.f32 %v934, %v2182
      %2184 = vmatprep.mubr.bf16.mxu0 %v646
      %2185 = vmatmul.mubr.bf16.gmra.mrb[0].mxu0 %v645
      %v2186 = vpop.f32.mrb[0].mxu0
      %v2187 = vadd.f32 %v930, %v2186
      %v2188 = vpop.f32.mrb[0].mxu0
      %v2189 = vadd.f32 %v934, %v2188
      %v2190 = vpop.f32.mrb[0].mxu0
      %v2191 = vadd.f32 %v930, %v2190
      %v2192 = vpop.f32.mrb[0].mxu0
      %v2193 = vadd.f32 %v934, %v2192
      %2194 = vmatprep.mubr.bf16.mxu0 %v650
      %2195 = vmatmul.mubr.bf16.gmra.mrb[0].mxu0 %v649
      %v2196 = vpop.f32.mrb[0].mxu0
      %v2197 = vadd.f32 %v930, %v2196
      %v2198 = vpop.f32.mrb[0].mxu0
      %v2199 = vadd.f32 %v934, %v2198
      %v2200 = vpop.f32.mrb[0].mxu0
      %v2201 = vadd.f32 %v930, %v2200
      %v2202 = vpop.f32.mrb[0].mxu0
      %v2203 = vadd.f32 %v934, %v2202
      %2204 = vmatprep.mubr.bf16.mxu0 %v654
      %2205 = vmatmul.mubr.bf16.gmra.mrb[0].mxu0 %v653
      %v2206 = vpop.f32.mrb[0].mxu0
      %v2207 = vadd.f32 %v930, %v2206
      %v2208 = vpop.f32.mrb[0].mxu0
      %v2209 = vadd.f32 %v934, %v2208
      %v2210 = vpop.f32.mrb[0].mxu0
      %v2211 = vadd.f32 %v930, %v2210
      %v2212 = vpop.f32.mrb[0].mxu0
      %v2213 = vadd.f32 %v934, %v2212
      %2214 = vmatprep.mubr.bf16.mxu0 %v658
      %2215 = vmatmul.mubr.bf16.gmra.mrb[0].mxu0 %v657
      %v2216 = vpop.f32.mrb[0].mxu0
      %v2217 = vadd.f32 %v930, %v2216
      %v2218 = vpop.f32.mrb[0].mxu0
      %v2219 = vadd.f32 %v934, %v2218
      %v2220 = vpop.f32.mrb[0].mxu0
      %v2221 = vadd.f32 %v930, %v2220
      %v2222 = vpop.f32.mrb[0].mxu0
      %v2223 = vadd.f32 %v934, %v2222
      %2224 = vmatprep.mubr.bf16.mxu0 %v662
      %2225 = vmatmul.mubr.bf16.gmra.mrb[0].mxu0 %v661
      %v2226 = vpop.f32.mrb[0].mxu0
      %v2227 = vadd.f32 %v930, %v2226
      %v2228 = vpop.f32.mrb[0].mxu0
      %v2229 = vadd.f32 %v934, %v2228
      %v2230 = vpop.f32.mrb[0].mxu0
      %v2231 = vadd.f32 %v930, %v2230
      %v2232 = vpop.f32.mrb[0].mxu0
      %v2233 = vadd.f32 %v934, %v2232
      %2234 = vmatprep.mubr.bf16.mxu0 %v666
      %2235 = vmatmul.mubr.bf16.gmra.mrb[0].mxu0 %v665
      %v2236 = vpop.f32.mrb[0].mxu0
      %v2237 = vadd.f32 %v930, %v2236
      %v2238 = vpop.f32.mrb[0].mxu0
      %v2239 = vadd.f32 %v934, %v2238
      %v2240 = vpop.f32.mrb[0].mxu0
      %v2241 = vadd.f32 %v930, %v2240
      %v2242 = vpop.f32.mrb[0].mxu0
      %v2243 = vadd.f32 %v934, %v2242
      %2244 = vmatprep.mubr.bf16.mxu0 %v670
      %2245 = vmatmul.mubr.bf16.gmra.mrb[0].mxu0 %v669
      %v2246 = vpop.f32.mrb[0].mxu0
      %v2247 = vadd.f32 %v930, %v2246
      %v2248 = vpop.f32.mrb[0].mxu0
      %v2249 = vadd.f32 %v934, %v2248
      %v2250 = vpop.f32.mrb[0].mxu0
      %v2251 = vadd.f32 %v930, %v2250
      %v2252 = vpop.f32.mrb[0].mxu0
      %v2253 = vadd.f32 %v934, %v2252
      %2254 = vdwg.mxu0
      %2255 = vmatprep.subr.bf16.mxu0 %v1768
      %2256 = vmatpush1.bf16.msra.mxu0 %v1767
      %2257 = vmatprep.subr.bf16.mxu0 %v1775
      %2258 = vmatpush1.bf16.msra.mxu0 %v1774
      %2259 = vmatprep.subr.bf16.mxu0 %v1782
      %2260 = vmatpush1.bf16.msra.mxu0 %v1781
      %2261 = vmatprep.subr.bf16.mxu0 %v1789
      %2262 = vmatpush1.bf16.msra.mxu0 %v1788
      %2263 = vmatprep.subr.bf16.mxu0 %v1796
      %2264 = vmatpush1.bf16.msra.mxu0 %v1795
      %2265 = vmatprep.subr.bf16.mxu0 %v1803
      %2266 = vmatpush1.bf16.msra.mxu0 %v1802
      %2267 = vmatprep.subr.bf16.mxu0 %v1810
      %2268 = vmatpush1.bf16.msra.mxu0 %v1809
      %2269 = vmatprep.subr.bf16.mxu0 %v1817
      %2270 = vmatpush1.bf16.msra.mxu0 %v1816
      %2271 = vmatprep.subr.bf16.mxu0 %v1824
      %2272 = vmatpush1.bf16.msra.mxu0 %v1823
      %2273 = vmatprep.subr.bf16.mxu0 %v1831
      %2274 = vmatpush1.bf16.msra.mxu0 %v1830
      %2275 = vmatprep.subr.bf16.mxu0 %v1838
      %2276 = vmatpush1.bf16.msra.mxu0 %v1837
      %2277 = vmatprep.subr.bf16.mxu0 %v1845
      %2278 = vmatpush1.bf16.msra.mxu0 %v1844
      %2279 = vmatprep.subr.bf16.mxu0 %v1852
      %2280 = vmatpush1.bf16.msra.mxu0 %v1851
      %2281 = vmatprep.subr.bf16.mxu0 %v1859
      %2282 = vmatpush1.bf16.msra.mxu0 %v1858
      %2283 = vmatprep.subr.bf16.mxu0 %v1866
      %2284 = vmatpush1.bf16.msra.mxu0 %v1865
      %2285 = vmatprep.subr.bf16.mxu0 %v2125
      %2286 = vmatpush1.bf16.msra.mxu0 %v2122
      %2287 = vmatprep.mubr.bf16.mxu0 %v2098
      %2288 = vmatmul.mubr.bf16.gmra.mrb[0].mxu0 %v643
      %v2289 = vpop.f32.mrb[0].mxu0
      %v2290 = vadd.f32 %v2177, %v2289
      %v2291 = vpop.f32.mrb[0].mxu0
      %v2292 = vadd.f32 %v2179, %v2291
      %v2293 = vpop.f32.mrb[0].mxu0
      %v2294 = vadd.f32 %v2181, %v2293
      %v2295 = vpop.f32.mrb[0].mxu0
      %v2296 = vadd.f32 %v2183, %v2295
      %2297 = vmatprep.mubr.bf16.mxu0 %v2101
      %2298 = vmatmul.mubr.bf16.gmra.mrb[0].mxu0 %v647
      %v2299 = vpop.f32.mrb[0].mxu0
      %v2300 = vadd.f32 %v2187, %v2299
      %v2301 = vpop.f32.mrb[0].mxu0
      %v2302 = vadd.f32 %v2189, %v2301
      %v2303 = vpop.f32.mrb[0].mxu0
      %v2304 = vadd.f32 %v2191, %v2303
      %v2305 = vpop.f32.mrb[0].mxu0
      %v2306 = vadd.f32 %v2193, %v2305
      %2307 = vmatprep.mubr.bf16.mxu0 %v2104
      %2308 = vmatmul.mubr.bf16.gmra.mrb[0].mxu0 %v651
      %v2309 = vpop.f32.mrb[0].mxu0
      %v2310 = vadd.f32 %v2197, %v2309
      %v2311 = vpop.f32.mrb[0].mxu0
      %v2312 = vadd.f32 %v2199, %v2311
      %v2313 = vpop.f32.mrb[0].mxu0
      %v2314 = vadd.f32 %v2201, %v2313
      %v2315 = vpop.f32.mrb[0].mxu0
      %v2316 = vadd.f32 %v2203, %v2315
      %2317 = vmatprep.mubr.bf16.mxu0 %v2107
      %2318 = vmatmul.mubr.bf16.gmra.mrb[0].mxu0 %v655
      %v2319 = vpop.f32.mrb[0].mxu0
      %v2320 = vadd.f32 %v2207, %v2319
      %v2321 = vpop.f32.mrb[0].mxu0
      %v2322 = vadd.f32 %v2209, %v2321
      %v2323 = vpop.f32.mrb[0].mxu0
      %v2324 = vadd.f32 %v2211, %v2323
      %v2325 = vpop.f32.mrb[0].mxu0
      %v2326 = vadd.f32 %v2213, %v2325
      %2327 = vmatprep.mubr.bf16.mxu0 %v2110
      %2328 = vmatmul.mubr.bf16.gmra.mrb[0].mxu0 %v659
      %v2329 = vpop.f32.mrb[0].mxu0
      %v2330 = vadd.f32 %v2217, %v2329
      %v2331 = vpop.f32.mrb[0].mxu0
      %v2332 = vadd.f32 %v2219, %v2331
      %v2333 = vpop.f32.mrb[0].mxu0
      %v2334 = vadd.f32 %v2221, %v2333
      %v2335 = vpop.f32.mrb[0].mxu0
      %v2336 = vadd.f32 %v2223, %v2335
      %2337 = vmatprep.mubr.bf16.mxu0 %v2113
      %2338 = vmatmul.mubr.bf16.gmra.mrb[0].mxu0 %v663
      %v2339 = vpop.f32.mrb[0].mxu0
      %v2340 = vadd.f32 %v2227, %v2339
      %v2341 = vpop.f32.mrb[0].mxu0
      %v2342 = vadd.f32 %v2229, %v2341
      %v2343 = vpop.f32.mrb[0].mxu0
      %v2344 = vadd.f32 %v2231, %v2343
      %v2345 = vpop.f32.mrb[0].mxu0
      %v2346 = vadd.f32 %v2233, %v2345
      %2347 = vmatprep.mubr.bf16.mxu0 %v2116
      %2348 = vmatmul.mubr.bf16.gmra.mrb[0].mxu0 %v667
      %v2349 = vpop.f32.mrb[0].mxu0
      %v2350 = vadd.f32 %v2237, %v2349
      %v2351 = vpop.f32.mrb[0].mxu0
      %v2352 = vadd.f32 %v2239, %v2351
      %v2353 = vpop.f32.mrb[0].mxu0
      %v2354 = vadd.f32 %v2241, %v2353
      %v2355 = vpop.f32.mrb[0].mxu0
      %v2356 = vadd.f32 %v2243, %v2355
      %2357 = vmatprep.mubr.bf16.mxu0 %v2119
      %2358 = vmatmul.mubr.bf16.gmra.mrb[0].mxu0 %v671
      %v2359 = vpop.f32.mrb[0].mxu0
      %v2360 = vadd.f32 %v2247, %v2359
      %v2361 = vpop.f32.mrb[0].mxu0
      %v2362 = vadd.f32 %v2249, %v2361
      %v2363 = vpop.f32.mrb[0].mxu0
      %v2364 = vadd.f32 %v2251, %v2363
      %v2365 = vpop.f32.mrb[0].mxu0
      %v2366 = vadd.f32 %v2253, %v2365
      %2367 = vdwg.mxu0
      %2368 = vmatprep.subr.bf16.mxu0 %v1658
      %2369 = vmatpush1.bf16.msra.mxu0 %v1657
      %2370 = vmatprep.subr.bf16.mxu0 %v1665
      %2371 = vmatpush1.bf16.msra.mxu0 %v1664
      %2372 = vmatprep.subr.bf16.mxu0 %v1672
      %2373 = vmatpush1.bf16.msra.mxu0 %v1671
      %2374 = vmatprep.subr.bf16.mxu0 %v1679
      %2375 = vmatpush1.bf16.msra.mxu0 %v1678
      %2376 = vmatprep.subr.bf16.mxu0 %v1686
      %2377 = vmatpush1.bf16.msra.mxu0 %v1685
      %2378 = vmatprep.subr.bf16.mxu0 %v1693
      %2379 = vmatpush1.bf16.msra.mxu0 %v1692
      %2380 = vmatprep.subr.bf16.mxu0 %v1700
      %2381 = vmatpush1.bf16.msra.mxu0 %v1699
      %2382 = vmatprep.subr.bf16.mxu0 %v1707
      %2383 = vmatpush1.bf16.msra.mxu0 %v1706
      %2384 = vmatprep.subr.bf16.mxu0 %v1714
      %2385 = vmatpush1.bf16.msra.mxu0 %v1713
      %2386 = vmatprep.subr.bf16.mxu0 %v1721
      %2387 = vmatpush1.bf16.msra.mxu0 %v1720
      %2388 = vmatprep.subr.bf16.mxu0 %v1728
      %2389 = vmatpush1.bf16.msra.mxu0 %v1727
      %2390 = vmatprep.subr.bf16.mxu0 %v1735
      %2391 = vmatpush1.bf16.msra.mxu0 %v1734
      %2392 = vmatprep.subr.bf16.mxu0 %v1742
      %2393 = vmatpush1.bf16.msra.mxu0 %v1741
      %2394 = vmatprep.subr.bf16.mxu0 %v1749
      %2395 = vmatpush1.bf16.msra.mxu0 %v1748
      %2396 = vmatprep.subr.bf16.mxu0 %v1756
      %2397 = vmatpush1.bf16.msra.mxu0 %v1755
      %2398 = vmatprep.subr.bf16.mxu0 %v1763
      %2399 = vmatpush1.bf16.msra.mxu0 %v1762
      %2400 = vmatprep.mubr.bf16.mxu0 %v642
      %2401 = vmatmul.mubr.bf16.gmra.mrb[0].mxu0 %v641
      %v2402 = vpop.f32.mrb[0].mxu0
      %v2403 = vadd.f32 %v938, %v2402
      %v2404 = vpop.f32.mrb[0].mxu0
      %v2405 = vadd.f32 %v942, %v2404
      %v2406 = vpop.f32.mrb[0].mxu0
      %v2407 = vadd.f32 %v938, %v2406
      %v2408 = vpop.f32.mrb[0].mxu0
      %v2409 = vadd.f32 %v942, %v2408
      %2410 = vmatprep.mubr.bf16.mxu0 %v646
      %2411 = vmatmul.mubr.bf16.gmra.mrb[0].mxu0 %v645
      %v2412 = vpop.f32.mrb[0].mxu0
      %v2413 = vadd.f32 %v938, %v2412
      %v2414 = vpop.f32.mrb[0].mxu0
      %v2415 = vadd.f32 %v942, %v2414
      %v2416 = vpop.f32.mrb[0].mxu0
      %v2417 = vadd.f32 %v938, %v2416
      %v2418 = vpop.f32.mrb[0].mxu0
      %v2419 = vadd.f32 %v942, %v2418
      %2420 = vmatprep.mubr.bf16.mxu0 %v650
      %2421 = vmatmul.mubr.bf16.gmra.mrb[0].mxu0 %v649
      %v2422 = vpop.f32.mrb[0].mxu0
      %v2423 = vadd.f32 %v938, %v2422
      %v2424 = vpop.f32.mrb[0].mxu0
      %v2425 = vadd.f32 %v942, %v2424
      %v2426 = vpop.f32.mrb[0].mxu0
      %v2427 = vadd.f32 %v938, %v2426
      %v2428 = vpop.f32.mrb[0].mxu0
      %v2429 = vadd.f32 %v942, %v2428
      %2430 = vmatprep.mubr.bf16.mxu0 %v654
      %2431 = vmatmul.mubr.bf16.gmra.mrb[0].mxu0 %v653
      %v2432 = vpop.f32.mrb[0].mxu0
      %v2433 = vadd.f32 %v938, %v2432
      %v2434 = vpop.f32.mrb[0].mxu0
      %v2435 = vadd.f32 %v942, %v2434
      %v2436 = vpop.f32.mrb[0].mxu0
      %v2437 = vadd.f32 %v938, %v2436
      %v2438 = vpop.f32.mrb[0].mxu0
      %v2439 = vadd.f32 %v942, %v2438
      %2440 = vmatprep.mubr.bf16.mxu0 %v658
      %2441 = vmatmul.mubr.bf16.gmra.mrb[0].mxu0 %v657
      %v2442 = vpop.f32.mrb[0].mxu0
      %v2443 = vadd.f32 %v938, %v2442
      %v2444 = vpop.f32.mrb[0].mxu0
      %v2445 = vadd.f32 %v942, %v2444
      %v2446 = vpop.f32.mrb[0].mxu0
      %v2447 = vadd.f32 %v938, %v2446
      %v2448 = vpop.f32.mrb[0].mxu0
      %v2449 = vadd.f32 %v942, %v2448
      %2450 = vmatprep.mubr.bf16.mxu0 %v662
      %2451 = vmatmul.mubr.bf16.gmra.mrb[0].mxu0 %v661
      %v2452 = vpop.f32.mrb[0].mxu0
      %v2453 = vadd.f32 %v938, %v2452
      %v2454 = vpop.f32.mrb[0].mxu0
      %v2455 = vadd.f32 %v942, %v2454
      %v2456 = vpop.f32.mrb[0].mxu0
      %v2457 = vadd.f32 %v938, %v2456
      %v2458 = vpop.f32.mrb[0].mxu0
      %v2459 = vadd.f32 %v942, %v2458
      %2460 = vmatprep.mubr.bf16.mxu0 %v666
      %2461 = vmatmul.mubr.bf16.gmra.mrb[0].mxu0 %v665
      %v2462 = vpop.f32.mrb[0].mxu0
      %v2463 = vadd.f32 %v938, %v2462
      %v2464 = vpop.f32.mrb[0].mxu0
      %v2465 = vadd.f32 %v942, %v2464
      %v2466 = vpop.f32.mrb[0].mxu0
      %v2467 = vadd.f32 %v938, %v2466
      %v2468 = vpop.f32.mrb[0].mxu0
      %v2469 = vadd.f32 %v942, %v2468
      %2470 = vmatprep.mubr.bf16.mxu0 %v670
      %2471 = vmatmul.mubr.bf16.gmra.mrb[0].mxu0 %v669
      %v2472 = vpop.f32.mrb[0].mxu0
      %v2473 = vadd.f32 %v938, %v2472
      %v2474 = vpop.f32.mrb[0].mxu0
      %v2475 = vadd.f32 %v942, %v2474
      %v2476 = vpop.f32.mrb[0].mxu0
      %v2477 = vadd.f32 %v938, %v2476
      %v2478 = vpop.f32.mrb[0].mxu0
      %v2479 = vadd.f32 %v942, %v2478
      %2480 = vdwg.mxu0
      %2481 = vmatprep.subr.bf16.mxu0 %v1770
      %2482 = vmatpush1.bf16.msra.mxu0 %v1769
      %2483 = vmatprep.subr.bf16.mxu0 %v1777
      %2484 = vmatpush1.bf16.msra.mxu0 %v1776
      %2485 = vmatprep.subr.bf16.mxu0 %v1784
      %2486 = vmatpush1.bf16.msra.mxu0 %v1783
      %2487 = vmatprep.subr.bf16.mxu0 %v1791
      %2488 = vmatpush1.bf16.msra.mxu0 %v1790
      %2489 = vmatprep.subr.bf16.mxu0 %v1798
      %2490 = vmatpush1.bf16.msra.mxu0 %v1797
      %2491 = vmatprep.subr.bf16.mxu0 %v1805
      %2492 = vmatpush1.bf16.msra.mxu0 %v1804
      %2493 = vmatprep.subr.bf16.mxu0 %v1812
      %2494 = vmatpush1.bf16.msra.mxu0 %v1811
      %2495 = vmatprep.subr.bf16.mxu0 %v1819
      %2496 = vmatpush1.bf16.msra.mxu0 %v1818
      %2497 = vmatprep.subr.bf16.mxu0 %v1826
      %2498 = vmatpush1.bf16.msra.mxu0 %v1825
      %2499 = vmatprep.subr.bf16.mxu0 %v1833
      %2500 = vmatpush1.bf16.msra.mxu0 %v1832
      %2501 = vmatprep.subr.bf16.mxu0 %v1840
      %2502 = vmatpush1.bf16.msra.mxu0 %v1839
      %2503 = vmatprep.subr.bf16.mxu0 %v1847
      %2504 = vmatpush1.bf16.msra.mxu0 %v1846
      %2505 = vmatprep.subr.bf16.mxu0 %v1854
      %2506 = vmatpush1.bf16.msra.mxu0 %v1853
      %2507 = vmatprep.subr.bf16.mxu0 %v1861
      %2508 = vmatpush1.bf16.msra.mxu0 %v1860
      %2509 = vmatprep.subr.bf16.mxu0 %v1868
      %2510 = vmatpush1.bf16.msra.mxu0 %v1867
      %2511 = vmatprep.subr.bf16.mxu0 %v2131
      %2512 = vmatpush1.bf16.msra.mxu0 %v2128
      %2513 = vmatprep.mubr.bf16.mxu0 %v2098
      %2514 = vmatmul.mubr.bf16.gmra.mrb[0].mxu0 %v643
      %v2515 = vpop.f32.mrb[0].mxu0
      %v2516 = vadd.f32 %v2403, %v2515
      %v2517 = vpop.f32.mrb[0].mxu0
      %v2518 = vadd.f32 %v2405, %v2517
      %v2519 = vpop.f32.mrb[0].mxu0
      %v2520 = vadd.f32 %v2407, %v2519
      %v2521 = vpop.f32.mrb[0].mxu0
      %v2522 = vadd.f32 %v2409, %v2521
      %2523 = vmatprep.mubr.bf16.mxu0 %v2101
      %2524 = vmatmul.mubr.bf16.gmra.mrb[0].mxu0 %v647
      %v2525 = vpop.f32.mrb[0].mxu0
      %v2526 = vadd.f32 %v2413, %v2525
      %v2527 = vpop.f32.mrb[0].mxu0
      %v2528 = vadd.f32 %v2415, %v2527
      %v2529 = vpop.f32.mrb[0].mxu0
      %v2530 = vadd.f32 %v2417, %v2529
      %v2531 = vpop.f32.mrb[0].mxu0
      %v2532 = vadd.f32 %v2419, %v2531
      %2533 = vmatprep.mubr.bf16.mxu0 %v2104
      %2534 = vmatmul.mubr.bf16.gmra.mrb[0].mxu0 %v651
      %v2535 = vpop.f32.mrb[0].mxu0
      %v2536 = vadd.f32 %v2423, %v2535
      %v2537 = vpop.f32.mrb[0].mxu0
      %v2538 = vadd.f32 %v2425, %v2537
      %v2539 = vpop.f32.mrb[0].mxu0
      %v2540 = vadd.f32 %v2427, %v2539
      %v2541 = vpop.f32.mrb[0].mxu0
      %v2542 = vadd.f32 %v2429, %v2541
      %2543 = vmatprep.mubr.bf16.mxu0 %v2107
      %2544 = vmatmul.mubr.bf16.gmra.mrb[0].mxu0 %v655
      %v2545 = vpop.f32.mrb[0].mxu0
      %v2546 = vadd.f32 %v2433, %v2545
      %v2547 = vpop.f32.mrb[0].mxu0
      %v2548 = vadd.f32 %v2435, %v2547
      %v2549 = vpop.f32.mrb[0].mxu0
      %v2550 = vadd.f32 %v2437, %v2549
      %v2551 = vpop.f32.mrb[0].mxu0
      %v2552 = vadd.f32 %v2439, %v2551
      %2553 = vmatprep.mubr.bf16.mxu0 %v2110
      %2554 = vmatmul.mubr.bf16.gmra.mrb[0].mxu0 %v659
      %v2555 = vpop.f32.mrb[0].mxu0
      %v2556 = vadd.f32 %v2443, %v2555
      %v2557 = vpop.f32.mrb[0].mxu0
      %v2558 = vadd.f32 %v2445, %v2557
      %v2559 = vpop.f32.mrb[0].mxu0
      %v2560 = vadd.f32 %v2447, %v2559
      %v2561 = vpop.f32.mrb[0].mxu0
      %v2562 = vadd.f32 %v2449, %v2561
      %2563 = vmatprep.mubr.bf16.mxu0 %v2113
      %2564 = vmatmul.mubr.bf16.gmra.mrb[0].mxu0 %v663
      %v2565 = vpop.f32.mrb[0].mxu0
      %v2566 = vadd.f32 %v2453, %v2565
      %v2567 = vpop.f32.mrb[0].mxu0
      %v2568 = vadd.f32 %v2455, %v2567
      %v2569 = vpop.f32.mrb[0].mxu0
      %v2570 = vadd.f32 %v2457, %v2569
      %v2571 = vpop.f32.mrb[0].mxu0
      %v2572 = vadd.f32 %v2459, %v2571
      %2573 = vmatprep.mubr.bf16.mxu0 %v2116
      %2574 = vmatmul.mubr.bf16.gmra.mrb[0].mxu0 %v667
      %v2575 = vpop.f32.mrb[0].mxu0
      %v2576 = vadd.f32 %v2463, %v2575
      %v2577 = vpop.f32.mrb[0].mxu0
      %v2578 = vadd.f32 %v2465, %v2577
      %v2579 = vpop.f32.mrb[0].mxu0
      %v2580 = vadd.f32 %v2467, %v2579
      %v2581 = vpop.f32.mrb[0].mxu0
      %v2582 = vadd.f32 %v2469, %v2581
      %2583 = vmatprep.mubr.bf16.mxu0 %v2119
      %2584 = vmatmul.mubr.bf16.gmra.mrb[0].mxu0 %v671
      %v2585 = vpop.f32.mrb[0].mxu0
      %v2586 = vadd.f32 %v2473, %v2585
      %v2587 = vpop.f32.mrb[0].mxu0
      %v2588 = vadd.f32 %v2475, %v2587
      %v2589 = vpop.f32.mrb[0].mxu0
      %v2590 = vadd.f32 %v2477, %v2589
      %v2591 = vpop.f32.mrb[0].mxu0
      %v2592 = vadd.f32 %v2479, %v2591
      %2593 = vdwg.mxu0
      %2594 = vmatprep.subr.bf16.mxu0 %v1660
      %2595 = vmatpush1.bf16.msra.mxu0 %v1659
      %2596 = vmatprep.subr.bf16.mxu0 %v1667
      %2597 = vmatpush1.bf16.msra.mxu0 %v1666
      %2598 = vmatprep.subr.bf16.mxu0 %v1674
      %2599 = vmatpush1.bf16.msra.mxu0 %v1673
      %2600 = vmatprep.subr.bf16.mxu0 %v1681
      %2601 = vmatpush1.bf16.msra.mxu0 %v1680
      %2602 = vmatprep.subr.bf16.mxu0 %v1688
      %2603 = vmatpush1.bf16.msra.mxu0 %v1687
      %2604 = vmatprep.subr.bf16.mxu0 %v1695
      %2605 = vmatpush1.bf16.msra.mxu0 %v1694
      %2606 = vmatprep.subr.bf16.mxu0 %v1702
      %2607 = vmatpush1.bf16.msra.mxu0 %v1701
      %2608 = vmatprep.subr.bf16.mxu0 %v1709
      %2609 = vmatpush1.bf16.msra.mxu0 %v1708
      %2610 = vmatprep.subr.bf16.mxu0 %v1716
      %2611 = vmatpush1.bf16.msra.mxu0 %v1715
      %2612 = vmatprep.subr.bf16.mxu0 %v1723
      %2613 = vmatpush1.bf16.msra.mxu0 %v1722
      %2614 = vmatprep.subr.bf16.mxu0 %v1730
      %2615 = vmatpush1.bf16.msra.mxu0 %v1729
      %2616 = vmatprep.subr.bf16.mxu0 %v1737
      %2617 = vmatpush1.bf16.msra.mxu0 %v1736
      %2618 = vmatprep.subr.bf16.mxu0 %v1744
      %2619 = vmatpush1.bf16.msra.mxu0 %v1743
      %2620 = vmatprep.subr.bf16.mxu0 %v1751
      %2621 = vmatpush1.bf16.msra.mxu0 %v1750
      %2622 = vmatprep.subr.bf16.mxu0 %v1758
      %2623 = vmatpush1.bf16.msra.mxu0 %v1757
      %2624 = vmatprep.subr.bf16.mxu0 %v1765
      %2625 = vmatpush1.bf16.msra.mxu0 %v1764
      %2626 = vmatprep.mubr.bf16.mxu0 %v642
      %2627 = vmatmul.mubr.bf16.gmra.mrb[0].mxu0 %v641
      %v2628 = vpop.f32.mrb[0].mxu0
      %v2629 = vadd.f32 %v946, %v2628
      %v2630 = vpop.f32.mrb[0].mxu0
      %v2631 = vadd.f32 %v950, %v2630
      %v2632 = vpop.f32.mrb[0].mxu0
      %v2633 = vadd.f32 %v946, %v2632
      %v2634 = vpop.f32.mrb[0].mxu0
      %v2635 = vadd.f32 %v950, %v2634
      %2636 = vmatprep.mubr.bf16.mxu0 %v646
      %2637 = vmatmul.mubr.bf16.gmra.mrb[0].mxu0 %v645
      %v2638 = vpop.f32.mrb[0].mxu0
      %v2639 = vadd.f32 %v946, %v2638
      %v2640 = vpop.f32.mrb[0].mxu0
      %v2641 = vadd.f32 %v950, %v2640
      %v2642 = vpop.f32.mrb[0].mxu0
      %v2643 = vadd.f32 %v946, %v2642
      %v2644 = vpop.f32.mrb[0].mxu0
      %v2645 = vadd.f32 %v950, %v2644
      %2646 = vmatprep.mubr.bf16.mxu0 %v650
      %2647 = vmatmul.mubr.bf16.gmra.mrb[0].mxu0 %v649
      %v2648 = vpop.f32.mrb[0].mxu0
      %v2649 = vadd.f32 %v946, %v2648
      %v2650 = vpop.f32.mrb[0].mxu0
      %v2651 = vadd.f32 %v950, %v2650
      %v2652 = vpop.f32.mrb[0].mxu0
      %v2653 = vadd.f32 %v946, %v2652
      %v2654 = vpop.f32.mrb[0].mxu0
      %v2655 = vadd.f32 %v950, %v2654
      %2656 = vmatprep.mubr.bf16.mxu0 %v654
      %2657 = vmatmul.mubr.bf16.gmra.mrb[0].mxu0 %v653
      %v2658 = vpop.f32.mrb[0].mxu0
      %v2659 = vadd.f32 %v946, %v2658
      %v2660 = vpop.f32.mrb[0].mxu0
      %v2661 = vadd.f32 %v950, %v2660
      %v2662 = vpop.f32.mrb[0].mxu0
      %v2663 = vadd.f32 %v946, %v2662
      %v2664 = vpop.f32.mrb[0].mxu0
      %v2665 = vadd.f32 %v950, %v2664
      %2666 = vmatprep.mubr.bf16.mxu0 %v658
      %2667 = vmatmul.mubr.bf16.gmra.mrb[0].mxu0 %v657
      %v2668 = vpop.f32.mrb[0].mxu0
      %v2669 = vadd.f32 %v946, %v2668
      %v2670 = vpop.f32.mrb[0].mxu0
      %v2671 = vadd.f32 %v950, %v2670
      %v2672 = vpop.f32.mrb[0].mxu0
      %v2673 = vadd.f32 %v946, %v2672
      %v2674 = vpop.f32.mrb[0].mxu0
      %v2675 = vadd.f32 %v950, %v2674
      %2676 = vmatprep.mubr.bf16.mxu0 %v662
      %2677 = vmatmul.mubr.bf16.gmra.mrb[0].mxu0 %v661
      %v2678 = vpop.f32.mrb[0].mxu0
      %v2679 = vadd.f32 %v946, %v2678
      %v2680 = vpop.f32.mrb[0].mxu0
      %v2681 = vadd.f32 %v950, %v2680
      %v2682 = vpop.f32.mrb[0].mxu0
      %v2683 = vadd.f32 %v946, %v2682
      %v2684 = vpop.f32.mrb[0].mxu0
      %v2685 = vadd.f32 %v950, %v2684
      %2686 = vmatprep.mubr.bf16.mxu0 %v666
      %2687 = vmatmul.mubr.bf16.gmra.mrb[0].mxu0 %v665
      %v2688 = vpop.f32.mrb[0].mxu0
      %v2689 = vadd.f32 %v946, %v2688
      %v2690 = vpop.f32.mrb[0].mxu0
      %v2691 = vadd.f32 %v950, %v2690
      %v2692 = vpop.f32.mrb[0].mxu0
      %v2693 = vadd.f32 %v946, %v2692
      %v2694 = vpop.f32.mrb[0].mxu0
      %v2695 = vadd.f32 %v950, %v2694
      %2696 = vmatprep.mubr.bf16.mxu0 %v670
      %2697 = vmatmul.mubr.bf16.gmra.mrb[0].mxu0 %v669
      %v2698 = vpop.f32.mrb[0].mxu0
      %v2699 = vadd.f32 %v946, %v2698
      %v2700 = vpop.f32.mrb[0].mxu0
      %v2701 = vadd.f32 %v950, %v2700
      %v2702 = vpop.f32.mrb[0].mxu0
      %v2703 = vadd.f32 %v946, %v2702
      %v2704 = vpop.f32.mrb[0].mxu0
      %v2705 = vadd.f32 %v950, %v2704
      %2706 = vdwg.mxu0
      %2707 = vmatprep.subr.bf16.mxu0 %v1772
      %2708 = vmatpush1.bf16.msra.mxu0 %v1771
      %2709 = vmatprep.subr.bf16.mxu0 %v1779
      %2710 = vmatpush1.bf16.msra.mxu0 %v1778
      %2711 = vmatprep.subr.bf16.mxu0 %v1786
      %2712 = vmatpush1.bf16.msra.mxu0 %v1785
      %2713 = vmatprep.subr.bf16.mxu0 %v1793
      %2714 = vmatpush1.bf16.msra.mxu0 %v1792
      %2715 = vmatprep.subr.bf16.mxu0 %v1800
      %2716 = vmatpush1.bf16.msra.mxu0 %v1799
      %2717 = vmatprep.subr.bf16.mxu0 %v1807
      %2718 = vmatpush1.bf16.msra.mxu0 %v1806
      %2719 = vmatprep.subr.bf16.mxu0 %v1814
      %2720 = vmatpush1.bf16.msra.mxu0 %v1813
      %2721 = vmatprep.subr.bf16.mxu0 %v1821
      %2722 = vmatpush1.bf16.msra.mxu0 %v1820
      %2723 = vmatprep.subr.bf16.mxu0 %v1828
      %2724 = vmatpush1.bf16.msra.mxu0 %v1827
      %2725 = vmatprep.subr.bf16.mxu0 %v1835
      %2726 = vmatpush1.bf16.msra.mxu0 %v1834
      %2727 = vmatprep.subr.bf16.mxu0 %v1842
      %2728 = vmatpush1.bf16.msra.mxu0 %v1841
      %2729 = vmatprep.subr.bf16.mxu0 %v1849
      %2730 = vmatpush1.bf16.msra.mxu0 %v1848
      %2731 = vmatprep.subr.bf16.mxu0 %v1856
      %2732 = vmatpush1.bf16.msra.mxu0 %v1855
      %2733 = vmatprep.subr.bf16.mxu0 %v1863
      %2734 = vmatpush1.bf16.msra.mxu0 %v1862
      %2735 = vmatprep.subr.bf16.mxu0 %v1870
      %2736 = vmatpush1.bf16.msra.mxu0 %v1869
      %2737 = vmatprep.subr.bf16.mxu0 %v2137
      %2738 = vmatpush1.bf16.msra.mxu0 %v2134
      %2739 = vmatprep.mubr.bf16.mxu0 %v2098
      %2740 = vmatmul.mubr.bf16.gmra.mrb[0].mxu0 %v643
      %v2741 = vpop.f32.mrb[0].mxu0
      %v2742 = vadd.f32 %v2629, %v2741
      %v2743 = vpop.f32.mrb[0].mxu0
      %v2744 = vadd.f32 %v2631, %v2743
      %v2745 = vpop.f32.mrb[0].mxu0
      %v2746 = vadd.f32 %v2633, %v2745
      %v2747 = vpop.f32.mrb[0].mxu0
      %v2748 = vadd.f32 %v2635, %v2747
      %2749 = vmatprep.mubr.bf16.mxu0 %v2101
      %2750 = vmatmul.mubr.bf16.gmra.mrb[0].mxu0 %v647
      %v2751 = vpop.f32.mrb[0].mxu0
      %v2752 = vadd.f32 %v2639, %v2751
      %v2753 = vpop.f32.mrb[0].mxu0
      %v2754 = vadd.f32 %v2641, %v2753
      %v2755 = vpop.f32.mrb[0].mxu0
      %v2756 = vadd.f32 %v2643, %v2755
      %v2757 = vpop.f32.mrb[0].mxu0
      %v2758 = vadd.f32 %v2645, %v2757
      %2759 = vmatprep.mubr.bf16.mxu0 %v2104
      %2760 = vmatmul.mubr.bf16.gmra.mrb[0].mxu0 %v651
      %v2761 = vpop.f32.mrb[0].mxu0
      %v2762 = vadd.f32 %v2649, %v2761
      %v2763 = vpop.f32.mrb[0].mxu0
      %v2764 = vadd.f32 %v2651, %v2763
      %v2765 = vpop.f32.mrb[0].mxu0
      %v2766 = vadd.f32 %v2653, %v2765
      %v2767 = vpop.f32.mrb[0].mxu0
      %v2768 = vadd.f32 %v2655, %v2767
      %2769 = vmatprep.mubr.bf16.mxu0 %v2107
      %2770 = vmatmul.mubr.bf16.gmra.mrb[0].mxu0 %v655
      %v2771 = vpop.f32.mrb[0].mxu0
      %v2772 = vadd.f32 %v2659, %v2771
      %v2773 = vpop.f32.mrb[0].mxu0
      %v2774 = vadd.f32 %v2661, %v2773
      %v2775 = vpop.f32.mrb[0].mxu0
      %v2776 = vadd.f32 %v2663, %v2775
      %v2777 = vpop.f32.mrb[0].mxu0
      %v2778 = vadd.f32 %v2665, %v2777
      %2779 = vmatprep.mubr.bf16.mxu0 %v2110
      %2780 = vmatmul.mubr.bf16.gmra.mrb[0].mxu0 %v659
      %v2781 = vpop.f32.mrb[0].mxu0
      %v2782 = vadd.f32 %v2669, %v2781
      %v2783 = vpop.f32.mrb[0].mxu0
      %v2784 = vadd.f32 %v2671, %v2783
      %v2785 = vpop.f32.mrb[0].mxu0
      %v2786 = vadd.f32 %v2673, %v2785
      %v2787 = vpop.f32.mrb[0].mxu0
      %v2788 = vadd.f32 %v2675, %v2787
      %2789 = vmatprep.mubr.bf16.mxu0 %v2113
      %2790 = vmatmul.mubr.bf16.gmra.mrb[0].mxu0 %v663
      %v2791 = vpop.f32.mrb[0].mxu0
      %v2792 = vadd.f32 %v2679, %v2791
      %v2793 = vpop.f32.mrb[0].mxu0
      %v2794 = vadd.f32 %v2681, %v2793
      %v2795 = vpop.f32.mrb[0].mxu0
      %v2796 = vadd.f32 %v2683, %v2795
      %v2797 = vpop.f32.mrb[0].mxu0
      %v2798 = vadd.f32 %v2685, %v2797
      %2799 = vmatprep.mubr.bf16.mxu0 %v2116
      %2800 = vmatmul.mubr.bf16.gmra.mrb[0].mxu0 %v667
      %v2801 = vpop.f32.mrb[0].mxu0
      %v2802 = vadd.f32 %v2689, %v2801
      %v2803 = vpop.f32.mrb[0].mxu0
      %v2804 = vadd.f32 %v2691, %v2803
      %v2805 = vpop.f32.mrb[0].mxu0
      %v2806 = vadd.f32 %v2693, %v2805
      %v2807 = vpop.f32.mrb[0].mxu0
      %v2808 = vadd.f32 %v2695, %v2807
      %2809 = vmatprep.mubr.bf16.mxu0 %v2119
      %2810 = vmatmul.mubr.bf16.gmra.mrb[0].mxu0 %v671
      %v2811 = vpop.f32.mrb[0].mxu0
      %v2812 = vadd.f32 %v2699, %v2811
      %v2813 = vpop.f32.mrb[0].mxu0
      %v2814 = vadd.f32 %v2701, %v2813
      %v2815 = vpop.f32.mrb[0].mxu0
      %v2816 = vadd.f32 %v2703, %v2815
      %v2817 = vpop.f32.mrb[0].mxu0
      %v2818 = vadd.f32 %v2705, %v2817
      %2819 = vdwg.mxu0
      %2820 = vmatprep.subr.bf16.mxu0 0
      %2821 = vmatpush1.bf16.msra.mxu0 %v1661
      %2822 = vmatprep.subr.bf16.mxu0 0
      %2823 = vmatpush1.bf16.msra.mxu0 %v1668
      %2824 = vmatprep.subr.bf16.mxu0 0
      %2825 = vmatpush1.bf16.msra.mxu0 %v1675
      %2826 = vmatprep.subr.bf16.mxu0 0
      %2827 = vmatpush1.bf16.msra.mxu0 %v1682
      %2828 = vmatprep.subr.bf16.mxu0 0
      %2829 = vmatpush1.bf16.msra.mxu0 %v1689
      %2830 = vmatprep.subr.bf16.mxu0 0
      %2831 = vmatpush1.bf16.msra.mxu0 %v1696
      %2832 = vmatprep.subr.bf16.mxu0 0
      %2833 = vmatpush1.bf16.msra.mxu0 %v1703
      %2834 = vmatprep.subr.bf16.mxu0 0
      %2835 = vmatpush1.bf16.msra.mxu0 %v1710
      %2836 = vmatprep.subr.bf16.mxu0 0
      %2837 = vmatpush1.bf16.msra.mxu0 %v1717
      %2838 = vmatprep.subr.bf16.mxu0 0
      %2839 = vmatpush1.bf16.msra.mxu0 %v1724
      %2840 = vmatprep.subr.bf16.mxu0 0
      %2841 = vmatpush1.bf16.msra.mxu0 %v1731
      %2842 = vmatprep.subr.bf16.mxu0 0
      %2843 = vmatpush1.bf16.msra.mxu0 %v1738
      %2844 = vmatprep.subr.bf16.mxu0 0
      %2845 = vmatpush1.bf16.msra.mxu0 %v1745
      %2846 = vmatprep.subr.bf16.mxu0 0
      %2847 = vmatpush1.bf16.msra.mxu0 %v1752
      %2848 = vmatprep.subr.bf16.mxu0 0
      %2849 = vmatpush1.bf16.msra.mxu0 %v1759
      %2850 = vmatprep.subr.bf16.mxu0 0
      %2851 = vmatpush1.bf16.msra.mxu0 %v1766
      %2852 = vmatprep.mubr.bf16.mxu0 %v642
      %2853 = vmatmul.mubr.bf16.gmra.mrb[0].mxu0 %v641
      %v2854 = vpop.f32.mrb[0].mxu0
      %v2855 = vadd.f32 %v954, %v2854
      %v2856 = vpop.f32.mrb[0].mxu0
      %v2857 = vpop.f32.mrb[0].mxu0
      %v2858 = vadd.f32 %v954, %v2857
      %v2859 = vpop.f32.mrb[0].mxu0
      %2860 = vmatprep.mubr.bf16.mxu0 %v646
      %2861 = vmatmul.mubr.bf16.gmra.mrb[0].mxu0 %v645
      %v2862 = vpop.f32.mrb[0].mxu0
      %v2863 = vadd.f32 %v954, %v2862
      %v2864 = vpop.f32.mrb[0].mxu0
      %v2865 = vpop.f32.mrb[0].mxu0
      %v2866 = vadd.f32 %v954, %v2865
      %v2867 = vpop.f32.mrb[0].mxu0
      %2868 = vmatprep.mubr.bf16.mxu0 %v650
      %2869 = vmatmul.mubr.bf16.gmra.mrb[0].mxu0 %v649
      %v2870 = vpop.f32.mrb[0].mxu0
      %v2871 = vadd.f32 %v954, %v2870
      %v2872 = vpop.f32.mrb[0].mxu0
      %v2873 = vpop.f32.mrb[0].mxu0
      %v2874 = vadd.f32 %v954, %v2873
      %v2875 = vpop.f32.mrb[0].mxu0
      %2876 = vmatprep.mubr.bf16.mxu0 %v654
      %2877 = vmatmul.mubr.bf16.gmra.mrb[0].mxu0 %v653
      %v2878 = vpop.f32.mrb[0].mxu0
      %v2879 = vadd.f32 %v954, %v2878
      %v2880 = vpop.f32.mrb[0].mxu0
      %v2881 = vpop.f32.mrb[0].mxu0
      %v2882 = vadd.f32 %v954, %v2881
      %v2883 = vpop.f32.mrb[0].mxu0
      %2884 = vmatprep.mubr.bf16.mxu0 %v658
      %2885 = vmatmul.mubr.bf16.gmra.mrb[0].mxu0 %v657
      %v2886 = vpop.f32.mrb[0].mxu0
      %v2887 = vadd.f32 %v954, %v2886
      %v2888 = vpop.f32.mrb[0].mxu0
      %v2889 = vpop.f32.mrb[0].mxu0
      %v2890 = vadd.f32 %v954, %v2889
      %v2891 = vpop.f32.mrb[0].mxu0
      %2892 = vmatprep.mubr.bf16.mxu0 %v662
      %2893 = vmatmul.mubr.bf16.gmra.mrb[0].mxu0 %v661
      %v2894 = vpop.f32.mrb[0].mxu0
      %v2895 = vadd.f32 %v954, %v2894
      %v2896 = vpop.f32.mrb[0].mxu0
      %v2897 = vpop.f32.mrb[0].mxu0
      %v2898 = vadd.f32 %v954, %v2897
      %v2899 = vpop.f32.mrb[0].mxu0
      %2900 = vmatprep.mubr.bf16.mxu0 %v666
      %2901 = vmatmul.mubr.bf16.gmra.mrb[0].mxu0 %v665
      %v2902 = vpop.f32.mrb[0].mxu0
      %v2903 = vadd.f32 %v954, %v2902
      %v2904 = vpop.f32.mrb[0].mxu0
      %v2905 = vpop.f32.mrb[0].mxu0
      %v2906 = vadd.f32 %v954, %v2905
      %v2907 = vpop.f32.mrb[0].mxu0
      %2908 = vmatprep.mubr.bf16.mxu0 %v670
      %2909 = vmatmul.mubr.bf16.gmra.mrb[0].mxu0 %v669
      %v2910 = vpop.f32.mrb[0].mxu0
      %v2911 = vadd.f32 %v954, %v2910
      %v2912 = vpop.f32.mrb[0].mxu0
      %v2913 = vpop.f32.mrb[0].mxu0
      %v2914 = vadd.f32 %v954, %v2913
      %v2915 = vpop.f32.mrb[0].mxu0
      %2916 = vdwg.mxu0
      %2917 = vmatprep.subr.bf16.mxu0 0
      %2918 = vmatpush1.bf16.msra.mxu0 %v1773
      %2919 = vmatprep.subr.bf16.mxu0 0
      %2920 = vmatpush1.bf16.msra.mxu0 %v1780
      %2921 = vmatprep.subr.bf16.mxu0 0
      %2922 = vmatpush1.bf16.msra.mxu0 %v1787
      %2923 = vmatprep.subr.bf16.mxu0 0
      %2924 = vmatpush1.bf16.msra.mxu0 %v1794
      %2925 = vmatprep.subr.bf16.mxu0 0
      %2926 = vmatpush1.bf16.msra.mxu0 %v1801
      %2927 = vmatprep.subr.bf16.mxu0 0
      %2928 = vmatpush1.bf16.msra.mxu0 %v1808
      %2929 = vmatprep.subr.bf16.mxu0 0
      %2930 = vmatpush1.bf16.msra.mxu0 %v1815
      %2931 = vmatprep.subr.bf16.mxu0 0
      %2932 = vmatpush1.bf16.msra.mxu0 %v1822
      %2933 = vmatprep.subr.bf16.mxu0 0
      %2934 = vmatpush1.bf16.msra.mxu0 %v1829
      %2935 = vmatprep.subr.bf16.mxu0 0
      %2936 = vmatpush1.bf16.msra.mxu0 %v1836
      %2937 = vmatprep.subr.bf16.mxu0 0
      %2938 = vmatpush1.bf16.msra.mxu0 %v1843
      %2939 = vmatprep.subr.bf16.mxu0 0
      %2940 = vmatpush1.bf16.msra.mxu0 %v1850
      %2941 = vmatprep.subr.bf16.mxu0 0
      %2942 = vmatpush1.bf16.msra.mxu0 %v1857
      %2943 = vmatprep.subr.bf16.mxu0 0
      %2944 = vmatpush1.bf16.msra.mxu0 %v1864
      %2945 = vmatprep.subr.bf16.mxu0 0
      %2946 = vmatpush1.bf16.msra.mxu0 %v1871
      %2947 = vmatprep.subr.bf16.mxu0 0
      %2948 = vmatpush1.bf16.msra.mxu0 %v2140
      %2949 = vmatprep.mubr.bf16.mxu0 %v2098
      %2950 = vmatmul.mubr.bf16.gmra.mrb[0].mxu0 %v643
      %v2951 = vpop.f32.mrb[0].mxu0
      %v2952 = vadd.f32 %v2855, %v2951
      %v2953 = vpop.f32.mrb[0].mxu0
      %v2954 = vpop.f32.mrb[0].mxu0
      %v2955 = vadd.f32 %v2858, %v2954
      %v2956 = vpop.f32.mrb[0].mxu0
      %2957 = vmatprep.mubr.bf16.mxu0 %v2101
      %2958 = vmatmul.mubr.bf16.gmra.mrb[0].mxu0 %v647
      %v2959 = vpop.f32.mrb[0].mxu0
      %v2960 = vadd.f32 %v2863, %v2959
      %v2961 = vpop.f32.mrb[0].mxu0
      %v2962 = vpop.f32.mrb[0].mxu0
      %v2963 = vadd.f32 %v2866, %v2962
      %v2964 = vpop.f32.mrb[0].mxu0
      %2965 = vmatprep.mubr.bf16.mxu0 %v2104
      %2966 = vmatmul.mubr.bf16.gmra.mrb[0].mxu0 %v651
      %v2967 = vpop.f32.mrb[0].mxu0
      %v2968 = vadd.f32 %v2871, %v2967
      %v2969 = vpop.f32.mrb[0].mxu0
      %v2970 = vpop.f32.mrb[0].mxu0
      %v2971 = vadd.f32 %v2874, %v2970
      %v2972 = vpop.f32.mrb[0].mxu0
      %2973 = vmatprep.mubr.bf16.mxu0 %v2107
      %2974 = vmatmul.mubr.bf16.gmra.mrb[0].mxu0 %v655
      %v2975 = vpop.f32.mrb[0].mxu0
      %v2976 = vadd.f32 %v2879, %v2975
      %v2977 = vpop.f32.mrb[0].mxu0
      %v2978 = vpop.f32.mrb[0].mxu0
      %v2979 = vadd.f32 %v2882, %v2978
      %v2980 = vpop.f32.mrb[0].mxu0
      %2981 = vmatprep.mubr.bf16.mxu0 %v2110
      %2982 = vmatmul.mubr.bf16.gmra.mrb[0].mxu0 %v659
      %v2983 = vpop.f32.mrb[0].mxu0
      %v2984 = vadd.f32 %v2887, %v2983
      %v2985 = vpop.f32.mrb[0].mxu0
      %v2986 = vpop.f32.mrb[0].mxu0
      %v2987 = vadd.f32 %v2890, %v2986
      %v2988 = vpop.f32.mrb[0].mxu0
      %2989 = vmatprep.mubr.bf16.mxu0 %v2113
      %2990 = vmatmul.mubr.bf16.gmra.mrb[0].mxu0 %v663
      %v2991 = vpop.f32.mrb[0].mxu0
      %v2992 = vadd.f32 %v2895, %v2991
      %v2993 = vpop.f32.mrb[0].mxu0
      %v2994 = vpop.f32.mrb[0].mxu0
      %v2995 = vadd.f32 %v2898, %v2994
      %v2996 = vpop.f32.mrb[0].mxu0
      %2997 = vmatprep.mubr.bf16.mxu0 %v2116
      %2998 = vmatmul.mubr.bf16.gmra.mrb[0].mxu0 %v667
      %v2999 = vpop.f32.mrb[0].mxu0
      %v3000 = vadd.f32 %v2903, %v2999
      %v3001 = vpop.f32.mrb[0].mxu0
      %v3002 = vpop.f32.mrb[0].mxu0
      %v3003 = vadd.f32 %v2906, %v3002
      %v3004 = vpop.f32.mrb[0].mxu0
      %3005 = vmatprep.mubr.bf16.mxu0 %v2119
      %3006 = vmatmul.mubr.bf16.gmra.mrb[0].mxu0 %v671
      %v3007 = vpop.f32.mrb[0].mxu0
      %v3008 = vadd.f32 %v2911, %v3007
      %v3009 = vpop.f32.mrb[0].mxu0
      %v3010 = vpop.f32.mrb[0].mxu0
      %v3011 = vadd.f32 %v2914, %v3010
      %v3012 = vpop.f32.mrb[0].mxu0
      %3013 = vdwg.mxu0
      %v3014 = vxor.u32 %v2290, 2147483648
      %v3015 = vxor.u32 %v2292, 2147483648
      %v3016 = vxor.u32 %v2516, 2147483648
      %v3017 = vxor.u32 %v2518, 2147483648
      %v3018 = vxor.u32 %v2742, 2147483648
      %v3019 = vxor.u32 %v2744, 2147483648
      %v3020 = vxor.u32 %v2952, 2147483648
      %v3021 = vxor.u32 %v2294, 2147483648
      %v3022 = vxor.u32 %v2296, 2147483648
      %v3023 = vxor.u32 %v2520, 2147483648
      %v3024 = vxor.u32 %v2522, 2147483648
      %v3025 = vxor.u32 %v2746, 2147483648
      %v3026 = vxor.u32 %v2748, 2147483648
      %v3027 = vxor.u32 %v2955, 2147483648
      %v3028 = vxor.u32 %v2300, 2147483648
      %v3029 = vxor.u32 %v2302, 2147483648
      %v3030 = vxor.u32 %v2526, 2147483648
      %v3031 = vxor.u32 %v2528, 2147483648
      %v3032 = vxor.u32 %v2752, 2147483648
      %v3033 = vxor.u32 %v2754, 2147483648
      %v3034 = vxor.u32 %v2960, 2147483648
      %v3035 = vxor.u32 %v2304, 2147483648
      %v3036 = vxor.u32 %v2306, 2147483648
      %v3037 = vxor.u32 %v2530, 2147483648
      %v3038 = vxor.u32 %v2532, 2147483648
      %v3039 = vxor.u32 %v2756, 2147483648
      %v3040 = vxor.u32 %v2758, 2147483648
      %v3041 = vxor.u32 %v2963, 2147483648
      %v3042 = vxor.u32 %v2310, 2147483648
      %v3043 = vxor.u32 %v2312, 2147483648
      %v3044 = vxor.u32 %v2536, 2147483648
      %v3045 = vxor.u32 %v2538, 2147483648
      %v3046 = vxor.u32 %v2762, 2147483648
      %v3047 = vxor.u32 %v2764, 2147483648
      %v3048 = vxor.u32 %v2968, 2147483648
      %v3049 = vxor.u32 %v2314, 2147483648
      %v3050 = vxor.u32 %v2316, 2147483648
      %v3051 = vxor.u32 %v2540, 2147483648
      %v3052 = vxor.u32 %v2542, 2147483648
      %v3053 = vxor.u32 %v2766, 2147483648
      %v3054 = vxor.u32 %v2768, 2147483648
      %v3055 = vxor.u32 %v2971, 2147483648
      %v3056 = vxor.u32 %v2320, 2147483648
      %v3057 = vxor.u32 %v2322, 2147483648
      %v3058 = vxor.u32 %v2546, 2147483648
      %v3059 = vxor.u32 %v2548, 2147483648
      %v3060 = vxor.u32 %v2772, 2147483648
      %v3061 = vxor.u32 %v2774, 2147483648
      %v3062 = vxor.u32 %v2976, 2147483648
      %v3063 = vxor.u32 %v2324, 2147483648
      %v3064 = vxor.u32 %v2326, 2147483648
      %v3065 = vxor.u32 %v2550, 2147483648
      %v3066 = vxor.u32 %v2552, 2147483648
      %v3067 = vxor.u32 %v2776, 2147483648
      %v3068 = vxor.u32 %v2778, 2147483648
      %v3069 = vxor.u32 %v2979, 2147483648
      %v3070 = vxor.u32 %v2330, 2147483648
      %v3071 = vxor.u32 %v2332, 2147483648
      %v3072 = vxor.u32 %v2556, 2147483648
      %v3073 = vxor.u32 %v2558, 2147483648
      %v3074 = vxor.u32 %v2782, 2147483648
      %v3075 = vxor.u32 %v2784, 2147483648
      %v3076 = vxor.u32 %v2984, 2147483648
      %v3077 = vxor.u32 %v2334, 2147483648
      %v3078 = vxor.u32 %v2336, 2147483648
      %v3079 = vxor.u32 %v2560, 2147483648
      %v3080 = vxor.u32 %v2562, 2147483648
      %v3081 = vxor.u32 %v2786, 2147483648
      %v3082 = vxor.u32 %v2788, 2147483648
      %v3083 = vxor.u32 %v2987, 2147483648
      %v3084 = vxor.u32 %v2340, 2147483648
      %v3085 = vxor.u32 %v2342, 2147483648
      %v3086 = vxor.u32 %v2566, 2147483648
      %v3087 = vxor.u32 %v2568, 2147483648
      %v3088 = vxor.u32 %v2792, 2147483648
      %v3089 = vxor.u32 %v2794, 2147483648
      %v3090 = vxor.u32 %v2992, 2147483648
      %v3091 = vxor.u32 %v2344, 2147483648
      %v3092 = vxor.u32 %v2346, 2147483648
      %v3093 = vxor.u32 %v2570, 2147483648
      %v3094 = vxor.u32 %v2572, 2147483648
      %v3095 = vxor.u32 %v2796, 2147483648
      %v3096 = vxor.u32 %v2798, 2147483648
      %v3097 = vxor.u32 %v2995, 2147483648
      %v3098 = vxor.u32 %v2350, 2147483648
      %v3099 = vxor.u32 %v2352, 2147483648
      %v3100 = vxor.u32 %v2576, 2147483648
      %v3101 = vxor.u32 %v2578, 2147483648
      %v3102 = vxor.u32 %v2802, 2147483648
      %v3103 = vxor.u32 %v2804, 2147483648
      %v3104 = vxor.u32 %v3000, 2147483648
      %v3105 = vxor.u32 %v2354, 2147483648
      %v3106 = vxor.u32 %v2356, 2147483648
      %v3107 = vxor.u32 %v2580, 2147483648
      %v3108 = vxor.u32 %v2582, 2147483648
      %v3109 = vxor.u32 %v2806, 2147483648
      %v3110 = vxor.u32 %v2808, 2147483648
      %v3111 = vxor.u32 %v3003, 2147483648
      %v3112 = vxor.u32 %v2360, 2147483648
      %v3113 = vxor.u32 %v2362, 2147483648
      %v3114 = vxor.u32 %v2586, 2147483648
      %v3115 = vxor.u32 %v2588, 2147483648
      %v3116 = vxor.u32 %v2812, 2147483648
      %v3117 = vxor.u32 %v2814, 2147483648
      %v3118 = vxor.u32 %v3008, 2147483648
      %v3119 = vxor.u32 %v2364, 2147483648
      %v3120 = vxor.u32 %v2366, 2147483648
      %v3121 = vxor.u32 %v2590, 2147483648
      %v3122 = vxor.u32 %v2592, 2147483648
      %v3123 = vxor.u32 %v2816, 2147483648
      %v3124 = vxor.u32 %v2818, 2147483648
      %v3125 = vxor.u32 %v3011, 2147483648
      %v3126 = vmul.f32 %v3014, 1.442695
      %v3127 = vpow.pop %v3126
      %v3128 = vmul.f32 %v3015, 1.442695
      %v3129 = vpow.pop %v3128
      %v3130 = vmul.f32 %v3016, 1.442695
      %v3131 = vpow.pop %v3130
      %v3132 = vmul.f32 %v3017, 1.442695
      %v3133 = vpow.pop %v3132
      %v3134 = vmul.f32 %v3018, 1.442695
      %v3135 = vpow.pop %v3134
      %v3136 = vmul.f32 %v3019, 1.442695
      %v3137 = vpow.pop %v3136
      %v3138 = vmul.f32 %v3020, 1.442695
      %v3139 = vpow.pop %v3138
      %v3140 = vmul.f32 %v3021, 1.442695
      %v3141 = vpow.pop %v3140
      %v3142 = vmul.f32 %v3022, 1.442695
      %v3143 = vpow.pop %v3142
      %v3144 = vmul.f32 %v3023, 1.442695
      %v3145 = vpow.pop %v3144
      %v3146 = vmul.f32 %v3024, 1.442695
      %v3147 = vpow.pop %v3146
      %v3148 = vmul.f32 %v3025, 1.442695
      %v3149 = vpow.pop %v3148
      %v3150 = vmul.f32 %v3026, 1.442695
      %v3151 = vpow.pop %v3150
      %v3152 = vmul.f32 %v3027, 1.442695
      %v3153 = vpow.pop %v3152
      %v3154 = vmul.f32 %v3028, 1.442695
      %v3155 = vpow.pop %v3154
      %v3156 = vmul.f32 %v3029, 1.442695
      %v3157 = vpow.pop %v3156
      %v3158 = vmul.f32 %v3030, 1.442695
      %v3159 = vpow.pop %v3158
      %v3160 = vmul.f32 %v3031, 1.442695
      %v3161 = vpow.pop %v3160
      %v3162 = vmul.f32 %v3032, 1.442695
      %v3163 = vpow.pop %v3162
      %v3164 = vmul.f32 %v3033, 1.442695
      %v3165 = vpow.pop %v3164
      %v3166 = vmul.f32 %v3034, 1.442695
      %v3167 = vpow.pop %v3166
      %v3168 = vmul.f32 %v3035, 1.442695
      %v3169 = vpow.pop %v3168
      %v3170 = vmul.f32 %v3036, 1.442695
      %v3171 = vpow.pop %v3170
      %v3172 = vmul.f32 %v3037, 1.442695
      %v3173 = vpow.pop %v3172
      %v3174 = vmul.f32 %v3038, 1.442695
      %v3175 = vpow.pop %v3174
      %v3176 = vmul.f32 %v3039, 1.442695
      %v3177 = vpow.pop %v3176
      %v3178 = vmul.f32 %v3040, 1.442695
      %v3179 = vpow.pop %v3178
      %v3180 = vmul.f32 %v3041, 1.442695
      %v3181 = vpow.pop %v3180
      %v3182 = vmul.f32 %v3042, 1.442695
      %v3183 = vpow.pop %v3182
      %v3184 = vmul.f32 %v3043, 1.442695
      %v3185 = vpow.pop %v3184
      %v3186 = vmul.f32 %v3044, 1.442695
      %v3187 = vpow.pop %v3186
      %v3188 = vmul.f32 %v3045, 1.442695
      %v3189 = vpow.pop %v3188
      %v3190 = vmul.f32 %v3046, 1.442695
      %v3191 = vpow.pop %v3190
      %v3192 = vmul.f32 %v3047, 1.442695
      %v3193 = vpow.pop %v3192
      %v3194 = vmul.f32 %v3048, 1.442695
      %v3195 = vpow.pop %v3194
      %v3196 = vmul.f32 %v3049, 1.442695
      %v3197 = vpow.pop %v3196
      %v3198 = vmul.f32 %v3050, 1.442695
      %v3199 = vpow.pop %v3198
      %v3200 = vmul.f32 %v3051, 1.442695
      %v3201 = vpow.pop %v3200
      %v3202 = vmul.f32 %v3052, 1.442695
      %v3203 = vpow.pop %v3202
      %v3204 = vmul.f32 %v3053, 1.442695
      %v3205 = vpow.pop %v3204
      %v3206 = vmul.f32 %v3054, 1.442695
      %v3207 = vpow.pop %v3206
      %v3208 = vmul.f32 %v3055, 1.442695
      %v3209 = vpow.pop %v3208
      %v3210 = vmul.f32 %v3056, 1.442695
      %v3211 = vpow.pop %v3210
      %v3212 = vmul.f32 %v3057, 1.442695
      %v3213 = vpow.pop %v3212
      %v3214 = vmul.f32 %v3058, 1.442695
      %v3215 = vpow.pop %v3214
      %v3216 = vmul.f32 %v3059, 1.442695
      %v3217 = vpow.pop %v3216
      %v3218 = vmul.f32 %v3060, 1.442695
      %v3219 = vpow.pop %v3218
      %v3220 = vmul.f32 %v3061, 1.442695
      %v3221 = vpow.pop %v3220
      %v3222 = vmul.f32 %v3062, 1.442695
      %v3223 = vpow.pop %v3222
      %v3224 = vmul.f32 %v3063, 1.442695
      %v3225 = vpow.pop %v3224
      %v3226 = vmul.f32 %v3064, 1.442695
      %v3227 = vpow.pop %v3226
      %v3228 = vmul.f32 %v3065, 1.442695
      %v3229 = vpow.pop %v3228
      %v3230 = vmul.f32 %v3066, 1.442695
      %v3231 = vpow.pop %v3230
      %v3232 = vmul.f32 %v3067, 1.442695
      %v3233 = vpow.pop %v3232
      %v3234 = vmul.f32 %v3068, 1.442695
      %v3235 = vpow.pop %v3234
      %v3236 = vmul.f32 %v3069, 1.442695
      %v3237 = vpow.pop %v3236
      %v3238 = vmul.f32 %v3070, 1.442695
      %v3239 = vpow.pop %v3238
      %v3240 = vmul.f32 %v3071, 1.442695
      %v3241 = vpow.pop %v3240
      %v3242 = vmul.f32 %v3072, 1.442695
      %v3243 = vpow.pop %v3242
      %v3244 = vmul.f32 %v3073, 1.442695
      %v3245 = vpow.pop %v3244
      %v3246 = vmul.f32 %v3074, 1.442695
      %v3247 = vpow.pop %v3246
      %v3248 = vmul.f32 %v3075, 1.442695
      %v3249 = vpow.pop %v3248
      %v3250 = vmul.f32 %v3076, 1.442695
      %v3251 = vpow.pop %v3250
      %v3252 = vmul.f32 %v3077, 1.442695
      %v3253 = vpow.pop %v3252
      %v3254 = vmul.f32 %v3078, 1.442695
      %v3255 = vpow.pop %v3254
      %v3256 = vmul.f32 %v3079, 1.442695
      %v3257 = vpow.pop %v3256
      %v3258 = vmul.f32 %v3080, 1.442695
      %v3259 = vpow.pop %v3258
      %v3260 = vmul.f32 %v3081, 1.442695
      %v3261 = vpow.pop %v3260
      %v3262 = vmul.f32 %v3082, 1.442695
      %v3263 = vpow.pop %v3262
      %v3264 = vmul.f32 %v3083, 1.442695
      %v3265 = vpow.pop %v3264
      %v3266 = vmul.f32 %v3084, 1.442695
      %v3267 = vpow.pop %v3266
      %v3268 = vmul.f32 %v3085, 1.442695
      %v3269 = vpow.pop %v3268
      %v3270 = vmul.f32 %v3086, 1.442695
      %v3271 = vpow.pop %v3270
      %v3272 = vmul.f32 %v3087, 1.442695
      %v3273 = vpow.pop %v3272
      %v3274 = vmul.f32 %v3088, 1.442695
      %v3275 = vpow.pop %v3274
      %v3276 = vmul.f32 %v3089, 1.442695
      %v3277 = vpow.pop %v3276
      %v3278 = vmul.f32 %v3090, 1.442695
      %v3279 = vpow.pop %v3278
      %v3280 = vmul.f32 %v3091, 1.442695
      %v3281 = vpow.pop %v3280
      %v3282 = vmul.f32 %v3092, 1.442695
      %v3283 = vpow.pop %v3282
      %v3284 = vmul.f32 %v3093, 1.442695
      %v3285 = vpow.pop %v3284
      %v3286 = vmul.f32 %v3094, 1.442695
      %v3287 = vpow.pop %v3286
      %v3288 = vmul.f32 %v3095, 1.442695
      %v3289 = vpow.pop %v3288
      %v3290 = vmul.f32 %v3096, 1.442695
      %v3291 = vpow.pop %v3290
      %v3292 = vmul.f32 %v3097, 1.442695
      %v3293 = vpow.pop %v3292
      %v3294 = vmul.f32 %v3098, 1.442695
      %v3295 = vpow.pop %v3294
      %v3296 = vmul.f32 %v3099, 1.442695
      %v3297 = vpow.pop %v3296
      %v3298 = vmul.f32 %v3100, 1.442695
      %v3299 = vpow.pop %v3298
      %v3300 = vmul.f32 %v3101, 1.442695
      %v3301 = vpow.pop %v3300
      %v3302 = vmul.f32 %v3102, 1.442695
      %v3303 = vpow.pop %v3302
      %v3304 = vmul.f32 %v3103, 1.442695
      %v3305 = vpow.pop %v3304
      %v3306 = vmul.f32 %v3104, 1.442695
      %v3307 = vpow.pop %v3306
      %v3308 = vmul.f32 %v3105, 1.442695
      %v3309 = vpow.pop %v3308
      %v3310 = vmul.f32 %v3106, 1.442695
      %v3311 = vpow.pop %v3310
      %v3312 = vmul.f32 %v3107, 1.442695
      %v3313 = vpow.pop %v3312
      %v3314 = vmul.f32 %v3108, 1.442695
      %v3315 = vpow.pop %v3314
      %v3316 = vmul.f32 %v3109, 1.442695
      %v3317 = vpow.pop %v3316
      %v3318 = vmul.f32 %v3110, 1.442695
      %v3319 = vpow.pop %v3318
      %v3320 = vmul.f32 %v3111, 1.442695
      %v3321 = vpow.pop %v3320
      %v3322 = vmul.f32 %v3112, 1.442695
      %v3323 = vpow.pop %v3322
      %v3324 = vmul.f32 %v3113, 1.442695
      %v3325 = vpow.pop %v3324
      %v3326 = vmul.f32 %v3114, 1.442695
      %v3327 = vpow.pop %v3326
      %v3328 = vmul.f32 %v3115, 1.442695
      %v3329 = vpow.pop %v3328
      %v3330 = vmul.f32 %v3116, 1.442695
      %v3331 = vpow.pop %v3330
      %v3332 = vmul.f32 %v3117, 1.442695
      %v3333 = vpow.pop %v3332
      %v3334 = vmul.f32 %v3118, 1.442695
      %v3335 = vpow.pop %v3334
      %v3336 = vmul.f32 %v3119, 1.442695
      %v3337 = vpow.pop %v3336
      %v3338 = vmul.f32 %v3120, 1.442695
      %v3339 = vpow.pop %v3338
      %v3340 = vmul.f32 %v3121, 1.442695
      %v3341 = vpow.pop %v3340
      %v3342 = vmul.f32 %v3122, 1.442695
      %v3343 = vpow.pop %v3342
      %v3344 = vmul.f32 %v3123, 1.442695
      %v3345 = vpow.pop %v3344
      %v3346 = vmul.f32 %v3124, 1.442695
      %v3347 = vpow.pop %v3346
      %v3348 = vmul.f32 %v3125, 1.442695
      %v3349 = vpow.pop %v3348
      %v3350 = vadd.f32 %v3127, 1.0
      %v3351 = vadd.f32 %v3129, 1.0
      %v3352 = vadd.f32 %v3131, 1.0
      %v3353 = vadd.f32 %v3133, 1.0
      %v3354 = vadd.f32 %v3135, 1.0
      %v3355 = vadd.f32 %v3137, 1.0
      %v3356 = vadd.f32 %v3139, 1.0
      %v3357 = vadd.f32 %v3141, 1.0
      %v3358 = vadd.f32 %v3143, 1.0
      %v3359 = vadd.f32 %v3145, 1.0
      %v3360 = vadd.f32 %v3147, 1.0
      %v3361 = vadd.f32 %v3149, 1.0
      %v3362 = vadd.f32 %v3151, 1.0
      %v3363 = vadd.f32 %v3153, 1.0
      %v3364 = vadd.f32 %v3155, 1.0
      %v3365 = vadd.f32 %v3157, 1.0
      %v3366 = vadd.f32 %v3159, 1.0
      %v3367 = vadd.f32 %v3161, 1.0
      %v3368 = vadd.f32 %v3163, 1.0
      %v3369 = vadd.f32 %v3165, 1.0
      %v3370 = vadd.f32 %v3167, 1.0
      %v3371 = vadd.f32 %v3169, 1.0
      %v3372 = vadd.f32 %v3171, 1.0
      %v3373 = vadd.f32 %v3173, 1.0
      %v3374 = vadd.f32 %v3175, 1.0
      %v3375 = vadd.f32 %v3177, 1.0
      %v3376 = vadd.f32 %v3179, 1.0
      %v3377 = vadd.f32 %v3181, 1.0
      %v3378 = vadd.f32 %v3183, 1.0
      %v3379 = vadd.f32 %v3185, 1.0
      %v3380 = vadd.f32 %v3187, 1.0
      %v3381 = vadd.f32 %v3189, 1.0
      %v3382 = vadd.f32 %v3191, 1.0
      %v3383 = vadd.f32 %v3193, 1.0
      %v3384 = vadd.f32 %v3195, 1.0
      %v3385 = vadd.f32 %v3197, 1.0
      %v3386 = vadd.f32 %v3199, 1.0
      %v3387 = vadd.f32 %v3201, 1.0
      %v3388 = vadd.f32 %v3203, 1.0
      %v3389 = vadd.f32 %v3205, 1.0
      %v3390 = vadd.f32 %v3207, 1.0
      %v3391 = vadd.f32 %v3209, 1.0
      %v3392 = vadd.f32 %v3211, 1.0
      %v3393 = vadd.f32 %v3213, 1.0
      %v3394 = vadd.f32 %v3215, 1.0
      %v3395 = vadd.f32 %v3217, 1.0
      %v3396 = vadd.f32 %v3219, 1.0
      %v3397 = vadd.f32 %v3221, 1.0
      %v3398 = vadd.f32 %v3223, 1.0
      %v3399 = vadd.f32 %v3225, 1.0
      %v3400 = vadd.f32 %v3227, 1.0
      %v3401 = vadd.f32 %v3229, 1.0
      %v3402 = vadd.f32 %v3231, 1.0
      %v3403 = vadd.f32 %v3233, 1.0
      %v3404 = vadd.f32 %v3235, 1.0
      %v3405 = vadd.f32 %v3237, 1.0
      %v3406 = vadd.f32 %v3239, 1.0
      %v3407 = vadd.f32 %v3241, 1.0
      %v3408 = vadd.f32 %v3243, 1.0
      %v3409 = vadd.f32 %v3245, 1.0
      %v3410 = vadd.f32 %v3247, 1.0
      %v3411 = vadd.f32 %v3249, 1.0
      %v3412 = vadd.f32 %v3251, 1.0
      %v3413 = vadd.f32 %v3253, 1.0
      %v3414 = vadd.f32 %v3255, 1.0
      %v3415 = vadd.f32 %v3257, 1.0
      %v3416 = vadd.f32 %v3259, 1.0
      %v3417 = vadd.f32 %v3261, 1.0
      %v3418 = vadd.f32 %v3263, 1.0
      %v3419 = vadd.f32 %v3265, 1.0
      %v3420 = vadd.f32 %v3267, 1.0
      %v3421 = vadd.f32 %v3269, 1.0
      %v3422 = vadd.f32 %v3271, 1.0
      %v3423 = vadd.f32 %v3273, 1.0
      %v3424 = vadd.f32 %v3275, 1.0
      %v3425 = vadd.f32 %v3277, 1.0
      %v3426 = vadd.f32 %v3279, 1.0
      %v3427 = vadd.f32 %v3281, 1.0
      %v3428 = vadd.f32 %v3283, 1.0
      %v3429 = vadd.f32 %v3285, 1.0
      %v3430 = vadd.f32 %v3287, 1.0
      %v3431 = vadd.f32 %v3289, 1.0
      %v3432 = vadd.f32 %v3291, 1.0
      %v3433 = vadd.f32 %v3293, 1.0
      %v3434 = vadd.f32 %v3295, 1.0
      %v3435 = vadd.f32 %v3297, 1.0
      %v3436 = vadd.f32 %v3299, 1.0
      %v3437 = vadd.f32 %v3301, 1.0
      %v3438 = vadd.f32 %v3303, 1.0
      %v3439 = vadd.f32 %v3305, 1.0
      %v3440 = vadd.f32 %v3307, 1.0
      %v3441 = vadd.f32 %v3309, 1.0
      %v3442 = vadd.f32 %v3311, 1.0
      %v3443 = vadd.f32 %v3313, 1.0
      %v3444 = vadd.f32 %v3315, 1.0
      %v3445 = vadd.f32 %v3317, 1.0
      %v3446 = vadd.f32 %v3319, 1.0
      %v3447 = vadd.f32 %v3321, 1.0
      %v3448 = vadd.f32 %v3323, 1.0
      %v3449 = vadd.f32 %v3325, 1.0
      %v3450 = vadd.f32 %v3327, 1.0
      %v3451 = vadd.f32 %v3329, 1.0
      %v3452 = vadd.f32 %v3331, 1.0
      %v3453 = vadd.f32 %v3333, 1.0
      %v3454 = vadd.f32 %v3335, 1.0
      %v3455 = vadd.f32 %v3337, 1.0
      %v3456 = vadd.f32 %v3339, 1.0
      %v3457 = vadd.f32 %v3341, 1.0
      %v3458 = vadd.f32 %v3343, 1.0
      %v3459 = vadd.f32 %v3345, 1.0
      %v3460 = vadd.f32 %v3347, 1.0
      %v3461 = vadd.f32 %v3349, 1.0
      %v3462 = vrcp.pop %v3350
      %v3463 = vmul.f32 1.0, %v3462
      %v3464 = vrcp.pop %v3351
      %v3465 = vmul.f32 1.0, %v3464
      %v3466 = vrcp.pop %v3352
      %v3467 = vmul.f32 1.0, %v3466
      %v3468 = vrcp.pop %v3353
      %v3469 = vmul.f32 1.0, %v3468
      %v3470 = vrcp.pop %v3354
      %v3471 = vmul.f32 1.0, %v3470
      %v3472 = vrcp.pop %v3355
      %v3473 = vmul.f32 1.0, %v3472
      %v3474 = vrcp.pop %v3356
      %v3475 = vmul.f32 1.0, %v3474
      %v3476 = vrcp.pop %v3357
      %v3477 = vmul.f32 1.0, %v3476
      %v3478 = vrcp.pop %v3358
      %v3479 = vmul.f32 1.0, %v3478
      %v3480 = vrcp.pop %v3359
      %v3481 = vmul.f32 1.0, %v3480
      %v3482 = vrcp.pop %v3360
      %v3483 = vmul.f32 1.0, %v3482
      %v3484 = vrcp.pop %v3361
      %v3485 = vmul.f32 1.0, %v3484
      %v3486 = vrcp.pop %v3362
      %v3487 = vmul.f32 1.0, %v3486
      %v3488 = vrcp.pop %v3363
      %v3489 = vmul.f32 1.0, %v3488
      %v3490 = vrcp.pop %v3364
      %v3491 = vmul.f32 1.0, %v3490
      %v3492 = vrcp.pop %v3365
      %v3493 = vmul.f32 1.0, %v3492
      %v3494 = vrcp.pop %v3366
      %v3495 = vmul.f32 1.0, %v3494
      %v3496 = vrcp.pop %v3367
      %v3497 = vmul.f32 1.0, %v3496
      %v3498 = vrcp.pop %v3368
      %v3499 = vmul.f32 1.0, %v3498
      %v3500 = vrcp.pop %v3369
      %v3501 = vmul.f32 1.0, %v3500
      %v3502 = vrcp.pop %v3370
      %v3503 = vmul.f32 1.0, %v3502
      %v3504 = vrcp.pop %v3371
      %v3505 = vmul.f32 1.0, %v3504
      %v3506 = vrcp.pop %v3372
      %v3507 = vmul.f32 1.0, %v3506
      %v3508 = vrcp.pop %v3373
      %v3509 = vmul.f32 1.0, %v3508
      %v3510 = vrcp.pop %v3374
      %v3511 = vmul.f32 1.0, %v3510
      %v3512 = vrcp.pop %v3375
      %v3513 = vmul.f32 1.0, %v3512
      %v3514 = vrcp.pop %v3376
      %v3515 = vmul.f32 1.0, %v3514
      %v3516 = vrcp.pop %v3377
      %v3517 = vmul.f32 1.0, %v3516
      %v3518 = vrcp.pop %v3378
      %v3519 = vmul.f32 1.0, %v3518
      %v3520 = vrcp.pop %v3379
      %v3521 = vmul.f32 1.0, %v3520
      %v3522 = vrcp.pop %v3380
      %v3523 = vmul.f32 1.0, %v3522
      %v3524 = vrcp.pop %v3381
      %v3525 = vmul.f32 1.0, %v3524
      %v3526 = vrcp.pop %v3382
      %v3527 = vmul.f32 1.0, %v3526
      %v3528 = vrcp.pop %v3383
      %v3529 = vmul.f32 1.0, %v3528
      %v3530 = vrcp.pop %v3384
      %v3531 = vmul.f32 1.0, %v3530
      %v3532 = vrcp.pop %v3385
      %v3533 = vmul.f32 1.0, %v3532
      %v3534 = vrcp.pop %v3386
      %v3535 = vmul.f32 1.0, %v3534
      %v3536 = vrcp.pop %v3387
      %v3537 = vmul.f32 1.0, %v3536
      %v3538 = vrcp.pop %v3388
      %v3539 = vmul.f32 1.0, %v3538
      %v3540 = vrcp.pop %v3389
      %v3541 = vmul.f32 1.0, %v3540
      %v3542 = vrcp.pop %v3390
      %v3543 = vmul.f32 1.0, %v3542
      %v3544 = vrcp.pop %v3391
      %v3545 = vmul.f32 1.0, %v3544
      %v3546 = vrcp.pop %v3392
      %v3547 = vmul.f32 1.0, %v3546
      %v3548 = vrcp.pop %v3393
      %v3549 = vmul.f32 1.0, %v3548
      %v3550 = vrcp.pop %v3394
      %v3551 = vmul.f32 1.0, %v3550
      %v3552 = vrcp.pop %v3395
      %v3553 = vmul.f32 1.0, %v3552
      %v3554 = vrcp.pop %v3396
      %v3555 = vmul.f32 1.0, %v3554
      %v3556 = vrcp.pop %v3397
      %v3557 = vmul.f32 1.0, %v3556
      %v3558 = vrcp.pop %v3398
      %v3559 = vmul.f32 1.0, %v3558
      %v3560 = vrcp.pop %v3399
      %v3561 = vmul.f32 1.0, %v3560
      %v3562 = vrcp.pop %v3400
      %v3563 = vmul.f32 1.0, %v3562
      %v3564 = vrcp.pop %v3401
      %v3565 = vmul.f32 1.0, %v3564
      %v3566 = vrcp.pop %v3402
      %v3567 = vmul.f32 1.0, %v3566
      %v3568 = vrcp.pop %v3403
      %v3569 = vmul.f32 1.0, %v3568
      %v3570 = vrcp.pop %v3404
      %v3571 = vmul.f32 1.0, %v3570
      %v3572 = vrcp.pop %v3405
      %v3573 = vmul.f32 1.0, %v3572
      %v3574 = vrcp.pop %v3406
      %v3575 = vmul.f32 1.0, %v3574
      %v3576 = vrcp.pop %v3407
      %v3577 = vmul.f32 1.0, %v3576
      %v3578 = vrcp.pop %v3408
      %v3579 = vmul.f32 1.0, %v3578
      %v3580 = vrcp.pop %v3409
      %v3581 = vmul.f32 1.0, %v3580
      %v3582 = vrcp.pop %v3410
      %v3583 = vmul.f32 1.0, %v3582
      %v3584 = vrcp.pop %v3411
      %v3585 = vmul.f32 1.0, %v3584
      %v3586 = vrcp.pop %v3412
      %v3587 = vmul.f32 1.0, %v3586
      %v3588 = vrcp.pop %v3413
      %v3589 = vmul.f32 1.0, %v3588
      %v3590 = vrcp.pop %v3414
      %v3591 = vmul.f32 1.0, %v3590
      %v3592 = vrcp.pop %v3415
      %v3593 = vmul.f32 1.0, %v3592
      %v3594 = vrcp.pop %v3416
      %v3595 = vmul.f32 1.0, %v3594
      %v3596 = vrcp.pop %v3417
      %v3597 = vmul.f32 1.0, %v3596
      %v3598 = vrcp.pop %v3418
      %v3599 = vmul.f32 1.0, %v3598
      %v3600 = vrcp.pop %v3419
      %v3601 = vmul.f32 1.0, %v3600
      %v3602 = vrcp.pop %v3420
      %v3603 = vmul.f32 1.0, %v3602
      %v3604 = vrcp.pop %v3421
      %v3605 = vmul.f32 1.0, %v3604
      %v3606 = vrcp.pop %v3422
      %v3607 = vmul.f32 1.0, %v3606
      %v3608 = vrcp.pop %v3423
      %v3609 = vmul.f32 1.0, %v3608
      %v3610 = vrcp.pop %v3424
      %v3611 = vmul.f32 1.0, %v3610
      %v3612 = vrcp.pop %v3425
      %v3613 = vmul.f32 1.0, %v3612
      %v3614 = vrcp.pop %v3426
      %v3615 = vmul.f32 1.0, %v3614
      %v3616 = vrcp.pop %v3427
      %v3617 = vmul.f32 1.0, %v3616
      %v3618 = vrcp.pop %v3428
      %v3619 = vmul.f32 1.0, %v3618
      %v3620 = vrcp.pop %v3429
      %v3621 = vmul.f32 1.0, %v3620
      %v3622 = vrcp.pop %v3430
      %v3623 = vmul.f32 1.0, %v3622
      %v3624 = vrcp.pop %v3431
      %v3625 = vmul.f32 1.0, %v3624
      %v3626 = vrcp.pop %v3432
      %v3627 = vmul.f32 1.0, %v3626
      %v3628 = vrcp.pop %v3433
      %v3629 = vmul.f32 1.0, %v3628
      %v3630 = vrcp.pop %v3434
      %v3631 = vmul.f32 1.0, %v3630
      %v3632 = vrcp.pop %v3435
      %v3633 = vmul.f32 1.0, %v3632
      %v3634 = vrcp.pop %v3436
      %v3635 = vmul.f32 1.0, %v3634
      %v3636 = vrcp.pop %v3437
      %v3637 = vmul.f32 1.0, %v3636
      %v3638 = vrcp.pop %v3438
      %v3639 = vmul.f32 1.0, %v3638
      %v3640 = vrcp.pop %v3439
      %v3641 = vmul.f32 1.0, %v3640
      %v3642 = vrcp.pop %v3440
      %v3643 = vmul.f32 1.0, %v3642
      %v3644 = vrcp.pop %v3441
      %v3645 = vmul.f32 1.0, %v3644
      %v3646 = vrcp.pop %v3442
      %v3647 = vmul.f32 1.0, %v3646
      %v3648 = vrcp.pop %v3443
      %v3649 = vmul.f32 1.0, %v3648
      %v3650 = vrcp.pop %v3444
      %v3651 = vmul.f32 1.0, %v3650
      %v3652 = vrcp.pop %v3445
      %v3653 = vmul.f32 1.0, %v3652
      %v3654 = vrcp.pop %v3446
      %v3655 = vmul.f32 1.0, %v3654
      %v3656 = vrcp.pop %v3447
      %v3657 = vmul.f32 1.0, %v3656
      %v3658 = vrcp.pop %v3448
      %v3659 = vmul.f32 1.0, %v3658
      %v3660 = vrcp.pop %v3449
      %v3661 = vmul.f32 1.0, %v3660
      %v3662 = vrcp.pop %v3450
      %v3663 = vmul.f32 1.0, %v3662
      %v3664 = vrcp.pop %v3451
      %v3665 = vmul.f32 1.0, %v3664
      %v3666 = vrcp.pop %v3452
      %v3667 = vmul.f32 1.0, %v3666
      %v3668 = vrcp.pop %v3453
      %v3669 = vmul.f32 1.0, %v3668
      %v3670 = vrcp.pop %v3454
      %v3671 = vmul.f32 1.0, %v3670
      %v3672 = vrcp.pop %v3455
      %v3673 = vmul.f32 1.0, %v3672
      %v3674 = vrcp.pop %v3456
      %v3675 = vmul.f32 1.0, %v3674
      %v3676 = vrcp.pop %v3457
      %v3677 = vmul.f32 1.0, %v3676
      %v3678 = vrcp.pop %v3458
      %v3679 = vmul.f32 1.0, %v3678
      %v3680 = vrcp.pop %v3459
      %v3681 = vmul.f32 1.0, %v3680
      %v3682 = vrcp.pop %v3460
      %v3683 = vmul.f32 1.0, %v3682
      %v3684 = vrcp.pop %v3461
      %v3685 = vmul.f32 1.0, %v3684
      %3686 = vst [vmem:[%s228] sm:$0xff] %v3463
      %3687 = vst [vmem:[%s228 + $0x8] sm:$0xff] %v3465
      %3688 = vst [vmem:[%s228 + $0x10] sm:$0xff] %v3467
      %3689 = vst [vmem:[%s228 + $0x18] sm:$0xff] %v3469
      %3690 = vst [vmem:[%s228 + $0x20] sm:$0xff] %v3471
      %3691 = vst [vmem:[%s228 + $0x28] sm:$0xff] %v3473
      %vm3692 = vcmask 130048
      %3693 = vst.msk [vmem:[%s228 + $0x30] sm:$0xff] %vm3692, %v3475
      %3694 = vst [vmem:[%s228 + $0x38] sm:$0xff] %v3477
      %3695 = vst [vmem:[%s228 + $0x40] sm:$0xff] %v3479
      %3696 = vst [vmem:[%s228 + $0x48] sm:$0xff] %v3481
      %3697 = vst [vmem:[%s228 + $0x50] sm:$0xff] %v3483
      %3698 = vst [vmem:[%s228 + $0x58] sm:$0xff] %v3485
      %3699 = vst [vmem:[%s228 + $0x60] sm:$0xff] %v3487
      %3700 = vst.msk [vmem:[%s228 + $0x68] sm:$0xff] %vm3692, %v3489
      %3701 = vst [vmem:[%s228 + $0x70] sm:$0xff] %v3491
      %3702 = vst [vmem:[%s228 + $0x78] sm:$0xff] %v3493
      %3703 = vst [vmem:[%s228 + $0x80] sm:$0xff] %v3495
      %3704 = vst [vmem:[%s228 + $0x88] sm:$0xff] %v3497
      %3705 = vst [vmem:[%s228 + $0x90] sm:$0xff] %v3499
      %3706 = vst [vmem:[%s228 + $0x98] sm:$0xff] %v3501
      %3707 = vst.msk [vmem:[%s228 + $0xa0] sm:$0xff] %vm3692, %v3503
      %3708 = vst [vmem:[%s228 + $0xa8] sm:$0xff] %v3505
      %3709 = vst [vmem:[%s228 + $0xb0] sm:$0xff] %v3507
      %3710 = vst [vmem:[%s228 + $0xb8] sm:$0xff] %v3509
      %3711 = vst [vmem:[%s228 + $0xc0] sm:$0xff] %v3511
      %3712 = vst [vmem:[%s228 + $0xc8] sm:$0xff] %v3513
      %3713 = vst [vmem:[%s228 + $0xd0] sm:$0xff] %v3515
      %3714 = vst.msk [vmem:[%s228 + $0xd8] sm:$0xff] %vm3692, %v3517
      %3715 = vst [vmem:[%s228 + $0xe0] sm:$0xff] %v3519
      %3716 = vst [vmem:[%s228 + $0xe8] sm:$0xff] %v3521
      %3717 = vst [vmem:[%s228 + $0xf0] sm:$0xff] %v3523
      %3718 = vst [vmem:[%s228 + $0xf8] sm:$0xff] %v3525
      %3719 = vst [vmem:[%s228 + $0x100] sm:$0xff] %v3527
      %3720 = vst [vmem:[%s228 + $0x108] sm:$0xff] %v3529
      %3721 = vst.msk [vmem:[%s228 + $0x110] sm:$0xff] %vm3692, %v3531
      %3722 = vst [vmem:[%s228 + $0x118] sm:$0xff] %v3533
      %3723 = vst [vmem:[%s228 + $0x120] sm:$0xff] %v3535
      %3724 = vst [vmem:[%s228 + $0x128] sm:$0xff] %v3537
      %3725 = vst [vmem:[%s228 + $0x130] sm:$0xff] %v3539
      %3726 = vst [vmem:[%s228 + $0x138] sm:$0xff] %v3541
      %3727 = vst [vmem:[%s228 + $0x140] sm:$0xff] %v3543
      %3728 = vst.msk [vmem:[%s228 + $0x148] sm:$0xff] %vm3692, %v3545
      %3729 = vst [vmem:[%s228 + $0x150] sm:$0xff] %v3547
      %3730 = vst [vmem:[%s228 + $0x158] sm:$0xff] %v3549
      %3731 = vst [vmem:[%s228 + $0x160] sm:$0xff] %v3551
      %3732 = vst [vmem:[%s228 + $0x168] sm:$0xff] %v3553
      %3733 = vst [vmem:[%s228 + $0x170] sm:$0xff] %v3555
      %3734 = vst [vmem:[%s228 + $0x178] sm:$0xff] %v3557
      %3735 = vst.msk [vmem:[%s228 + $0x180] sm:$0xff] %vm3692, %v3559
      %3736 = vst [vmem:[%s228 + $0x188] sm:$0xff] %v3561
      %3737 = vst [vmem:[%s228 + $0x190] sm:$0xff] %v3563
      %3738 = vst [vmem:[%s228 + $0x198] sm:$0xff] %v3565
      %3739 = vst [vmem:[%s228 + $0x1a0] sm:$0xff] %v3567
      %3740 = vst [vmem:[%s228 + $0x1a8] sm:$0xff] %v3569
      %3741 = vst [vmem:[%s228 + $0x1b0] sm:$0xff] %v3571
      %3742 = vst.msk [vmem:[%s228 + $0x1b8] sm:$0xff] %vm3692, %v3573
      %3743 = vst [vmem:[%s228 + $0x1c0] sm:$0xff] %v3575
      %3744 = vst [vmem:[%s228 + $0x1c8] sm:$0xff] %v3577
      %3745 = vst [vmem:[%s228 + $0x1d0] sm:$0xff] %v3579
      %3746 = vst [vmem:[%s228 + $0x1d8] sm:$0xff] %v3581
      %3747 = vst [vmem:[%s228 + $0x1e0] sm:$0xff] %v3583
      %3748 = vst [vmem:[%s228 + $0x1e8] sm:$0xff] %v3585
      %3749 = vst.msk [vmem:[%s228 + $0x1f0] sm:$0xff] %vm3692, %v3587
      %3750 = vst [vmem:[%s228 + $0x1f8] sm:$0xff] %v3589
      %3751 = vst [vmem:[%s228 + $0x200] sm:$0xff] %v3591
      %3752 = vst [vmem:[%s228 + $0x208] sm:$0xff] %v3593
      %3753 = vst [vmem:[%s228 + $0x210] sm:$0xff] %v3595
      %3754 = vst [vmem:[%s228 + $0x218] sm:$0xff] %v3597
      %3755 = vst [vmem:[%s228 + $0x220] sm:$0xff] %v3599
      %3756 = vst.msk [vmem:[%s228 + $0x228] sm:$0xff] %vm3692, %v3601
      %3757 = vst [vmem:[%s228 + $0x230] sm:$0xff] %v3603
      %3758 = vst [vmem:[%s228 + $0x238] sm:$0xff] %v3605
      %3759 = vst [vmem:[%s228 + $0x240] sm:$0xff] %v3607
      %3760 = vst [vmem:[%s228 + $0x248] sm:$0xff] %v3609
      %3761 = vst [vmem:[%s228 + $0x250] sm:$0xff] %v3611
      %3762 = vst [vmem:[%s228 + $0x258] sm:$0xff] %v3613
      %3763 = vst.msk [vmem:[%s228 + $0x260] sm:$0xff] %vm3692, %v3615
      %3764 = vst [vmem:[%s228 + $0x268] sm:$0xff] %v3617
      %3765 = vst [vmem:[%s228 + $0x270] sm:$0xff] %v3619
      %3766 = vst [vmem:[%s228 + $0x278] sm:$0xff] %v3621
      %3767 = vst [vmem:[%s228 + $0x280] sm:$0xff] %v3623
      %3768 = vst [vmem:[%s228 + $0x288] sm:$0xff] %v3625
      %3769 = vst [vmem:[%s228 + $0x290] sm:$0xff] %v3627
      %3770 = vst.msk [vmem:[%s228 + $0x298] sm:$0xff] %vm3692, %v3629
      %3771 = vst [vmem:[%s228 + $0x2a0] sm:$0xff] %v3631
      %3772 = vst [vmem:[%s228 + $0x2a8] sm:$0xff] %v3633
      %3773 = vst [vmem:[%s228 + $0x2b0] sm:$0xff] %v3635
      %3774 = vst [vmem:[%s228 + $0x2b8] sm:$0xff] %v3637
      %3775 = vst [vmem:[%s228 + $0x2c0] sm:$0xff] %v3639
      %3776 = vst [vmem:[%s228 + $0x2c8] sm:$0xff] %v3641
      %3777 = vst.msk [vmem:[%s228 + $0x2d0] sm:$0xff] %vm3692, %v3643
      %3778 = vst [vmem:[%s228 + $0x2d8] sm:$0xff] %v3645
      %3779 = vst [vmem:[%s228 + $0x2e0] sm:$0xff] %v3647
      %3780 = vst [vmem:[%s228 + $0x2e8] sm:$0xff] %v3649
      %3781 = vst [vmem:[%s228 + $0x2f0] sm:$0xff] %v3651
      %3782 = vst [vmem:[%s228 + $0x2f8] sm:$0xff] %v3653
      %3783 = vst [vmem:[%s228 + $0x300] sm:$0xff] %v3655
      %3784 = vst.msk [vmem:[%s228 + $0x308] sm:$0xff] %vm3692, %v3657
      %3785 = vst [vmem:[%s228 + $0x310] sm:$0xff] %v3659
      %3786 = vst [vmem:[%s228 + $0x318] sm:$0xff] %v3661
      %3787 = vst [vmem:[%s228 + $0x320] sm:$0xff] %v3663
      %3788 = vst [vmem:[%s228 + $0x328] sm:$0xff] %v3665
      %3789 = vst [vmem:[%s228 + $0x330] sm:$0xff] %v3667
      %3790 = vst [vmem:[%s228 + $0x338] sm:$0xff] %v3669
      %3791 = vst.msk [vmem:[%s228 + $0x340] sm:$0xff] %vm3692, %v3671
      %3792 = vst [vmem:[%s228 + $0x348] sm:$0xff] %v3673
      %3793 = vst [vmem:[%s228 + $0x350] sm:$0xff] %v3675
      %3794 = vst [vmem:[%s228 + $0x358] sm:$0xff] %v3677
      %3795 = vst [vmem:[%s228 + $0x360] sm:$0xff] %v3679
      %3796 = vst [vmem:[%s228 + $0x368] sm:$0xff] %v3681
      %3797 = vst [vmem:[%s228 + $0x370] sm:$0xff] %v3683
      %3798 = vst.msk [vmem:[%s228 + $0x378] sm:$0xff] %vm3692, %v3685
      %s3799 = smul.u32 16, %s16
      %p3800 = scmp.lt.s32.totalorder %s3799, 31
      %s3801 = scalar_select %p3800, %s3799, 31
      %s3802 = smul.addr %s3801, 7
      %s3803 = smul.addr %s3802, 8
      %s3804 = scalar_lea.vmem %s5, %s3803
      // Predicated region
      $region41: #{tpu_custom_call.1} parent=39 // pred_check
        %p3805 = pneg %p144
      $region42: #{tpu_custom_call.1} parent=39 // pred_check_branch
        %3807 = sbr.rel (%p3805) target = $region44
      $region43: #{tpu_custom_call.1} parent=39 // pred_region
        %s3808 = smul.u32 16, %s16
      $region44: #{tpu_custom_call.1} parent=39 // pred_fallthru
        _
    $region40: #{tpu_custom_call.1} parent=5 // pred_fallthru
      _
    %p3809 = scmp.le.s32.totalorder 2, %s11
    // Predicated region
    $region45: #{tpu_custom_call.1} parent=5 // pred_check
      %p3810 = pneg %p3809
    $region46: #{tpu_custom_call.1} parent=5 // pred_check_branch
      %3812 = sbr.rel (%p3810) target = $region48
    $region47: #{tpu_custom_call.1} parent=5 // pred_region
      %s3813 = ssub.s32 %s11, 2
      // Predicated region
      $region49: #{tpu_custom_call.1} parent=47 // pred_check
        %p3814 = pneg %p150
      $region50: #{tpu_custom_call.1} parent=47 // pred_check_branch
        %3816 = sbr.rel (%p3814) target = $region52
      $region51: #{tpu_custom_call.1} parent=47 // pred_region
        %s3817 = smul.u32 16, %s17
        %p3818 = scmp.lt.s32.totalorder %s3817, 31
        %s3819 = scalar_select %p3818, %s3817, 31
        %s3820 = smul.addr %s3819, 7
        %s3821 = smul.addr %s3820, 8
        %s3822 = scalar_lea.vmem %s5, %s3821
      $region52: #{tpu_custom_call.1} parent=47 // pred_fallthru
        _
    $region48: #{tpu_custom_call.1} parent=5 // pred_fallthru
      _
  $region6: #{tpu_custom_call.1} parent=0 // loop_footer
    %s15 = sadd.s32 1, %s11
  $region7: #{tpu_custom_call.1} parent=0 // loop_footer_branch
    %10 = sbr.rel target = $region3
  $region8: #{tpu_custom_call.1} parent=0 // loop_exit
    _

</llo_original>
